<compile_context>
chip_gen: v6e
topology: v6e:2x2x1
jax: 0.10.0
libtpu: 0.0.40
codegen_flags: <defaults>
</compile_context>

<pallas_src>
import jax
import jax.numpy as jnp
from jax.experimental import pallas as pl
from jax.experimental.pallas import tpu as pltpu


# ----------------------------- Pallas kernel -----------------------------

def _dense_mlp_kernel(x_ref, w_in_ref, ba_in_ref, w_h_ref, ba_h_ref,
                      w_out_ref, b_out_ref, o_ref):
    """Whole forward pass for one batch tile. All weights are VMEM-resident;
    the hidden-layer loop is statically unrolled (L known at trace time)."""
    L = w_h_ref.shape[0]

    # ---- input layer: x1 = PReLU(x @ W_in + b_in) ----
    ba_in = ba_in_ref[...]                                   # (2, H) f32
    y = jnp.dot(x_ref[...], w_in_ref[...],
                preferred_element_type=jnp.float32)
    y = y + ba_in[0:1, :]
    act = jnp.where(y > 0, y, ba_in[1:2, :] * y)
    acc = act                                                # running sum(act_outputs)

    # ---- hidden layers (unrolled): act = PReLU(acc @ W_l + b_l); acc += act ----
    for l in range(L):
        w = w_h_ref[l]                                       # (H, H) bf16, resident
        ba = ba_h_ref[l]                                     # (2, H) f32
        y = jnp.dot(acc.astype(w.dtype), w,
                    preferred_element_type=jnp.float32)
        y = y + ba[0:1, :]
        act = jnp.where(y > 0, y, ba[1:2, :] * y)
        acc = acc + act

    # ---- output layer: out = act @ W_out + b_out (lane-dense padded cols) ----
    o = jnp.dot(act, w_out_ref[...], preferred_element_type=jnp.float32)
    o_ref[...] = o + b_out_ref[...]


# ----------------------------- parameter prep (one-time) -----------------------------

def prepare_params(params):
    """Transpose weights to (in, out), stack hidden layers, pack bias+alpha,
    cast hidden weights to bf16, zero-pad K and output features to 128."""
    (w_in, b_in, a_in), hidden, (w_out, b_out) = params
    assert len(hidden) >= 1, "fused kernel assumes n_layers >= 1"
    hidden_dim, in_dim = w_in.shape
    out_dim = w_out.shape[0]
    k_pad = ((in_dim + 127) // 128) * 128
    n_pad = ((out_dim + 127) // 128) * 128

    # Input layer: K padded to 128, weights kept f32 (one-shot, tiny).
    w_in_p = jnp.zeros((k_pad, hidden_dim), jnp.float32).at[:in_dim, :].set(w_in.T)
    ba_in = jnp.stack([b_in, a_in]).astype(jnp.float32)                    # (2, H)

    # Hidden layers: bf16 MXU feed, bias+alpha packed -> one DMA each.
    w_h = jnp.stack([w.T for (w, _, _) in hidden]).astype(jnp.bfloat16)    # (L, H, H)
    ba_h = jnp.stack([jnp.stack([b, a]) for (_, b, a) in hidden]
                     ).astype(jnp.float32)                                 # (L, 2, H)

    # Output layer: lane-dense padded columns, f32 weights.
    w_out_p = jnp.zeros((hidden_dim, n_pad), jnp.float32).at[:, :out_dim].set(w_out.T)
    b_out_p = jnp.zeros((1, n_pad), jnp.float32).at[0, :out_dim].set(b_out)

    return dict(w_in=w_in_p, ba_in=ba_in, w_h=w_h, ba_h=ba_h,
                w_out=w_out_p, b_out=b_out_p,
                in_dim=in_dim, k_pad=k_pad, out_dim=out_dim, n_pad=n_pad)


# ----------------------------- wrapper (glue) -----------------------------

def dense_linear_network(x, prepped, *, batch_tile=128):
    """Full DenseLinearNetwork forward in a single fused pallas_call.
    Grid is over batch tiles only (marked "parallel" -> v7x can split across
    its two TensorCores); all weights are VMEM-resident per tile."""
    B, K = x.shape
    assert K == prepped["in_dim"]
    K_pad = prepped["k_pad"]
    H = prepped["w_in"].shape[1]
    L = prepped["w_h"].shape[0]
    NP = prepped["n_pad"]

    # Batch tiling: pad batch to a sublane multiple; tile at <=128 rows.
    B8 = ((B + 7) // 8) * 8
    if B8 <= batch_tile:
        bt, n_tiles = B8, 1
    else:
        bt = batch_tile
        n_tiles = -(-B8 // bt)
    B_pad = bt * n_tiles

    # Zero-pad x to (B_pad, K_pad) -> lane-dense (8,128)-aligned LHS block.
    x_p = jnp.zeros((B_pad, K_pad), jnp.float32).at[:B, :K].set(x)

    flops = int(2 * B_pad * (K_pad * H + L * H * H + H * NP))
    bytes_accessed = int(
        x_p.size * 4 + prepped["w_in"].size * 4 + prepped["w_h"].size * 2
        + prepped["w_out"].size * 4
        + (prepped["ba_in"].size + prepped["ba_h"].size + prepped["b_out"].size) * 4
        + B_pad * NP * 4)

    out_padded = pl.pallas_call(
        _dense_mlp_kernel,
        out_shape=jax.ShapeDtypeStruct((B_pad, NP), jnp.float32),
        grid=(n_tiles,),
        in_specs=[
            pl.BlockSpec((bt, K_pad), lambda i: (i, 0)),      # x tile (f32, padded)
            pl.BlockSpec((K_pad, H), lambda i: (0, 0)),       # W_in^T (f32, resident)
            pl.BlockSpec((2, H), lambda i: (0, 0)),           # [b_in; alpha_in]
            pl.BlockSpec((L, H, H), lambda i: (0, 0, 0)),     # all W_l^T (bf16, resident)
            pl.BlockSpec((L, 2, H), lambda i: (0, 0, 0)),     # all [b_l; alpha_l]
            pl.BlockSpec((H, NP), lambda i: (0, 0)),          # W_out^T (f32, padded)
            pl.BlockSpec((1, NP), lambda i: (0, 0)),          # b_out (padded)
        ],
        out_specs=pl.BlockSpec((bt, NP), lambda i: (i, 0)),
        compiler_params=pltpu.CompilerParams(
            dimension_semantics=("parallel",)),               # batch tiles independent
        cost_estimate=pl.CostEstimate(flops=flops, transcendentals=0,
                                      bytes_accessed=bytes_accessed),
    )(x_p, prepped["w_in"], prepped["ba_in"], prepped["w_h"], prepped["ba_h"],
      prepped["w_out"], prepped["b_out"])

    return out_padded[:B, :prepped["out_dim"]]


# ----------------------------- parameter init -----------------------------

def init_params(key, n_layers, input_dim, hidden_dim, output_dim):
    def linear_init(k, fan_in, fan_out):
        k1, k2 = jax.random.split(k)
        bound = 1.0 / jnp.sqrt(fan_in)
        w = jax.random.uniform(k1, (fan_out, fan_in), jnp.float32, -bound, bound)
        b = jax.random.uniform(k2, (fan_out,), jnp.float32, -bound, bound)
        return w, b

    keys = jax.random.split(key, n_layers + 2)
    w_in, b_in = linear_init(keys[0], input_dim, hidden_dim)
    a_in = jnp.full((hidden_dim,), 0.25, jnp.float32)          # PReLU default init
    hidden = []
    for i in range(n_layers):
        w, b = linear_init(keys[i + 1], hidden_dim, hidden_dim)
        a = jnp.full((hidden_dim,), 0.25, jnp.float32)
        hidden.append((w, b, a))
    w_out, b_out = linear_init(keys[-1], hidden_dim, output_dim)
    return (w_in, b_in, a_in), hidden, (w_out, b_out)


# ----------------------------- reference (pure JAX, f32) -----------------------------

def reference_forward(x, params):
    (w_in, b_in, a_in), hidden, (w_out, b_out) = params

    def prelu(y, a):
        return jnp.where(y > 0, y, a * y)

    x1 = prelu(x @ w_in.T + b_in, a_in)
    act_outputs = [x1]
    for (w, b, a) in hidden:
        lin = sum(act_outputs) @ w.T + b
        act_outputs.append(prelu(lin, a))
    return act_outputs[-1] @ w_out.T + b_out


# ----------------------------- main -----------------------------

if __name__ == "__main__":
    n_layers = 3
    input_dim = 32
    hidden_dim = 512   # PReLU(num_parameters=512) in the module forces hidden_dim=512
    output_dim = 16
    batch = 8

    key = jax.random.PRNGKey(0)
    k_params, k_x = jax.random.split(key)
    params = init_params(k_params, n_layers, input_dim, hidden_dim, output_dim)
    x = jax.random.normal(k_x, (batch, input_dim), jnp.float32)

    prepped = prepare_params(params)                       # one-time prep
    fwd = jax.jit(lambda xx: dense_linear_network(xx, prepped))

    out = jax.block_until_ready(fwd(x))

    ref = reference_forward(x, params)                     # f32 reference
    assert out.shape == (batch, output_dim)
    # Hidden layers feed the MXU in bf16 (f32 accumulate) -> compare against
    # the f32 reference with a bf16-appropriate tolerance (validated at L=3).
    assert jnp.allclose(out, ref, atol=2e-2, rtol=2e-2), "mismatch vs reference"

    print("KERNEL_OK")
</pallas_src>

<mosaic_0001>
module attributes {stable_mosaic.version = 11 : i64} {
  func.func @_dense_mlp_kernel(%arg0: i32, %arg1: memref<8x128xf32, #tpu.memory_space<vmem>>, %arg2: memref<128x512xf32, #tpu.memory_space<vmem>>, %arg3: memref<2x512xf32, #tpu.memory_space<vmem>>, %arg4: memref<3x512x512xbf16, #tpu.memory_space<vmem>>, %arg5: memref<3x2x512xf32, #tpu.memory_space<vmem>>, %arg6: memref<512x128xf32, #tpu.memory_space<vmem>>, %arg7: memref<1x128xf32, #tpu.memory_space<vmem>>, %arg8: memref<8x128xf32, #tpu.memory_space<vmem>>) attributes {dimension_semantics = [#tpu.dimension_semantics<parallel>], iteration_bounds = array<i64: 1>, scalar_prefetch = 0 : i64, scratch_operands = 0 : i64, tpu.core_type = #tpu.core_type<tc>, window_params = [{transform_indices = @transform_0, window_bounds = array<i64: 8, 128>}, {pipeline_mode = #tpu.pipeline_mode<synchronous>, transform_indices = @transform_1, window_bounds = array<i64: 128, 512>}, {pipeline_mode = #tpu.pipeline_mode<synchronous>, transform_indices = @transform_2, window_bounds = array<i64: 2, 512>}, {pipeline_mode = #tpu.pipeline_mode<synchronous>, transform_indices = @transform_3, window_bounds = array<i64: 3, 512, 512>}, {pipeline_mode = #tpu.pipeline_mode<synchronous>, transform_indices = @transform_4, window_bounds = array<i64: 3, 2, 512>}, {pipeline_mode = #tpu.pipeline_mode<synchronous>, transform_indices = @transform_5, window_bounds = array<i64: 512, 128>}, {pipeline_mode = #tpu.pipeline_mode<synchronous>, transform_indices = @transform_6, window_bounds = array<i64: 1, 128>}, {transform_indices = @transform_7, window_bounds = array<i64: 8, 128>}]} {
    %c0 = arith.constant 0 : index
    %c0_0 = arith.constant 0 : index
    %0 = vector.load %arg3[%c0, %c0_0] : memref<2x512xf32, #tpu.memory_space<vmem>>, vector<2x512xf32>
    %c0_1 = arith.constant 0 : index
    %c0_2 = arith.constant 0 : index
    %1 = vector.load %arg1[%c0_1, %c0_2] : memref<8x128xf32, #tpu.memory_space<vmem>>, vector<8x128xf32>
    %c0_3 = arith.constant 0 : index
    %c0_4 = arith.constant 0 : index
    %2 = vector.load %arg2[%c0_3, %c0_4] : memref<128x512xf32, #tpu.memory_space<vmem>>, vector<128x512xf32>
    %cst = arith.constant dense<0.000000e+00> : vector<8x512xf32>
    %3 = tpu.matmul %1, %2, %cst {dimension_numbers = #tpu.dot_dimension_numbers<[1], [0], [0], [1], [0, 0, 1, 1], [], []>} : vector<8x128xf32>, vector<128x512xf32>, vector<8x512xf32> -> vector<8x512xf32>
    %4 = vector.extract_strided_slice %0 {offsets = [0, 0], sizes = [1, 512], strides = [1, 1]} : vector<2x512xf32> to vector<1x512xf32>
    %5 = vector.broadcast %4 : vector<1x512xf32> to vector<8x512xf32>
    %6 = arith.addf %3, %5 : vector<8x512xf32>
    %cst_5 = arith.constant 0.000000e+00 : f32
    %7 = vector.broadcast %cst_5 : f32 to vector<8x512xf32>
    %8 = arith.cmpf ogt, %6, %7 : vector<8x512xf32>
    %9 = vector.extract_strided_slice %0 {offsets = [1, 0], sizes = [1, 512], strides = [1, 1]} : vector<2x512xf32> to vector<1x512xf32>
    %10 = vector.broadcast %9 : vector<1x512xf32> to vector<8x512xf32>
    %11 = arith.mulf %10, %6 : vector<8x512xf32>
    %12 = arith.select %8, %6, %11 : vector<8x512xi1>, vector<8x512xf32>
    %c0_6 = arith.constant 0 : index
    %c0_7 = arith.constant 0 : index
    %c0_8 = arith.constant 0 : index
    %13 = vector.load %arg4[%c0_6, %c0_7, %c0_8] : memref<3x512x512xbf16, #tpu.memory_space<vmem>>, vector<1x512x512xbf16>
    %14 = vector.shape_cast %13 : vector<1x512x512xbf16> to vector<512x512xbf16>
    %c0_9 = arith.constant 0 : index
    %c0_10 = arith.constant 0 : index
    %c0_11 = arith.constant 0 : index
    %15 = vector.load %arg5[%c0_9, %c0_10, %c0_11] : memref<3x2x512xf32, #tpu.memory_space<vmem>>, vector<1x2x512xf32>
    %16 = vector.shape_cast %15 : vector<1x2x512xf32> to vector<2x512xf32>
    %17 = arith.truncf %12 : vector<8x512xf32> to vector<8x512xbf16>
    %cst_12 = arith.constant dense<0.000000e+00> : vector<8x512xf32>
    %18 = tpu.matmul %17, %14, %cst_12 {dimension_numbers = #tpu.dot_dimension_numbers<[1], [0], [0], [1], [0, 0, 1, 1], [], []>} : vector<8x512xbf16>, vector<512x512xbf16>, vector<8x512xf32> -> vector<8x512xf32>
    %19 = vector.extract_strided_slice %16 {offsets = [0, 0], sizes = [1, 512], strides = [1, 1]} : vector<2x512xf32> to vector<1x512xf32>
    %20 = vector.broadcast %19 : vector<1x512xf32> to vector<8x512xf32>
    %21 = arith.addf %18, %20 : vector<8x512xf32>
    %cst_13 = arith.constant 0.000000e+00 : f32
    %22 = vector.broadcast %cst_13 : f32 to vector<8x512xf32>
    %23 = arith.cmpf ogt, %21, %22 : vector<8x512xf32>
    %24 = vector.extract_strided_slice %16 {offsets = [1, 0], sizes = [1, 512], strides = [1, 1]} : vector<2x512xf32> to vector<1x512xf32>
    %25 = vector.broadcast %24 : vector<1x512xf32> to vector<8x512xf32>
    %26 = arith.mulf %25, %21 : vector<8x512xf32>
    %27 = arith.select %23, %21, %26 : vector<8x512xi1>, vector<8x512xf32>
    %28 = arith.addf %12, %27 : vector<8x512xf32>
    %c1 = arith.constant 1 : index
    %c0_14 = arith.constant 0 : index
    %c0_15 = arith.constant 0 : index
    %29 = vector.load %arg4[%c1, %c0_14, %c0_15] : memref<3x512x512xbf16, #tpu.memory_space<vmem>>, vector<1x512x512xbf16>
    %30 = vector.shape_cast %29 : vector<1x512x512xbf16> to vector<512x512xbf16>
    %c1_16 = arith.constant 1 : index
    %c0_17 = arith.constant 0 : index
    %c0_18 = arith.constant 0 : index
    %31 = vector.load %arg5[%c1_16, %c0_17, %c0_18] : memref<3x2x512xf32, #tpu.memory_space<vmem>>, vector<1x2x512xf32>
    %32 = vector.shape_cast %31 : vector<1x2x512xf32> to vector<2x512xf32>
    %33 = arith.truncf %28 : vector<8x512xf32> to vector<8x512xbf16>
    %cst_19 = arith.constant dense<0.000000e+00> : vector<8x512xf32>
    %34 = tpu.matmul %33, %30, %cst_19 {dimension_numbers = #tpu.dot_dimension_numbers<[1], [0], [0], [1], [0, 0, 1, 1], [], []>} : vector<8x512xbf16>, vector<512x512xbf16>, vector<8x512xf32> -> vector<8x512xf32>
    %35 = vector.extract_strided_slice %32 {offsets = [0, 0], sizes = [1, 512], strides = [1, 1]} : vector<2x512xf32> to vector<1x512xf32>
    %36 = vector.broadcast %35 : vector<1x512xf32> to vector<8x512xf32>
    %37 = arith.addf %34, %36 : vector<8x512xf32>
    %cst_20 = arith.constant 0.000000e+00 : f32
    %38 = vector.broadcast %cst_20 : f32 to vector<8x512xf32>
    %39 = arith.cmpf ogt, %37, %38 : vector<8x512xf32>
    %40 = vector.extract_strided_slice %32 {offsets = [1, 0], sizes = [1, 512], strides = [1, 1]} : vector<2x512xf32> to vector<1x512xf32>
    %41 = vector.broadcast %40 : vector<1x512xf32> to vector<8x512xf32>
    %42 = arith.mulf %41, %37 : vector<8x512xf32>
    %43 = arith.select %39, %37, %42 : vector<8x512xi1>, vector<8x512xf32>
    %44 = arith.addf %28, %43 : vector<8x512xf32>
    %c2 = arith.constant 2 : index
    %c0_21 = arith.constant 0 : index
    %c0_22 = arith.constant 0 : index
    %45 = vector.load %arg4[%c2, %c0_21, %c0_22] : memref<3x512x512xbf16, #tpu.memory_space<vmem>>, vector<1x512x512xbf16>
    %46 = vector.shape_cast %45 : vector<1x512x512xbf16> to vector<512x512xbf16>
    %c2_23 = arith.constant 2 : index
    %c0_24 = arith.constant 0 : index
    %c0_25 = arith.constant 0 : index
    %47 = vector.load %arg5[%c2_23, %c0_24, %c0_25] : memref<3x2x512xf32, #tpu.memory_space<vmem>>, vector<1x2x512xf32>
    %48 = vector.shape_cast %47 : vector<1x2x512xf32> to vector<2x512xf32>
    %49 = arith.truncf %44 : vector<8x512xf32> to vector<8x512xbf16>
    %cst_26 = arith.constant dense<0.000000e+00> : vector<8x512xf32>
    %50 = tpu.matmul %49, %46, %cst_26 {dimension_numbers = #tpu.dot_dimension_numbers<[1], [0], [0], [1], [0, 0, 1, 1], [], []>} : vector<8x512xbf16>, vector<512x512xbf16>, vector<8x512xf32> -> vector<8x512xf32>
    %51 = vector.extract_strided_slice %48 {offsets = [0, 0], sizes = [1, 512], strides = [1, 1]} : vector<2x512xf32> to vector<1x512xf32>
    %52 = vector.broadcast %51 : vector<1x512xf32> to vector<8x512xf32>
    %53 = arith.addf %50, %52 : vector<8x512xf32>
    %cst_27 = arith.constant 0.000000e+00 : f32
    %54 = vector.broadcast %cst_27 : f32 to vector<8x512xf32>
    %55 = arith.cmpf ogt, %53, %54 : vector<8x512xf32>
    %56 = vector.extract_strided_slice %48 {offsets = [1, 0], sizes = [1, 512], strides = [1, 1]} : vector<2x512xf32> to vector<1x512xf32>
    %57 = vector.broadcast %56 : vector<1x512xf32> to vector<8x512xf32>
    %58 = arith.mulf %57, %53 : vector<8x512xf32>
    %59 = arith.select %55, %53, %58 : vector<8x512xi1>, vector<8x512xf32>
    %c0_28 = arith.constant 0 : index
    %c0_29 = arith.constant 0 : index
    %60 = vector.load %arg6[%c0_28, %c0_29] : memref<512x128xf32, #tpu.memory_space<vmem>>, vector<512x128xf32>
    %cst_30 = arith.constant dense<0.000000e+00> : vector<8x128xf32>
    %61 = tpu.matmul %59, %60, %cst_30 {dimension_numbers = #tpu.dot_dimension_numbers<[1], [0], [0], [1], [0, 0, 1, 1], [], []>} : vector<8x512xf32>, vector<512x128xf32>, vector<8x128xf32> -> vector<8x128xf32>
    %c0_31 = arith.constant 0 : index
    %c0_32 = arith.constant 0 : index
    %62 = vector.load %arg7[%c0_31, %c0_32] : memref<1x128xf32, #tpu.memory_space<vmem>>, vector<1x128xf32>
    %63 = vector.broadcast %62 : vector<1x128xf32> to vector<8x128xf32>
    %64 = arith.addf %61, %63 : vector<8x128xf32>
    %c0_33 = arith.constant 0 : index
    %c0_34 = arith.constant 0 : index
    %65 = vector.load %arg8[%c0_33, %c0_34] : memref<8x128xf32, #tpu.memory_space<vmem>>, vector<8x128xf32>
    tpu.vector_store %arg8[%c0_33, %c0_34], %64 {strides = array<i32>} : memref<8x128xf32, #tpu.memory_space<vmem>>, vector<8x128xf32>,
    return
  }
  func.func @transform_0(%arg0: i32) -> (i32, i32) {
    %c0_i32 = arith.constant 0 : i32
    %c0_i32_0 = arith.constant 0 : i32
    return %arg0, %c0_i32 : i32, i32
  }
  func.func @transform_1(%arg0: i32) -> (i32, i32) {
    %c0_i32 = arith.constant 0 : i32
    %c0_i32_0 = arith.constant 0 : i32
    %c0_i32_1 = arith.constant 0 : i32
    return %c0_i32, %c0_i32_0 : i32, i32
  }
  func.func @transform_2(%arg0: i32) -> (i32, i32) {
    %c0_i32 = arith.constant 0 : i32
    %c0_i32_0 = arith.constant 0 : i32
    %c0_i32_1 = arith.constant 0 : i32
    return %c0_i32, %c0_i32_0 : i32, i32
  }
  func.func @transform_3(%arg0: i32) -> (i32, i32, i32) {
    %c0_i32 = arith.constant 0 : i32
    %c0_i32_0 = arith.constant 0 : i32
    %c0_i32_1 = arith.constant 0 : i32
    %c0_i32_2 = arith.constant 0 : i32
    return %c0_i32, %c0_i32_0, %c0_i32_1 : i32, i32, i32
  }
  func.func @transform_4(%arg0: i32) -> (i32, i32, i32) {
    %c0_i32 = arith.constant 0 : i32
    %c0_i32_0 = arith.constant 0 : i32
    %c0_i32_1 = arith.constant 0 : i32
    %c0_i32_2 = arith.constant 0 : i32
    return %c0_i32, %c0_i32_0, %c0_i32_1 : i32, i32, i32
  }
  func.func @transform_5(%arg0: i32) -> (i32, i32) {
    %c0_i32 = arith.constant 0 : i32
    %c0_i32_0 = arith.constant 0 : i32
    %c0_i32_1 = arith.constant 0 : i32
    return %c0_i32, %c0_i32_0 : i32, i32
  }
  func.func @transform_6(%arg0: i32) -> (i32, i32) {
    %c0_i32 = arith.constant 0 : i32
    %c0_i32_0 = arith.constant 0 : i32
    %c0_i32_1 = arith.constant 0 : i32
    return %c0_i32, %c0_i32_0 : i32, i32
  }
  func.func @transform_7(%arg0: i32) -> (i32, i32) {
    %c0_i32 = arith.constant 0 : i32
    %c0_i32_0 = arith.constant 0 : i32
    return %arg0, %c0_i32 : i32, i32
  }
}

</mosaic_0001>

<llo_original>
// kernel: _lambda_.1
$region0: #{_lambda_.1}
  #allocation0 [shape = 'u32[]', space=smem, size = 0x4, offset = 0x4, fixed_abs, tag = 'smem constant byte address 0x4 - core index']
  #allocation1 [shape = 'u32[144,128]{1,0:T(1,128)}', space=vmem, size = 0x12000, scoped, tag = 'internal scratch']
  %s0 = inlined_call_operand.vmem [shape: f32[8,128], index: 0, kind: input, shape index: {}]
  %s1 = inlined_call_operand.hbm [shape: f32[128,512], index: 1, kind: input, shape index: {}]
  %s2 = inlined_call_operand.hbm [shape: f32[2,512], index: 2, kind: input, shape index: {}]
  %s3 = inlined_call_operand.hbm [shape: bf16[3,512,512], index: 3, kind: input, shape index: {}]
  %s4 = inlined_call_operand.hbm [shape: f32[3,2,512], index: 4, kind: input, shape index: {}]
  %s5 = inlined_call_operand.hbm [shape: f32[512,128], index: 5, kind: input, shape index: {}]
  %s6 = inlined_call_operand.hbm [shape: f32[1,128], index: 6, kind: input, shape index: {}]
  %s7 = inlined_call_operand.hbm [shape: f32[8,128], index: 7, kind: output, shape index: {}]
  %s8 = sld [smem:[#allocation0]]
  $region62: #{_lambda_.1} parent=0
    _
  %s10 = ssub.s32 1, %s8
  %s11 = scalar_select 0, %s10, %s8
  $region1: #{_lambda_.1} parent=0
    #allocation2 [shape = 'u8[262144]{0}', space=vmem, size = 0x40000, scoped, tag = 'input window, operand 1, single buffered']
    #allocation3 [shape = 's32[1]{0}', space=sflag, size = 0x4, scoped, tag = 'scoped memory for _lambda_.1']
    #allocation4 [shape = 's32[1]{0}', space=sflag, size = 0x4, scoped, tag = 'scoped memory for _lambda_.1']
    #allocation5 [shape = 'u8[4096]{0}', space=vmem, size = 0x1000, scoped, tag = 'input window, operand 2, single buffered']
    #allocation6 [shape = 's32[1]{0}', space=sflag, size = 0x4, scoped, tag = 'scoped memory for _lambda_.1']
    #allocation7 [shape = 'u8[1572864]{0}', space=vmem, size = 0x180000, scoped, tag = 'input window, operand 3, single buffered']
    #allocation8 [shape = 'u8[12288]{0}', space=vmem, size = 0x3000, scoped, tag = 'input window, operand 4, single buffered']
    #allocation9 [shape = 's32[1]{0}', space=sflag, size = 0x4, scoped, tag = 'scoped memory for _lambda_.1']
    #allocation10 [shape = 'u8[262144]{0}', space=vmem, size = 0x40000, scoped, tag = 'input window, operand 5, single buffered']
    #allocation11 [shape = 'u8[512]{0}', space=vmem, size = 0x400, scoped, tag = 'input window, operand 6, single buffered']
    #allocation12 [shape = 's32[1]{0}', space=sflag, size = 0x4, scoped, tag = 'scoped memory for _lambda_.1']
    #allocation13 [shape = 'u8[4096]{0}', space=vmem, size = 0x1000, scoped, tag = 'output window, operand 0, single buffered']
    %12 = vsyncpa [#allocation3], 0
    %13 = vsyncpa [#allocation6], 0
    %14 = vsyncpa [#allocation9], 0
    %15 = vsyncpa [#allocation12], 0
    %16 = vsyncpa [#allocation4], 0
    // Predicated region
    $region2: #{_lambda_.1} parent=1 // pred_check
      _
    $region3: #{_lambda_.1} parent=1 // pred_check_branch
      %18 = sbr.rel (0) target = $region5
    $region4: #{_lambda_.1} parent=1 // pred_region
      _
    $region5: #{_lambda_.1} parent=1 // pred_fallthru
      _
    // Predicated region
    $region6: #{_lambda_.1} parent=1 // pred_check
      _
    $region7: #{_lambda_.1} parent=1 // pred_check_branch
      %20 = sbr.rel (0) target = $region9
    $region8: #{_lambda_.1} parent=1 // pred_region
      %s22 = ssub.s32 8192, 8192
      %23 = vsyncadd [#allocation3], %s22
      %s24 = sshll.u32 [#allocation2], 4
      %s25 = int_to_ptr.vmem [resolvable:$true] %s24
      %30 = dma.hbm_to_vmem [thread:$0]  %s1, 8192, %s25, [#allocation3], 512, 512, 32
    $region9: #{_lambda_.1} parent=1 // pred_fallthru
      _
    // Predicated region
    $region10: #{_lambda_.1} parent=1 // pred_check
      _
    $region11: #{_lambda_.1} parent=1 // pred_check_branch
      %32 = sbr.rel (0) target = $region13
    $region12: #{_lambda_.1} parent=1 // pred_region
      %s34 = ssub.s32 128, 128
      %35 = vsyncadd [#allocation6], %s34
      %s37 = sshll.u32 [#allocation5], 4
      %s38 = int_to_ptr.vmem [resolvable:$true] %s37
      %40 = dma.hbm_to_vmem [thread:$0]  %s2, 128, %s38, [#allocation6]
    $region13: #{_lambda_.1} parent=1 // pred_fallthru
      _
    // Predicated region
    $region14: #{_lambda_.1} parent=1 // pred_check
      _
    $region15: #{_lambda_.1} parent=1 // pred_check_branch
      %42 = sbr.rel (0) target = $region17
    $region16: #{_lambda_.1} parent=1 // pred_region
      %s44 = ssub.s32 49152, 49152
      %45 = vsyncadd [#allocation6], %s44
      %s46 = sshll.u32 [#allocation7], 4
      %s47 = int_to_ptr.vmem [resolvable:$true] %s46
      %52 = dma.hbm_to_vmem [thread:$0]  %s3, 49152, %s47, [#allocation6], 256, 256, 16
    $region17: #{_lambda_.1} parent=1 // pred_fallthru
      _
    // Predicated region
    $region18: #{_lambda_.1} parent=1 // pred_check
      _
    $region19: #{_lambda_.1} parent=1 // pred_check_branch
      %54 = sbr.rel (0) target = $region21
    $region20: #{_lambda_.1} parent=1 // pred_region
      %s56 = ssub.s32 384, 384
      %57 = vsyncadd [#allocation9], %s56
      %s58 = sshll.u32 [#allocation8], 4
      %s59 = int_to_ptr.vmem [resolvable:$true] %s58
      %64 = dma.hbm_to_vmem [thread:$0]  %s4, 384, %s59, [#allocation9], 128, 128, 8
    $region21: #{_lambda_.1} parent=1 // pred_fallthru
      _
    // Predicated region
    $region22: #{_lambda_.1} parent=1 // pred_check
      _
    $region23: #{_lambda_.1} parent=1 // pred_check_branch
      %66 = sbr.rel (0) target = $region25
    $region24: #{_lambda_.1} parent=1 // pred_region
      %s68 = ssub.s32 8192, 8192
      %69 = vsyncadd [#allocation9], %s68
      %s70 = sshll.u32 [#allocation10], 4
      %s71 = int_to_ptr.vmem [resolvable:$true] %s70
      %76 = dma.hbm_to_vmem [thread:$0]  %s5, 8192, %s71, [#allocation9], 128, 128, 8
    $region25: #{_lambda_.1} parent=1 // pred_fallthru
      _
    // Predicated region
    $region26: #{_lambda_.1} parent=1 // pred_check
      _
    $region27: #{_lambda_.1} parent=1 // pred_check_branch
      %78 = sbr.rel (0) target = $region29
    $region28: #{_lambda_.1} parent=1 // pred_region
      %s80 = ssub.s32 16, 16
      %81 = vsyncadd [#allocation12], %s80
      %s83 = sshll.u32 [#allocation11], 4
      %s84 = int_to_ptr.vmem [resolvable:$true] %s83
      %86 = dma.hbm_to_vmem [thread:$0]  %s6, 16, %s84, [#allocation12]
    $region29: #{_lambda_.1} parent=1 // pred_fallthru
      _
    // Predicated region
    $region30: #{_lambda_.1} parent=1 // pred_check
      _
    $region31: #{_lambda_.1} parent=1 // pred_check_branch
      %88 = sbr.rel (0) target = $region33
    $region32: #{_lambda_.1} parent=1 // pred_region
      %89 = dma.done [#allocation3], 8192
    $region33: #{_lambda_.1} parent=1 // pred_fallthru
      _
    // Predicated region
    $region34: #{_lambda_.1} parent=1 // pred_check
      _
    $region35: #{_lambda_.1} parent=1 // pred_check_branch
      %91 = sbr.rel (0) target = $region37
    $region36: #{_lambda_.1} parent=1 // pred_region
      %92 = dma.done [#allocation6], 128
    $region37: #{_lambda_.1} parent=1 // pred_fallthru
      _
    // Predicated region
    $region38: #{_lambda_.1} parent=1 // pred_check
      _
    $region39: #{_lambda_.1} parent=1 // pred_check_branch
      %94 = sbr.rel (0) target = $region41
    $region40: #{_lambda_.1} parent=1 // pred_region
      %95 = dma.done [#allocation6], 49152
    $region41: #{_lambda_.1} parent=1 // pred_fallthru
      _
    // Predicated region
    $region42: #{_lambda_.1} parent=1 // pred_check
      _
    $region43: #{_lambda_.1} parent=1 // pred_check_branch
      %97 = sbr.rel (0) target = $region45
    $region44: #{_lambda_.1} parent=1 // pred_region
      %98 = dma.done [#allocation9], 384
    $region45: #{_lambda_.1} parent=1 // pred_fallthru
      _
    // Predicated region
    $region46: #{_lambda_.1} parent=1 // pred_check
      _
    $region47: #{_lambda_.1} parent=1 // pred_check_branch
      %100 = sbr.rel (0) target = $region49
    $region48: #{_lambda_.1} parent=1 // pred_region
      %101 = dma.done [#allocation9], 8192
    $region49: #{_lambda_.1} parent=1 // pred_fallthru
      _
    // Predicated region
    $region50: #{_lambda_.1} parent=1 // pred_check
      _
    $region51: #{_lambda_.1} parent=1 // pred_check_branch
      %103 = sbr.rel (0) target = $region53
    $region52: #{_lambda_.1} parent=1 // pred_region
      %104 = dma.done [#allocation12], 16
    $region53: #{_lambda_.1} parent=1 // pred_fallthru
      _
    %v105 = vld [vmem:[#allocation5] sm:$0xff]
    %v106 = vld [vmem:[%s0] sm:$0xff]
    %v107 = vld [vmem:[#allocation2] sm:$0xff]
    %v108 = vld [vmem:[#allocation2 + $0x8] sm:$0xff]
    %v109 = vld [vmem:[#allocation2 + $0x10] sm:$0xff]
    %v110 = vld [vmem:[#allocation2 + $0x18] sm:$0xff]
    %v111 = vld [vmem:[#allocation2 + $0x20] sm:$0xff]
    %v112 = vld [vmem:[#allocation2 + $0x28] sm:$0xff]
    %v113 = vld [vmem:[#allocation2 + $0x30] sm:$0xff]
    %v114 = vld [vmem:[#allocation2 + $0x38] sm:$0xff]
    %v115 = vld [vmem:[#allocation2 + $0x40] sm:$0xff]
    %v116 = vld [vmem:[#allocation2 + $0x48] sm:$0xff]
    %v117 = vld [vmem:[#allocation2 + $0x50] sm:$0xff]
    %v118 = vld [vmem:[#allocation2 + $0x58] sm:$0xff]
    %v119 = vld [vmem:[#allocation2 + $0x60] sm:$0xff]
    %v120 = vld [vmem:[#allocation2 + $0x68] sm:$0xff]
    %v121 = vld [vmem:[#allocation2 + $0x70] sm:$0xff]
    %v122 = vld [vmem:[#allocation2 + $0x78] sm:$0xff]
    %v123 = vld [vmem:[#allocation2 + $0x80] sm:$0xff]
    %v124 = vld [vmem:[#allocation2 + $0x88] sm:$0xff]
    %v125 = vld [vmem:[#allocation2 + $0x90] sm:$0xff]
    %v126 = vld [vmem:[#allocation2 + $0x98] sm:$0xff]
    %v127 = vld [vmem:[#allocation2 + $0xa0] sm:$0xff]
    %v128 = vld [vmem:[#allocation2 + $0xa8] sm:$0xff]
    %v129 = vld [vmem:[#allocation2 + $0xb0] sm:$0xff]
    %v130 = vld [vmem:[#allocation2 + $0xb8] sm:$0xff]
    %v131 = vld [vmem:[#allocation2 + $0xc0] sm:$0xff]
    %v132 = vld [vmem:[#allocation2 + $0xc8] sm:$0xff]
    %v133 = vld [vmem:[#allocation2 + $0xd0] sm:$0xff]
    %v134 = vld [vmem:[#allocation2 + $0xd8] sm:$0xff]
    %v135 = vld [vmem:[#allocation2 + $0xe0] sm:$0xff]
    %v136 = vld [vmem:[#allocation2 + $0xe8] sm:$0xff]
    %v137 = vld [vmem:[#allocation2 + $0xf0] sm:$0xff]
    %v138 = vld [vmem:[#allocation2 + $0xf8] sm:$0xff]
    %v139 = vld [vmem:[#allocation2 + $0x100] sm:$0xff]
    %v140 = vld [vmem:[#allocation2 + $0x108] sm:$0xff]
    %v141 = vld [vmem:[#allocation2 + $0x110] sm:$0xff]
    %v142 = vld [vmem:[#allocation2 + $0x118] sm:$0xff]
    %v143 = vld [vmem:[#allocation2 + $0x120] sm:$0xff]
    %v144 = vld [vmem:[#allocation2 + $0x128] sm:$0xff]
    %v145 = vld [vmem:[#allocation2 + $0x130] sm:$0xff]
    %v146 = vld [vmem:[#allocation2 + $0x138] sm:$0xff]
    %v147 = vld [vmem:[#allocation2 + $0x140] sm:$0xff]
    %v148 = vld [vmem:[#allocation2 + $0x148] sm:$0xff]
    %v149 = vld [vmem:[#allocation2 + $0x150] sm:$0xff]
    %v150 = vld [vmem:[#allocation2 + $0x158] sm:$0xff]
    %v151 = vld [vmem:[#allocation2 + $0x160] sm:$0xff]
    %v152 = vld [vmem:[#allocation2 + $0x168] sm:$0xff]
    %v153 = vld [vmem:[#allocation2 + $0x170] sm:$0xff]
    %v154 = vld [vmem:[#allocation2 + $0x178] sm:$0xff]
    %v155 = vld [vmem:[#allocation2 + $0x180] sm:$0xff]
    %v156 = vld [vmem:[#allocation2 + $0x188] sm:$0xff]
    %v157 = vld [vmem:[#allocation2 + $0x190] sm:$0xff]
    %v158 = vld [vmem:[#allocation2 + $0x198] sm:$0xff]
    %v159 = vld [vmem:[#allocation2 + $0x1a0] sm:$0xff]
    %v160 = vld [vmem:[#allocation2 + $0x1a8] sm:$0xff]
    %v161 = vld [vmem:[#allocation2 + $0x1b0] sm:$0xff]
    %v162 = vld [vmem:[#allocation2 + $0x1b8] sm:$0xff]
    %v163 = vld [vmem:[#allocation2 + $0x1c0] sm:$0xff]
    %v164 = vld [vmem:[#allocation2 + $0x1c8] sm:$0xff]
    %v165 = vld [vmem:[#allocation2 + $0x1d0] sm:$0xff]
    %v166 = vld [vmem:[#allocation2 + $0x1d8] sm:$0xff]
    %v167 = vld [vmem:[#allocation2 + $0x1e0] sm:$0xff]
    %v168 = vld [vmem:[#allocation2 + $0x1e8] sm:$0xff]
    %v169 = vld [vmem:[#allocation2 + $0x1f0] sm:$0xff]
    %v170 = vld [vmem:[#allocation2 + $0x1f8] sm:$0xff]
    %v172 = vlaneseq
    %v173 = vshrl.u32 %v172, 7
    %v174 = vsub.s32 0, %v173
    %v175 = vrot.slane %v105, %v174
    %v176 = vlaneseq
    %v177 = vshrl.u32 %v176, 7
    %v178 = vsub.s32 2, %v177
    %v179 = vrot.slane %v105, %v178
    %v180 = vlaneseq
    %v181 = vshrl.u32 %v180, 7
    %v182 = vsub.s32 4, %v181
    %v183 = vrot.slane %v105, %v182
    %v184 = vlaneseq
    %v185 = vshrl.u32 %v184, 7
    %v186 = vsub.s32 6, %v185
    %v187 = vrot.slane %v105, %v186
    %v192 = vlaneseq
    %v193 = vshrl.u32 %v192, 7
    %v194 = vsub.s32 0, %v193
    %v195 = vrot.slane %v175, %v194
    %v196 = vlaneseq
    %v197 = vshrl.u32 %v196, 7
    %v198 = vsub.s32 0, %v197
    %v199 = vrot.slane %v179, %v198
    %v200 = vlaneseq
    %v201 = vshrl.u32 %v200, 7
    %v202 = vsub.s32 0, %v201
    %v203 = vrot.slane %v183, %v202
    %v204 = vlaneseq
    %v205 = vshrl.u32 %v204, 7
    %v206 = vsub.s32 0, %v205
    %v207 = vrot.slane %v187, %v206
    %208 = vmatprep.subr.mxu0 %v168
    %209 = vmatpush1.msra.mxu0 %v167
    %210 = vmatprep.subr.mxu0 %v164
    %211 = vmatpush1.msra.mxu0 %v163
    %212 = vmatprep.subr.mxu0 %v160
    %213 = vmatpush1.msra.mxu0 %v159
    %214 = vmatprep.subr.mxu0 %v156
    %215 = vmatpush1.msra.mxu0 %v155
    %216 = vmatprep.subr.mxu0 %v152
    %217 = vmatpush1.msra.mxu0 %v151
    %218 = vmatprep.subr.mxu0 %v148
    %219 = vmatpush1.msra.mxu0 %v147
    %220 = vmatprep.subr.mxu0 %v144
    %221 = vmatpush1.msra.mxu0 %v143
    %222 = vmatprep.subr.mxu0 %v140
    %223 = vmatpush1.msra.mxu0 %v139
    %224 = vmatprep.subr.mxu0 %v136
    %225 = vmatpush1.msra.mxu0 %v135
    %226 = vmatprep.subr.mxu0 %v132
    %227 = vmatpush1.msra.mxu0 %v131
    %228 = vmatprep.subr.mxu0 %v128
    %229 = vmatpush1.msra.mxu0 %v127
    %230 = vmatprep.subr.mxu0 %v124
    %231 = vmatpush1.msra.mxu0 %v123
    %232 = vmatprep.subr.mxu0 %v120
    %233 = vmatpush1.msra.mxu0 %v119
    %234 = vmatprep.subr.mxu0 %v116
    %235 = vmatpush1.msra.mxu0 %v115
    %236 = vmatprep.subr.mxu0 %v112
    %237 = vmatpush1.msra.mxu0 %v111
    %238 = vmatprep.subr.mxu0 %v108
    %239 = vmatpush1.msra.mxu0 %v107
    %240 = vmatprep.subr.mxu0 0.0
    %241 = vmatpush2.msra.mxu0 0.0
    %242 = vmatprep.subr.mxu0 0.0
    %243 = vmatpush2.msra.mxu0 0.0
    %244 = vmatprep.subr.mxu0 0.0
    %245 = vmatpush2.msra.mxu0 0.0
    %246 = vmatprep.subr.mxu0 0.0
    %247 = vmatpush2.msra.mxu0 0.0
    %248 = vmatprep.subr.mxu0 0.0
    %249 = vmatpush2.msra.mxu0 0.0
    %250 = vmatprep.subr.mxu0 0.0
    %251 = vmatpush2.msra.mxu0 0.0
    %252 = vmatprep.subr.mxu0 0.0
    %253 = vmatpush2.msra.mxu0 0.0
    %254 = vmatprep.subr.mxu0 0.0
    %255 = vmatpush2.msra.mxu0 0.0
    %256 = vmatprep.subr.mxu0 0.0
    %257 = vmatpush2.msra.mxu0 0.0
    %258 = vmatprep.subr.mxu0 0.0
    %259 = vmatpush2.msra.mxu0 0.0
    %260 = vmatprep.subr.mxu0 0.0
    %261 = vmatpush2.msra.mxu0 0.0
    %262 = vmatprep.subr.mxu0 0.0
    %263 = vmatpush2.msra.mxu0 0.0
    %264 = vmatprep.subr.mxu0 0.0
    %265 = vmatpush2.msra.mxu0 0.0
    %266 = vmatprep.subr.mxu0 0.0
    %267 = vmatpush2.msra.mxu0 0.0
    %268 = vmatprep.subr.mxu0 0.0
    %269 = vmatpush2.msra.mxu0 0.0
    %270 = vmatprep.subr.mxu0 0.0
    %271 = vmatpush2.msra.mxu0 0.0
    %272 = vmatprep.mubr.f32.mxu0 0.0
    %273 = vmatmul.mubr.f32.gmra.mxu0 %v106
    %v274 = vpop.f32.mrf.mxu0
    %v275 = vadd.f32 %v195, %v274
    %v276 = vpop.f32.mrf.mxu0
    %v277 = vadd.f32 %v199, %v276
    %278 = vdwg.mxu0
    %279 = vmatprep.subr.mxu0 %v170
    %280 = vmatpush1.msra.mxu0 %v169
    %281 = vmatprep.subr.mxu0 %v166
    %282 = vmatpush1.msra.mxu0 %v165
    %283 = vmatprep.subr.mxu0 %v162
    %284 = vmatpush1.msra.mxu0 %v161
    %285 = vmatprep.subr.mxu0 %v158
    %286 = vmatpush1.msra.mxu0 %v157
    %287 = vmatprep.subr.mxu0 %v154
    %288 = vmatpush1.msra.mxu0 %v153
    %289 = vmatprep.subr.mxu0 %v150
    %290 = vmatpush1.msra.mxu0 %v149
    %291 = vmatprep.subr.mxu0 %v146
    %292 = vmatpush1.msra.mxu0 %v145
    %293 = vmatprep.subr.mxu0 %v142
    %294 = vmatpush1.msra.mxu0 %v141
    %295 = vmatprep.subr.mxu0 %v138
    %296 = vmatpush1.msra.mxu0 %v137
    %297 = vmatprep.subr.mxu0 %v134
    %298 = vmatpush1.msra.mxu0 %v133
    %299 = vmatprep.subr.mxu0 %v130
    %300 = vmatpush1.msra.mxu0 %v129
    %301 = vmatprep.subr.mxu0 %v126
    %302 = vmatpush1.msra.mxu0 %v125
    %303 = vmatprep.subr.mxu0 %v122
    %304 = vmatpush1.msra.mxu0 %v121
    %305 = vmatprep.subr.mxu0 %v118
    %306 = vmatpush1.msra.mxu0 %v117
    %307 = vmatprep.subr.mxu0 %v114
    %308 = vmatpush1.msra.mxu0 %v113
    %309 = vmatprep.subr.mxu0 %v110
    %310 = vmatpush1.msra.mxu0 %v109
    %311 = vmatprep.subr.mxu0 0.0
    %312 = vmatpush2.msra.mxu0 0.0
    %313 = vmatprep.subr.mxu0 0.0
    %314 = vmatpush2.msra.mxu0 0.0
    %315 = vmatprep.subr.mxu0 0.0
    %316 = vmatpush2.msra.mxu0 0.0
    %317 = vmatprep.subr.mxu0 0.0
    %318 = vmatpush2.msra.mxu0 0.0
    %319 = vmatprep.subr.mxu0 0.0
    %320 = vmatpush2.msra.mxu0 0.0
    %321 = vmatprep.subr.mxu0 0.0
    %322 = vmatpush2.msra.mxu0 0.0
    %323 = vmatprep.subr.mxu0 0.0
    %324 = vmatpush2.msra.mxu0 0.0
    %325 = vmatprep.subr.mxu0 0.0
    %326 = vmatpush2.msra.mxu0 0.0
    %327 = vmatprep.subr.mxu0 0.0
    %328 = vmatpush2.msra.mxu0 0.0
    %329 = vmatprep.subr.mxu0 0.0
    %330 = vmatpush2.msra.mxu0 0.0
    %331 = vmatprep.subr.mxu0 0.0
    %332 = vmatpush2.msra.mxu0 0.0
    %333 = vmatprep.subr.mxu0 0.0
    %334 = vmatpush2.msra.mxu0 0.0
    %335 = vmatprep.subr.mxu0 0.0
    %336 = vmatpush2.msra.mxu0 0.0
    %337 = vmatprep.subr.mxu0 0.0
    %338 = vmatpush2.msra.mxu0 0.0
    %339 = vmatprep.subr.mxu0 0.0
    %340 = vmatpush2.msra.mxu0 0.0
    %341 = vmatprep.subr.mxu0 0.0
    %342 = vmatpush2.msra.mxu0 0.0
    %343 = vmatprep.mubr.f32.mxu0 0.0
    %344 = vmatmul.mubr.f32.gmra.mxu0 %v106
    %v345 = vpop.f32.mrf.mxu0
    %v346 = vadd.f32 %v203, %v345
    %v347 = vpop.f32.mrf.mxu0
    %v348 = vadd.f32 %v207, %v347
    %349 = vdwg.mxu0
    %vm350 = vcmp.gt.f32.partialorder %v275, 0.0
    %vm351 = vcmp.gt.f32.partialorder %v277, 0.0
    %vm352 = vcmp.gt.f32.partialorder %v346, 0.0
    %vm353 = vcmp.gt.f32.partialorder %v348, 0.0
    %v354 = vlaneseq
    %v355 = vshrl.u32 %v354, 7
    %v356 = vsub.s32 1, %v355
    %v357 = vrot.slane %v105, %v356
    %v358 = vlaneseq
    %v359 = vshrl.u32 %v358, 7
    %v360 = vsub.s32 3, %v359
    %v361 = vrot.slane %v105, %v360
    %v362 = vlaneseq
    %v363 = vshrl.u32 %v362, 7
    %v364 = vsub.s32 5, %v363
    %v365 = vrot.slane %v105, %v364
    %v366 = vlaneseq
    %v367 = vshrl.u32 %v366, 7
    %v368 = vsub.s32 7, %v367
    %v369 = vrot.slane %v105, %v368
    %v374 = vlaneseq
    %v375 = vshrl.u32 %v374, 7
    %v376 = vsub.s32 1, %v375
    %v377 = vrot.slane %v357, %v376
    %v378 = vlaneseq
    %v379 = vshrl.u32 %v378, 7
    %v380 = vsub.s32 1, %v379
    %v381 = vrot.slane %v361, %v380
    %v382 = vlaneseq
    %v383 = vshrl.u32 %v382, 7
    %v384 = vsub.s32 1, %v383
    %v385 = vrot.slane %v365, %v384
    %v386 = vlaneseq
    %v387 = vshrl.u32 %v386, 7
    %v388 = vsub.s32 1, %v387
    %v389 = vrot.slane %v369, %v388
    %v390 = vmul.f32 %v377, %v275
    %v391 = vmul.f32 %v381, %v277
    %v392 = vmul.f32 %v385, %v346
    %v393 = vmul.f32 %v389, %v348
    %v394 = vsel %vm350, %v275, %v390
    %v395 = vsel %vm351, %v277, %v391
    %v396 = vsel %vm352, %v346, %v392
    %v397 = vsel %vm353, %v348, %v393
    %v398 = vld [vmem:[#allocation7] sm:$0xff]
    %v399 = vld [vmem:[#allocation7 + $0x8] sm:$0xff]
    %v400 = vld [vmem:[#allocation7 + $0x10] sm:$0xff]
    %v401 = vld [vmem:[#allocation7 + $0x18] sm:$0xff]
    %v402 = vld [vmem:[#allocation7 + $0x20] sm:$0xff]
    %v403 = vld [vmem:[#allocation7 + $0x28] sm:$0xff]
    %v404 = vld [vmem:[#allocation7 + $0x30] sm:$0xff]
    %v405 = vld [vmem:[#allocation7 + $0x38] sm:$0xff]
    %v406 = vld [vmem:[#allocation7 + $0x40] sm:$0xff]
    %v407 = vld [vmem:[#allocation7 + $0x48] sm:$0xff]
    %v408 = vld [vmem:[#allocation7 + $0x50] sm:$0xff]
    %v409 = vld [vmem:[#allocation7 + $0x58] sm:$0xff]
    %v410 = vld [vmem:[#allocation7 + $0x60] sm:$0xff]
    %v411 = vld [vmem:[#allocation7 + $0x68] sm:$0xff]
    %v412 = vld [vmem:[#allocation7 + $0x70] sm:$0xff]
    %v413 = vld [vmem:[#allocation7 + $0x78] sm:$0xff]
    %v414 = vld [vmem:[#allocation7 + $0x80] sm:$0xff]
    %v415 = vld [vmem:[#allocation7 + $0x88] sm:$0xff]
    %v416 = vld [vmem:[#allocation7 + $0x90] sm:$0xff]
    %v417 = vld [vmem:[#allocation7 + $0x98] sm:$0xff]
    %v418 = vld [vmem:[#allocation7 + $0xa0] sm:$0xff]
    %v419 = vld [vmem:[#allocation7 + $0xa8] sm:$0xff]
    %v420 = vld [vmem:[#allocation7 + $0xb0] sm:$0xff]
    %v421 = vld [vmem:[#allocation7 + $0xb8] sm:$0xff]
    %v422 = vld [vmem:[#allocation7 + $0xc0] sm:$0xff]
    %v423 = vld [vmem:[#allocation7 + $0xc8] sm:$0xff]
    %v424 = vld [vmem:[#allocation7 + $0xd0] sm:$0xff]
    %v425 = vld [vmem:[#allocation7 + $0xd8] sm:$0xff]
    %v426 = vld [vmem:[#allocation7 + $0xe0] sm:$0xff]
    %v427 = vld [vmem:[#allocation7 + $0xe8] sm:$0xff]
    %v428 = vld [vmem:[#allocation7 + $0xf0] sm:$0xff]
    %v429 = vld [vmem:[#allocation7 + $0xf8] sm:$0xff]
    %v430 = vld [vmem:[#allocation7 + $0x100] sm:$0xff]
    %v431 = vld [vmem:[#allocation7 + $0x108] sm:$0xff]
    %v432 = vld [vmem:[#allocation7 + $0x110] sm:$0xff]
    %v433 = vld [vmem:[#allocation7 + $0x118] sm:$0xff]
    %v434 = vld [vmem:[#allocation7 + $0x120] sm:$0xff]
    %v435 = vld [vmem:[#allocation7 + $0x128] sm:$0xff]
    %v436 = vld [vmem:[#allocation7 + $0x130] sm:$0xff]
    %v437 = vld [vmem:[#allocation7 + $0x138] sm:$0xff]
    %v438 = vld [vmem:[#allocation7 + $0x140] sm:$0xff]
    %v439 = vld [vmem:[#allocation7 + $0x148] sm:$0xff]
    %v440 = vld [vmem:[#allocation7 + $0x150] sm:$0xff]
    %v441 = vld [vmem:[#allocation7 + $0x158] sm:$0xff]
    %v442 = vld [vmem:[#allocation7 + $0x160] sm:$0xff]
    %v443 = vld [vmem:[#allocation7 + $0x168] sm:$0xff]
    %v444 = vld [vmem:[#allocation7 + $0x170] sm:$0xff]
    %v445 = vld [vmem:[#allocation7 + $0x178] sm:$0xff]
    %v446 = vld [vmem:[#allocation7 + $0x180] sm:$0xff]
    %v447 = vld [vmem:[#allocation7 + $0x188] sm:$0xff]
    %v448 = vld [vmem:[#allocation7 + $0x190] sm:$0xff]
    %v449 = vld [vmem:[#allocation7 + $0x198] sm:$0xff]
    %v450 = vld [vmem:[#allocation7 + $0x1a0] sm:$0xff]
    %v451 = vld [vmem:[#allocation7 + $0x1a8] sm:$0xff]
    %v452 = vld [vmem:[#allocation7 + $0x1b0] sm:$0xff]
    %v453 = vld [vmem:[#allocation7 + $0x1b8] sm:$0xff]
    %v454 = vld [vmem:[#allocation7 + $0x1c0] sm:$0xff]
    %v455 = vld [vmem:[#allocation7 + $0x1c8] sm:$0xff]
    %v456 = vld [vmem:[#allocation7 + $0x1d0] sm:$0xff]
    %v457 = vld [vmem:[#allocation7 + $0x1d8] sm:$0xff]
    %v458 = vld [vmem:[#allocation7 + $0x1e0] sm:$0xff]
    %v459 = vld [vmem:[#allocation7 + $0x1e8] sm:$0xff]
    %v460 = vld [vmem:[#allocation7 + $0x1f0] sm:$0xff]
    %v461 = vld [vmem:[#allocation7 + $0x1f8] sm:$0xff]
    %v462 = vld [vmem:[#allocation7 + $0x200] sm:$0xff]
    %v463 = vld [vmem:[#allocation7 + $0x208] sm:$0xff]
    %v464 = vld [vmem:[#allocation7 + $0x210] sm:$0xff]
    %v465 = vld [vmem:[#allocation7 + $0x218] sm:$0xff]
    %v466 = vld [vmem:[#allocation7 + $0x220] sm:$0xff]
    %v467 = vld [vmem:[#allocation7 + $0x228] sm:$0xff]
    %v468 = vld [vmem:[#allocation7 + $0x230] sm:$0xff]
    %v469 = vld [vmem:[#allocation7 + $0x238] sm:$0xff]
    %v470 = vld [vmem:[#allocation7 + $0x240] sm:$0xff]
    %v471 = vld [vmem:[#allocation7 + $0x248] sm:$0xff]
    %v472 = vld [vmem:[#allocation7 + $0x250] sm:$0xff]
    %v473 = vld [vmem:[#allocation7 + $0x258] sm:$0xff]
    %v474 = vld [vmem:[#allocation7 + $0x260] sm:$0xff]
    %v475 = vld [vmem:[#allocation7 + $0x268] sm:$0xff]
    %v476 = vld [vmem:[#allocation7 + $0x270] sm:$0xff]
    %v477 = vld [vmem:[#allocation7 + $0x278] sm:$0xff]
    %v478 = vld [vmem:[#allocation7 + $0x280] sm:$0xff]
    %v479 = vld [vmem:[#allocation7 + $0x288] sm:$0xff]
    %v480 = vld [vmem:[#allocation7 + $0x290] sm:$0xff]
    %v481 = vld [vmem:[#allocation7 + $0x298] sm:$0xff]
    %v482 = vld [vmem:[#allocation7 + $0x2a0] sm:$0xff]
    %v483 = vld [vmem:[#allocation7 + $0x2a8] sm:$0xff]
    %v484 = vld [vmem:[#allocation7 + $0x2b0] sm:$0xff]
    %v485 = vld [vmem:[#allocation7 + $0x2b8] sm:$0xff]
    %v486 = vld [vmem:[#allocation7 + $0x2c0] sm:$0xff]
    %v487 = vld [vmem:[#allocation7 + $0x2c8] sm:$0xff]
    %v488 = vld [vmem:[#allocation7 + $0x2d0] sm:$0xff]
    %v489 = vld [vmem:[#allocation7 + $0x2d8] sm:$0xff]
    %v490 = vld [vmem:[#allocation7 + $0x2e0] sm:$0xff]
    %v491 = vld [vmem:[#allocation7 + $0x2e8] sm:$0xff]
    %v492 = vld [vmem:[#allocation7 + $0x2f0] sm:$0xff]
    %v493 = vld [vmem:[#allocation7 + $0x2f8] sm:$0xff]
    %v494 = vld [vmem:[#allocation7 + $0x300] sm:$0xff]
    %v495 = vld [vmem:[#allocation7 + $0x308] sm:$0xff]
    %v496 = vld [vmem:[#allocation7 + $0x310] sm:$0xff]
    %v497 = vld [vmem:[#allocation7 + $0x318] sm:$0xff]
    %v498 = vld [vmem:[#allocation7 + $0x320] sm:$0xff]
    %v499 = vld [vmem:[#allocation7 + $0x328] sm:$0xff]
    %v500 = vld [vmem:[#allocation7 + $0x330] sm:$0xff]
    %v501 = vld [vmem:[#allocation7 + $0x338] sm:$0xff]
    %v502 = vld [vmem:[#allocation7 + $0x340] sm:$0xff]
    %v503 = vld [vmem:[#allocation7 + $0x348] sm:$0xff]
    %v504 = vld [vmem:[#allocation7 + $0x350] sm:$0xff]
    %v505 = vld [vmem:[#allocation7 + $0x358] sm:$0xff]
    %v506 = vld [vmem:[#allocation7 + $0x360] sm:$0xff]
    %v507 = vld [vmem:[#allocation7 + $0x368] sm:$0xff]
    %v508 = vld [vmem:[#allocation7 + $0x370] sm:$0xff]
    %v509 = vld [vmem:[#allocation7 + $0x378] sm:$0xff]
    %v510 = vld [vmem:[#allocation7 + $0x380] sm:$0xff]
    %v511 = vld [vmem:[#allocation7 + $0x388] sm:$0xff]
    %v512 = vld [vmem:[#allocation7 + $0x390] sm:$0xff]
    %v513 = vld [vmem:[#allocation7 + $0x398] sm:$0xff]
    %v514 = vld [vmem:[#allocation7 + $0x3a0] sm:$0xff]
    %v515 = vld [vmem:[#allocation7 + $0x3a8] sm:$0xff]
    %v516 = vld [vmem:[#allocation7 + $0x3b0] sm:$0xff]
    %v517 = vld [vmem:[#allocation7 + $0x3b8] sm:$0xff]
    %v518 = vld [vmem:[#allocation7 + $0x3c0] sm:$0xff]
    %v519 = vld [vmem:[#allocation7 + $0x3c8] sm:$0xff]
    %v520 = vld [vmem:[#allocation7 + $0x3d0] sm:$0xff]
    %v521 = vld [vmem:[#allocation7 + $0x3d8] sm:$0xff]
    %v522 = vld [vmem:[#allocation7 + $0x3e0] sm:$0xff]
    %v523 = vld [vmem:[#allocation7 + $0x3e8] sm:$0xff]
    %v524 = vld [vmem:[#allocation7 + $0x3f0] sm:$0xff]
    %v525 = vld [vmem:[#allocation7 + $0x3f8] sm:$0xff]
    %v526 = vld [vmem:[#allocation8] sm:$0xff]
    %v527 = vpack.c.bf16 %v394, %v394
    %v528 = vpack.c.bf16 %v395, %v395
    %v529 = vpack.c.bf16 %v396, %v396
    %v530 = vpack.c.bf16 %v397, %v397
    %v532 = vlaneseq
    %v533 = vshrl.u32 %v532, 7
    %v534 = vsub.s32 0, %v533
    %v535 = vrot.slane %v526, %v534
    %v536 = vlaneseq
    %v537 = vshrl.u32 %v536, 7
    %v538 = vsub.s32 2, %v537
    %v539 = vrot.slane %v526, %v538
    %v540 = vlaneseq
    %v541 = vshrl.u32 %v540, 7
    %v542 = vsub.s32 4, %v541
    %v543 = vrot.slane %v526, %v542
    %v544 = vlaneseq
    %v545 = vshrl.u32 %v544, 7
    %v546 = vsub.s32 6, %v545
    %v547 = vrot.slane %v526, %v546
    %v552 = vlaneseq
    %v553 = vshrl.u32 %v552, 7
    %v554 = vsub.s32 0, %v553
    %v555 = vrot.slane %v535, %v554
    %v556 = vlaneseq
    %v557 = vshrl.u32 %v556, 7
    %v558 = vsub.s32 0, %v557
    %v559 = vrot.slane %v539, %v558
    %v560 = vlaneseq
    %v561 = vshrl.u32 %v560, 7
    %v562 = vsub.s32 0, %v561
    %v563 = vrot.slane %v543, %v562
    %v564 = vlaneseq
    %v565 = vshrl.u32 %v564, 7
    %v566 = vsub.s32 0, %v565
    %v567 = vrot.slane %v547, %v566
    %v696 = vunpack.c.l.b16 %v398
    %v697 = vunpack.c.h.b16 %v398
    %v698 = vunpack.c.l.b16 %v399
    %v699 = vunpack.c.h.b16 %v399
    %v700 = vunpack.c.l.b16 %v400
    %v701 = vunpack.c.h.b16 %v400
    %v702 = vunpack.c.l.b16 %v401
    %v703 = vunpack.c.h.b16 %v401
    %v704 = vunpack.c.l.b16 %v402
    %v705 = vunpack.c.h.b16 %v402
    %v706 = vunpack.c.l.b16 %v403
    %v707 = vunpack.c.h.b16 %v403
    %v708 = vunpack.c.l.b16 %v404
    %v709 = vunpack.c.h.b16 %v404
    %v710 = vunpack.c.l.b16 %v405
    %v711 = vunpack.c.h.b16 %v405
    %v712 = vunpack.c.l.b16 %v406
    %v713 = vunpack.c.h.b16 %v406
    %v714 = vunpack.c.l.b16 %v407
    %v715 = vunpack.c.h.b16 %v407
    %v716 = vunpack.c.l.b16 %v408
    %v717 = vunpack.c.h.b16 %v408
    %v718 = vunpack.c.l.b16 %v409
    %v719 = vunpack.c.h.b16 %v409
    %v720 = vunpack.c.l.b16 %v410
    %v721 = vunpack.c.h.b16 %v410
    %v722 = vunpack.c.l.b16 %v411
    %v723 = vunpack.c.h.b16 %v411
    %v724 = vunpack.c.l.b16 %v412
    %v725 = vunpack.c.h.b16 %v412
    %v726 = vunpack.c.l.b16 %v413
    %v727 = vunpack.c.h.b16 %v413
    %v728 = vunpack.c.l.b16 %v414
    %v729 = vunpack.c.h.b16 %v414
    %v730 = vunpack.c.l.b16 %v415
    %v731 = vunpack.c.h.b16 %v415
    %v732 = vunpack.c.l.b16 %v416
    %v733 = vunpack.c.h.b16 %v416
    %v734 = vunpack.c.l.b16 %v417
    %v735 = vunpack.c.h.b16 %v417
    %v736 = vunpack.c.l.b16 %v418
    %v737 = vunpack.c.h.b16 %v418
    %v738 = vunpack.c.l.b16 %v419
    %v739 = vunpack.c.h.b16 %v419
    %v740 = vunpack.c.l.b16 %v420
    %v741 = vunpack.c.h.b16 %v420
    %v742 = vunpack.c.l.b16 %v421
    %v743 = vunpack.c.h.b16 %v421
    %v744 = vunpack.c.l.b16 %v422
    %v745 = vunpack.c.h.b16 %v422
    %v746 = vunpack.c.l.b16 %v423
    %v747 = vunpack.c.h.b16 %v423
    %v748 = vunpack.c.l.b16 %v424
    %v749 = vunpack.c.h.b16 %v424
    %v750 = vunpack.c.l.b16 %v425
    %v751 = vunpack.c.h.b16 %v425
    %v752 = vunpack.c.l.b16 %v426
    %v753 = vunpack.c.h.b16 %v426
    %v754 = vunpack.c.l.b16 %v427
    %v755 = vunpack.c.h.b16 %v427
    %v756 = vunpack.c.l.b16 %v428
    %v757 = vunpack.c.h.b16 %v428
    %v758 = vunpack.c.l.b16 %v429
    %v759 = vunpack.c.h.b16 %v429
    %v760 = vunpack.c.l.b16 %v430
    %v761 = vunpack.c.h.b16 %v430
    %v762 = vunpack.c.l.b16 %v431
    %v763 = vunpack.c.h.b16 %v431
    %v764 = vunpack.c.l.b16 %v432
    %v765 = vunpack.c.h.b16 %v432
    %v766 = vunpack.c.l.b16 %v433
    %v767 = vunpack.c.h.b16 %v433
    %v768 = vunpack.c.l.b16 %v434
    %v769 = vunpack.c.h.b16 %v434
    %v770 = vunpack.c.l.b16 %v435
    %v771 = vunpack.c.h.b16 %v435
    %v772 = vunpack.c.l.b16 %v436
    %v773 = vunpack.c.h.b16 %v436
    %v774 = vunpack.c.l.b16 %v437
    %v775 = vunpack.c.h.b16 %v437
    %v776 = vunpack.c.l.b16 %v438
    %v777 = vunpack.c.h.b16 %v438
    %v778 = vunpack.c.l.b16 %v439
    %v779 = vunpack.c.h.b16 %v439
    %v780 = vunpack.c.l.b16 %v440
    %v781 = vunpack.c.h.b16 %v440
    %v782 = vunpack.c.l.b16 %v441
    %v783 = vunpack.c.h.b16 %v441
    %v784 = vunpack.c.l.b16 %v442
    %v785 = vunpack.c.h.b16 %v442
    %v786 = vunpack.c.l.b16 %v443
    %v787 = vunpack.c.h.b16 %v443
    %v788 = vunpack.c.l.b16 %v444
    %v789 = vunpack.c.h.b16 %v444
    %v790 = vunpack.c.l.b16 %v445
    %v791 = vunpack.c.h.b16 %v445
    %v792 = vunpack.c.l.b16 %v446
    %v793 = vunpack.c.h.b16 %v446
    %v794 = vunpack.c.l.b16 %v447
    %v795 = vunpack.c.h.b16 %v447
    %v796 = vunpack.c.l.b16 %v448
    %v797 = vunpack.c.h.b16 %v448
    %v798 = vunpack.c.l.b16 %v449
    %v799 = vunpack.c.h.b16 %v449
    %v800 = vunpack.c.l.b16 %v450
    %v801 = vunpack.c.h.b16 %v450
    %v802 = vunpack.c.l.b16 %v451
    %v803 = vunpack.c.h.b16 %v451
    %v804 = vunpack.c.l.b16 %v452
    %v805 = vunpack.c.h.b16 %v452
    %v806 = vunpack.c.l.b16 %v453
    %v807 = vunpack.c.h.b16 %v453
    %v808 = vunpack.c.l.b16 %v454
    %v809 = vunpack.c.h.b16 %v454
    %v810 = vunpack.c.l.b16 %v455
    %v811 = vunpack.c.h.b16 %v455
    %v812 = vunpack.c.l.b16 %v456
    %v813 = vunpack.c.h.b16 %v456
    %v814 = vunpack.c.l.b16 %v457
    %v815 = vunpack.c.h.b16 %v457
    %v816 = vunpack.c.l.b16 %v458
    %v817 = vunpack.c.h.b16 %v458
    %v818 = vunpack.c.l.b16 %v459
    %v819 = vunpack.c.h.b16 %v459
    %v820 = vunpack.c.l.b16 %v460
    %v821 = vunpack.c.h.b16 %v460
    %v822 = vunpack.c.l.b16 %v461
    %v823 = vunpack.c.h.b16 %v461
    %v824 = vunpack.c.l.b16 %v462
    %v825 = vunpack.c.h.b16 %v462
    %v826 = vunpack.c.l.b16 %v463
    %v827 = vunpack.c.h.b16 %v463
    %v828 = vunpack.c.l.b16 %v464
    %v829 = vunpack.c.h.b16 %v464
    %v830 = vunpack.c.l.b16 %v465
    %v831 = vunpack.c.h.b16 %v465
    %v832 = vunpack.c.l.b16 %v466
    %v833 = vunpack.c.h.b16 %v466
    %v834 = vunpack.c.l.b16 %v467
    %v835 = vunpack.c.h.b16 %v467
    %v836 = vunpack.c.l.b16 %v468
    %v837 = vunpack.c.h.b16 %v468
    %v838 = vunpack.c.l.b16 %v469
    %v839 = vunpack.c.h.b16 %v469
    %v840 = vunpack.c.l.b16 %v470
    %v841 = vunpack.c.h.b16 %v470
    %v842 = vunpack.c.l.b16 %v471
    %v843 = vunpack.c.h.b16 %v471
    %v844 = vunpack.c.l.b16 %v472
    %v845 = vunpack.c.h.b16 %v472
    %v846 = vunpack.c.l.b16 %v473
    %v847 = vunpack.c.h.b16 %v473
    %v848 = vunpack.c.l.b16 %v474
    %v849 = vunpack.c.h.b16 %v474
    %v850 = vunpack.c.l.b16 %v475
    %v851 = vunpack.c.h.b16 %v475
    %v852 = vunpack.c.l.b16 %v476
    %v853 = vunpack.c.h.b16 %v476
    %v854 = vunpack.c.l.b16 %v477
    %v855 = vunpack.c.h.b16 %v477
    %v856 = vunpack.c.l.b16 %v478
    %v857 = vunpack.c.h.b16 %v478
    %v858 = vunpack.c.l.b16 %v479
    %v859 = vunpack.c.h.b16 %v479
    %v860 = vunpack.c.l.b16 %v480
    %v861 = vunpack.c.h.b16 %v480
    %v862 = vunpack.c.l.b16 %v481
    %v863 = vunpack.c.h.b16 %v481
    %v864 = vunpack.c.l.b16 %v482
    %v865 = vunpack.c.h.b16 %v482
    %v866 = vunpack.c.l.b16 %v483
    %v867 = vunpack.c.h.b16 %v483
    %v868 = vunpack.c.l.b16 %v484
    %v869 = vunpack.c.h.b16 %v484
    %v870 = vunpack.c.l.b16 %v485
    %v871 = vunpack.c.h.b16 %v485
    %v872 = vunpack.c.l.b16 %v486
    %v873 = vunpack.c.h.b16 %v486
    %v874 = vunpack.c.l.b16 %v487
    %v875 = vunpack.c.h.b16 %v487
    %v876 = vunpack.c.l.b16 %v488
    %v877 = vunpack.c.h.b16 %v488
    %v878 = vunpack.c.l.b16 %v489
    %v879 = vunpack.c.h.b16 %v489
    %v880 = vunpack.c.l.b16 %v490
    %v881 = vunpack.c.h.b16 %v490
    %v882 = vunpack.c.l.b16 %v491
    %v883 = vunpack.c.h.b16 %v491
    %v884 = vunpack.c.l.b16 %v492
    %v885 = vunpack.c.h.b16 %v492
    %v886 = vunpack.c.l.b16 %v493
    %v887 = vunpack.c.h.b16 %v493
    %v888 = vunpack.c.l.b16 %v494
    %v889 = vunpack.c.h.b16 %v494
    %v890 = vunpack.c.l.b16 %v495
    %v891 = vunpack.c.h.b16 %v495
    %v892 = vunpack.c.l.b16 %v496
    %v893 = vunpack.c.h.b16 %v496
    %v894 = vunpack.c.l.b16 %v497
    %v895 = vunpack.c.h.b16 %v497
    %v896 = vunpack.c.l.b16 %v498
    %v897 = vunpack.c.h.b16 %v498
    %v898 = vunpack.c.l.b16 %v499
    %v899 = vunpack.c.h.b16 %v499
    %v900 = vunpack.c.l.b16 %v500
    %v901 = vunpack.c.h.b16 %v500
    %v902 = vunpack.c.l.b16 %v501
    %v903 = vunpack.c.h.b16 %v501
    %v904 = vunpack.c.l.b16 %v502
    %v905 = vunpack.c.h.b16 %v502
    %v906 = vunpack.c.l.b16 %v503
    %v907 = vunpack.c.h.b16 %v503
    %v908 = vunpack.c.l.b16 %v504
    %v909 = vunpack.c.h.b16 %v504
    %v910 = vunpack.c.l.b16 %v505
    %v911 = vunpack.c.h.b16 %v505
    %v912 = vunpack.c.l.b16 %v506
    %v913 = vunpack.c.h.b16 %v506
    %v914 = vunpack.c.l.b16 %v507
    %v915 = vunpack.c.h.b16 %v507
    %v916 = vunpack.c.l.b16 %v508
    %v917 = vunpack.c.h.b16 %v508
    %v918 = vunpack.c.l.b16 %v509
    %v919 = vunpack.c.h.b16 %v509
    %v920 = vunpack.c.l.b16 %v510
    %v921 = vunpack.c.h.b16 %v510
    %v922 = vunpack.c.l.b16 %v511
    %v923 = vunpack.c.h.b16 %v511
    %v924 = vunpack.c.l.b16 %v512
    %v925 = vunpack.c.h.b16 %v512
    %v926 = vunpack.c.l.b16 %v513
    %v927 = vunpack.c.h.b16 %v513
    %v928 = vunpack.c.l.b16 %v514
    %v929 = vunpack.c.h.b16 %v514
    %v930 = vunpack.c.l.b16 %v515
    %v931 = vunpack.c.h.b16 %v515
    %v932 = vunpack.c.l.b16 %v516
    %v933 = vunpack.c.h.b16 %v516
    %v934 = vunpack.c.l.b16 %v517
    %v935 = vunpack.c.h.b16 %v517
    %v936 = vunpack.c.l.b16 %v518
    %v937 = vunpack.c.h.b16 %v518
    %v938 = vunpack.c.l.b16 %v519
    %v939 = vunpack.c.h.b16 %v519
    %v940 = vunpack.c.l.b16 %v520
    %v941 = vunpack.c.h.b16 %v520
    %v942 = vunpack.c.l.b16 %v521
    %v943 = vunpack.c.h.b16 %v521
    %v944 = vunpack.c.l.b16 %v522
    %v945 = vunpack.c.h.b16 %v522
    %v946 = vunpack.c.l.b16 %v523
    %v947 = vunpack.c.h.b16 %v523
    %v948 = vunpack.c.l.b16 %v524
    %v949 = vunpack.c.h.b16 %v524
    %v950 = vunpack.c.l.b16 %v525
    %v951 = vunpack.c.h.b16 %v525
    %v952 = vpack.c.b16 %v700, %v696
    %v953 = vpack.c.b16 %v701, %v697
    %v954 = vpack.c.b16 %v702, %v698
    %v955 = vpack.c.b16 %v703, %v699
    %v956 = vpack.c.b16 %v708, %v704
    %v957 = vpack.c.b16 %v709, %v705
    %v958 = vpack.c.b16 %v710, %v706
    %v959 = vpack.c.b16 %v711, %v707
    %v960 = vpack.c.b16 %v716, %v712
    %v961 = vpack.c.b16 %v717, %v713
    %v962 = vpack.c.b16 %v718, %v714
    %v963 = vpack.c.b16 %v719, %v715
    %v964 = vpack.c.b16 %v724, %v720
    %v965 = vpack.c.b16 %v725, %v721
    %v966 = vpack.c.b16 %v726, %v722
    %v967 = vpack.c.b16 %v727, %v723
    %v968 = vpack.c.b16 %v732, %v728
    %v969 = vpack.c.b16 %v733, %v729
    %v970 = vpack.c.b16 %v734, %v730
    %v971 = vpack.c.b16 %v735, %v731
    %v972 = vpack.c.b16 %v740, %v736
    %v973 = vpack.c.b16 %v741, %v737
    %v974 = vpack.c.b16 %v742, %v738
    %v975 = vpack.c.b16 %v743, %v739
    %v976 = vpack.c.b16 %v748, %v744
    %v977 = vpack.c.b16 %v749, %v745
    %v978 = vpack.c.b16 %v750, %v746
    %v979 = vpack.c.b16 %v751, %v747
    %v980 = vpack.c.b16 %v756, %v752
    %v981 = vpack.c.b16 %v757, %v753
    %v982 = vpack.c.b16 %v758, %v754
    %v983 = vpack.c.b16 %v759, %v755
    %v984 = vpack.c.b16 %v764, %v760
    %v985 = vpack.c.b16 %v765, %v761
    %v986 = vpack.c.b16 %v766, %v762
    %v987 = vpack.c.b16 %v767, %v763
    %v988 = vpack.c.b16 %v772, %v768
    %v989 = vpack.c.b16 %v773, %v769
    %v990 = vpack.c.b16 %v774, %v770
    %v991 = vpack.c.b16 %v775, %v771
    %v992 = vpack.c.b16 %v780, %v776
    %v993 = vpack.c.b16 %v781, %v777
    %v994 = vpack.c.b16 %v782, %v778
    %v995 = vpack.c.b16 %v783, %v779
    %v996 = vpack.c.b16 %v788, %v784
    %v997 = vpack.c.b16 %v789, %v785
    %v998 = vpack.c.b16 %v790, %v786
    %v999 = vpack.c.b16 %v791, %v787
    %v1000 = vpack.c.b16 %v796, %v792
    %v1001 = vpack.c.b16 %v797, %v793
    %v1002 = vpack.c.b16 %v798, %v794
    %v1003 = vpack.c.b16 %v799, %v795
    %v1004 = vpack.c.b16 %v804, %v800
    %v1005 = vpack.c.b16 %v805, %v801
    %v1006 = vpack.c.b16 %v806, %v802
    %v1007 = vpack.c.b16 %v807, %v803
    %v1008 = vpack.c.b16 %v812, %v808
    %v1009 = vpack.c.b16 %v813, %v809
    %v1010 = vpack.c.b16 %v814, %v810
    %v1011 = vpack.c.b16 %v815, %v811
    %v1012 = vpack.c.b16 %v820, %v816
    %v1013 = vpack.c.b16 %v821, %v817
    %v1014 = vpack.c.b16 %v822, %v818
    %v1015 = vpack.c.b16 %v823, %v819
    %v1016 = vpack.c.b16 %v828, %v824
    %v1017 = vpack.c.b16 %v829, %v825
    %v1018 = vpack.c.b16 %v830, %v826
    %v1019 = vpack.c.b16 %v831, %v827
    %v1020 = vpack.c.b16 %v836, %v832
    %v1021 = vpack.c.b16 %v837, %v833
    %v1022 = vpack.c.b16 %v838, %v834
    %v1023 = vpack.c.b16 %v839, %v835
    %v1024 = vpack.c.b16 %v844, %v840
    %v1025 = vpack.c.b16 %v845, %v841
    %v1026 = vpack.c.b16 %v846, %v842
    %v1027 = vpack.c.b16 %v847, %v843
    %v1028 = vpack.c.b16 %v852, %v848
    %v1029 = vpack.c.b16 %v853, %v849
    %v1030 = vpack.c.b16 %v854, %v850
    %v1031 = vpack.c.b16 %v855, %v851
    %v1032 = vpack.c.b16 %v860, %v856
    %v1033 = vpack.c.b16 %v861, %v857
    %v1034 = vpack.c.b16 %v862, %v858
    %v1035 = vpack.c.b16 %v863, %v859
    %v1036 = vpack.c.b16 %v868, %v864
    %v1037 = vpack.c.b16 %v869, %v865
    %v1038 = vpack.c.b16 %v870, %v866
    %v1039 = vpack.c.b16 %v871, %v867
    %v1040 = vpack.c.b16 %v876, %v872
    %v1041 = vpack.c.b16 %v877, %v873
    %v1042 = vpack.c.b16 %v878, %v874
    %v1043 = vpack.c.b16 %v879, %v875
    %v1044 = vpack.c.b16 %v884, %v880
    %v1045 = vpack.c.b16 %v885, %v881
    %v1046 = vpack.c.b16 %v886, %v882
    %v1047 = vpack.c.b16 %v887, %v883
    %v1048 = vpack.c.b16 %v892, %v888
    %v1049 = vpack.c.b16 %v893, %v889
    %v1050 = vpack.c.b16 %v894, %v890
    %v1051 = vpack.c.b16 %v895, %v891
    %v1052 = vpack.c.b16 %v900, %v896
    %v1053 = vpack.c.b16 %v901, %v897
    %v1054 = vpack.c.b16 %v902, %v898
    %v1055 = vpack.c.b16 %v903, %v899
    %v1056 = vpack.c.b16 %v908, %v904
    %v1057 = vpack.c.b16 %v909, %v905
    %v1058 = vpack.c.b16 %v910, %v906
    %v1059 = vpack.c.b16 %v911, %v907
    %v1060 = vpack.c.b16 %v916, %v912
    %v1061 = vpack.c.b16 %v917, %v913
    %v1062 = vpack.c.b16 %v918, %v914
    %v1063 = vpack.c.b16 %v919, %v915
    %v1064 = vpack.c.b16 %v924, %v920
    %v1065 = vpack.c.b16 %v925, %v921
    %v1066 = vpack.c.b16 %v926, %v922
    %v1067 = vpack.c.b16 %v927, %v923
    %v1068 = vpack.c.b16 %v932, %v928
    %v1069 = vpack.c.b16 %v933, %v929
    %v1070 = vpack.c.b16 %v934, %v930
    %v1071 = vpack.c.b16 %v935, %v931
    %v1072 = vpack.c.b16 %v940, %v936
    %v1073 = vpack.c.b16 %v941, %v937
    %v1074 = vpack.c.b16 %v942, %v938
    %v1075 = vpack.c.b16 %v943, %v939
    %v1076 = vpack.c.b16 %v948, %v944
    %v1077 = vpack.c.b16 %v949, %v945
    %v1078 = vpack.c.b16 %v950, %v946
    %v1079 = vpack.c.b16 %v951, %v947
    %1208 = vmatprep.subr.bf16.mxu0 %v981
    %1209 = vmatpush1.bf16.msra.mxu0 %v980
    %1210 = vmatprep.subr.bf16.mxu0 %v977
    %1211 = vmatpush1.bf16.msra.mxu0 %v976
    %1212 = vmatprep.subr.bf16.mxu0 %v973
    %1213 = vmatpush1.bf16.msra.mxu0 %v972
    %1214 = vmatprep.subr.bf16.mxu0 %v969
    %1215 = vmatpush1.bf16.msra.mxu0 %v968
    %1216 = vmatprep.subr.bf16.mxu0 %v965
    %1217 = vmatpush1.bf16.msra.mxu0 %v964
    %1218 = vmatprep.subr.bf16.mxu0 %v961
    %1219 = vmatpush1.bf16.msra.mxu0 %v960
    %1220 = vmatprep.subr.bf16.mxu0 %v957
    %1221 = vmatpush1.bf16.msra.mxu0 %v956
    %1222 = vmatprep.subr.bf16.mxu0 %v953
    %1223 = vmatpush1.bf16.msra.mxu0 %v952
    %1224 = vmatprep.subr.bf16.mxu0 %v1013
    %1225 = vmatpush2.bf16.msra.mxu0 %v1012
    %1226 = vmatprep.subr.bf16.mxu0 %v1009
    %1227 = vmatpush2.bf16.msra.mxu0 %v1008
    %1228 = vmatprep.subr.bf16.mxu0 %v1005
    %1229 = vmatpush2.bf16.msra.mxu0 %v1004
    %1230 = vmatprep.subr.bf16.mxu0 %v1001
    %1231 = vmatpush2.bf16.msra.mxu0 %v1000
    %1232 = vmatprep.subr.bf16.mxu0 %v997
    %1233 = vmatpush2.bf16.msra.mxu0 %v996
    %1234 = vmatprep.subr.bf16.mxu0 %v993
    %1235 = vmatpush2.bf16.msra.mxu0 %v992
    %1236 = vmatprep.subr.bf16.mxu0 %v989
    %1237 = vmatpush2.bf16.msra.mxu0 %v988
    %1238 = vmatprep.subr.bf16.mxu0 %v985
    %1239 = vmatpush2.bf16.msra.mxu0 %v984
    %1240 = vmatprep.mubr.bf16.mxu0 %v528
    %1241 = vmatmul.mubr.bf16.gmra.mxu0 %v527
    %v1242 = vpop.f32.mrf.mxu0
    %v1243 = vadd.f32 %v555, %v1242
    %v1244 = vpop.f32.mrf.mxu0
    %v1245 = vadd.f32 %v559, %v1244
    %v1246 = vpop.f32.mrf.mxu0
    %v1247 = vpop.f32.mrf.mxu0
    %1248 = vdwg.mxu0
    %1249 = vmatprep.subr.bf16.mxu0 %v1045
    %1250 = vmatpush1.bf16.msra.mxu0 %v1044
    %1251 = vmatprep.subr.bf16.mxu0 %v1041
    %1252 = vmatpush1.bf16.msra.mxu0 %v1040
    %1253 = vmatprep.subr.bf16.mxu0 %v1037
    %1254 = vmatpush1.bf16.msra.mxu0 %v1036
    %1255 = vmatprep.subr.bf16.mxu0 %v1033
    %1256 = vmatpush1.bf16.msra.mxu0 %v1032
    %1257 = vmatprep.subr.bf16.mxu0 %v1029
    %1258 = vmatpush1.bf16.msra.mxu0 %v1028
    %1259 = vmatprep.subr.bf16.mxu0 %v1025
    %1260 = vmatpush1.bf16.msra.mxu0 %v1024
    %1261 = vmatprep.subr.bf16.mxu0 %v1021
    %1262 = vmatpush1.bf16.msra.mxu0 %v1020
    %1263 = vmatprep.subr.bf16.mxu0 %v1017
    %1264 = vmatpush1.bf16.msra.mxu0 %v1016
    %1265 = vmatprep.subr.bf16.mxu0 %v1077
    %1266 = vmatpush2.bf16.msra.mxu0 %v1076
    %1267 = vmatprep.subr.bf16.mxu0 %v1073
    %1268 = vmatpush2.bf16.msra.mxu0 %v1072
    %1269 = vmatprep.subr.bf16.mxu0 %v1069
    %1270 = vmatpush2.bf16.msra.mxu0 %v1068
    %1271 = vmatprep.subr.bf16.mxu0 %v1065
    %1272 = vmatpush2.bf16.msra.mxu0 %v1064
    %1273 = vmatprep.subr.bf16.mxu0 %v1061
    %1274 = vmatpush2.bf16.msra.mxu0 %v1060
    %1275 = vmatprep.subr.bf16.mxu0 %v1057
    %1276 = vmatpush2.bf16.msra.mxu0 %v1056
    %1277 = vmatprep.subr.bf16.mxu0 %v1053
    %1278 = vmatpush2.bf16.msra.mxu0 %v1052
    %1279 = vmatprep.subr.bf16.mxu0 %v1049
    %1280 = vmatpush2.bf16.msra.mxu0 %v1048
    %1281 = vmatprep.mubr.bf16.mxu0 %v530
    %1282 = vmatmul.mubr.bf16.gmra.mxu0 %v529
    %v1283 = vpop.f32.mrf.mxu0
    %v1284 = vadd.f32 %v1243, %v1283
    %v1285 = vpop.f32.mrf.mxu0
    %v1286 = vadd.f32 %v1245, %v1285
    %v1287 = vpop.f32.mrf.mxu0
    %v1288 = vpop.f32.mrf.mxu0
    %1289 = vdwg.mxu0
    %1290 = vmatprep.subr.bf16.mxu0 %v983
    %1291 = vmatpush1.bf16.msra.mxu0 %v982
    %1292 = vmatprep.subr.bf16.mxu0 %v979
    %1293 = vmatpush1.bf16.msra.mxu0 %v978
    %1294 = vmatprep.subr.bf16.mxu0 %v975
    %1295 = vmatpush1.bf16.msra.mxu0 %v974
    %1296 = vmatprep.subr.bf16.mxu0 %v971
    %1297 = vmatpush1.bf16.msra.mxu0 %v970
    %1298 = vmatprep.subr.bf16.mxu0 %v967
    %1299 = vmatpush1.bf16.msra.mxu0 %v966
    %1300 = vmatprep.subr.bf16.mxu0 %v963
    %1301 = vmatpush1.bf16.msra.mxu0 %v962
    %1302 = vmatprep.subr.bf16.mxu0 %v959
    %1303 = vmatpush1.bf16.msra.mxu0 %v958
    %1304 = vmatprep.subr.bf16.mxu0 %v955
    %1305 = vmatpush1.bf16.msra.mxu0 %v954
    %1306 = vmatprep.subr.bf16.mxu0 %v1015
    %1307 = vmatpush2.bf16.msra.mxu0 %v1014
    %1308 = vmatprep.subr.bf16.mxu0 %v1011
    %1309 = vmatpush2.bf16.msra.mxu0 %v1010
    %1310 = vmatprep.subr.bf16.mxu0 %v1007
    %1311 = vmatpush2.bf16.msra.mxu0 %v1006
    %1312 = vmatprep.subr.bf16.mxu0 %v1003
    %1313 = vmatpush2.bf16.msra.mxu0 %v1002
    %1314 = vmatprep.subr.bf16.mxu0 %v999
    %1315 = vmatpush2.bf16.msra.mxu0 %v998
    %1316 = vmatprep.subr.bf16.mxu0 %v995
    %1317 = vmatpush2.bf16.msra.mxu0 %v994
    %1318 = vmatprep.subr.bf16.mxu0 %v991
    %1319 = vmatpush2.bf16.msra.mxu0 %v990
    %1320 = vmatprep.subr.bf16.mxu0 %v987
    %1321 = vmatpush2.bf16.msra.mxu0 %v986
    %1322 = vmatprep.mubr.bf16.mxu0 %v528
    %1323 = vmatmul.mubr.bf16.gmra.mxu0 %v527
    %v1324 = vpop.f32.mrf.mxu0
    %v1325 = vadd.f32 %v563, %v1324
    %v1326 = vpop.f32.mrf.mxu0
    %v1327 = vadd.f32 %v567, %v1326
    %v1328 = vpop.f32.mrf.mxu0
    %v1329 = vpop.f32.mrf.mxu0
    %1330 = vdwg.mxu0
    %1331 = vmatprep.subr.bf16.mxu0 %v1047
    %1332 = vmatpush1.bf16.msra.mxu0 %v1046
    %1333 = vmatprep.subr.bf16.mxu0 %v1043
    %1334 = vmatpush1.bf16.msra.mxu0 %v1042
    %1335 = vmatprep.subr.bf16.mxu0 %v1039
    %1336 = vmatpush1.bf16.msra.mxu0 %v1038
    %1337 = vmatprep.subr.bf16.mxu0 %v1035
    %1338 = vmatpush1.bf16.msra.mxu0 %v1034
    %1339 = vmatprep.subr.bf16.mxu0 %v1031
    %1340 = vmatpush1.bf16.msra.mxu0 %v1030
    %1341 = vmatprep.subr.bf16.mxu0 %v1027
    %1342 = vmatpush1.bf16.msra.mxu0 %v1026
    %1343 = vmatprep.subr.bf16.mxu0 %v1023
    %1344 = vmatpush1.bf16.msra.mxu0 %v1022
    %1345 = vmatprep.subr.bf16.mxu0 %v1019
    %1346 = vmatpush1.bf16.msra.mxu0 %v1018
    %1347 = vmatprep.subr.bf16.mxu0 %v1079
    %1348 = vmatpush2.bf16.msra.mxu0 %v1078
    %1349 = vmatprep.subr.bf16.mxu0 %v1075
    %1350 = vmatpush2.bf16.msra.mxu0 %v1074
    %1351 = vmatprep.subr.bf16.mxu0 %v1071
    %1352 = vmatpush2.bf16.msra.mxu0 %v1070
    %1353 = vmatprep.subr.bf16.mxu0 %v1067
    %1354 = vmatpush2.bf16.msra.mxu0 %v1066
    %1355 = vmatprep.subr.bf16.mxu0 %v1063
    %1356 = vmatpush2.bf16.msra.mxu0 %v1062
    %1357 = vmatprep.subr.bf16.mxu0 %v1059
    %1358 = vmatpush2.bf16.msra.mxu0 %v1058
    %1359 = vmatprep.subr.bf16.mxu0 %v1055
    %1360 = vmatpush2.bf16.msra.mxu0 %v1054
    %1361 = vmatprep.subr.bf16.mxu0 %v1051
    %1362 = vmatpush2.bf16.msra.mxu0 %v1050
    %1363 = vmatprep.mubr.bf16.mxu0 %v530
    %1364 = vmatmul.mubr.bf16.gmra.mxu0 %v529
    %v1365 = vpop.f32.mrf.mxu0
    %v1366 = vadd.f32 %v1325, %v1365
    %v1367 = vpop.f32.mrf.mxu0
    %v1368 = vadd.f32 %v1327, %v1367
    %v1369 = vpop.f32.mrf.mxu0
    %v1370 = vpop.f32.mrf.mxu0
    %1371 = vdwg.mxu0
    %vm1372 = vcmp.gt.f32.partialorder %v1284, 0.0
    %vm1373 = vcmp.gt.f32.partialorder %v1286, 0.0
    %vm1374 = vcmp.gt.f32.partialorder %v1366, 0.0
    %vm1375 = vcmp.gt.f32.partialorder %v1368, 0.0
    %v1376 = vlaneseq
    %v1377 = vshrl.u32 %v1376, 7
    %v1378 = vsub.s32 1, %v1377
    %v1379 = vrot.slane %v526, %v1378
    %v1380 = vlaneseq
    %v1381 = vshrl.u32 %v1380, 7
    %v1382 = vsub.s32 3, %v1381
    %v1383 = vrot.slane %v526, %v1382
    %v1384 = vlaneseq
    %v1385 = vshrl.u32 %v1384, 7
    %v1386 = vsub.s32 5, %v1385
    %v1387 = vrot.slane %v526, %v1386
    %v1388 = vlaneseq
    %v1389 = vshrl.u32 %v1388, 7
    %v1390 = vsub.s32 7, %v1389
    %v1391 = vrot.slane %v526, %v1390
    %v1396 = vlaneseq
    %v1397 = vshrl.u32 %v1396, 7
    %v1398 = vsub.s32 1, %v1397
    %v1399 = vrot.slane %v1379, %v1398
    %v1400 = vlaneseq
    %v1401 = vshrl.u32 %v1400, 7
    %v1402 = vsub.s32 1, %v1401
    %v1403 = vrot.slane %v1383, %v1402
    %v1404 = vlaneseq
    %v1405 = vshrl.u32 %v1404, 7
    %v1406 = vsub.s32 1, %v1405
    %v1407 = vrot.slane %v1387, %v1406
    %v1408 = vlaneseq
    %v1409 = vshrl.u32 %v1408, 7
    %v1410 = vsub.s32 1, %v1409
    %v1411 = vrot.slane %v1391, %v1410
    %v1412 = vmul.f32 %v1399, %v1284
    %v1413 = vmul.f32 %v1403, %v1286
    %v1414 = vmul.f32 %v1407, %v1366
    %v1415 = vmul.f32 %v1411, %v1368
    %v1416 = vsel %vm1372, %v1284, %v1412
    %v1417 = vsel %vm1373, %v1286, %v1413
    %v1418 = vsel %vm1374, %v1366, %v1414
    %v1419 = vsel %vm1375, %v1368, %v1415
    %v1420 = vadd.f32 %v394, %v1416
    %v1421 = vadd.f32 %v395, %v1417
    %v1422 = vadd.f32 %v396, %v1418
    %v1423 = vadd.f32 %v397, %v1419
    %s1424 = scalar_lea.vmem [#allocation7], 1024
    %v1425 = vld [vmem:[%s1424] sm:$0xff]
    %v1426 = vld [vmem:[%s1424 + $0x8] sm:$0xff]
    %v1427 = vld [vmem:[%s1424 + $0x10] sm:$0xff]
    %v1428 = vld [vmem:[%s1424 + $0x18] sm:$0xff]
    %v1429 = vld [vmem:[%s1424 + $0x20] sm:$0xff]
    %v1430 = vld [vmem:[%s1424 + $0x28] sm:$0xff]
    %v1431 = vld [vmem:[%s1424 + $0x30] sm:$0xff]
    %v1432 = vld [vmem:[%s1424 + $0x38] sm:$0xff]
    %v1433 = vld [vmem:[%s1424 + $0x40] sm:$0xff]
    %v1434 = vld [vmem:[%s1424 + $0x48] sm:$0xff]
    %v1435 = vld [vmem:[%s1424 + $0x50] sm:$0xff]
    %v1436 = vld [vmem:[%s1424 + $0x58] sm:$0xff]
    %v1437 = vld [vmem:[%s1424 + $0x60] sm:$0xff]
    %v1438 = vld [vmem:[%s1424 + $0x68] sm:$0xff]
    %v1439 = vld [vmem:[%s1424 + $0x70] sm:$0xff]
    %v1440 = vld [vmem:[%s1424 + $0x78] sm:$0xff]
    %v1441 = vld [vmem:[%s1424 + $0x80] sm:$0xff]
    %v1442 = vld [vmem:[%s1424 + $0x88] sm:$0xff]
    %v1443 = vld [vmem:[%s1424 + $0x90] sm:$0xff]
    %v1444 = vld [vmem:[%s1424 + $0x98] sm:$0xff]
    %v1445 = vld [vmem:[%s1424 + $0xa0] sm:$0xff]
    %v1446 = vld [vmem:[%s1424 + $0xa8] sm:$0xff]
    %v1447 = vld [vmem:[%s1424 + $0xb0] sm:$0xff]
    %v1448 = vld [vmem:[%s1424 + $0xb8] sm:$0xff]
    %v1449 = vld [vmem:[%s1424 + $0xc0] sm:$0xff]
    %v1450 = vld [vmem:[%s1424 + $0xc8] sm:$0xff]
    %v1451 = vld [vmem:[%s1424 + $0xd0] sm:$0xff]
    %v1452 = vld [vmem:[%s1424 + $0xd8] sm:$0xff]
    %v1453 = vld [vmem:[%s1424 + $0xe0] sm:$0xff]
    %v1454 = vld [vmem:[%s1424 + $0xe8] sm:$0xff]
    %v1455 = vld [vmem:[%s1424 + $0xf0] sm:$0xff]
    %v1456 = vld [vmem:[%s1424 + $0xf8] sm:$0xff]
    %v1457 = vld [vmem:[%s1424 + $0x100] sm:$0xff]
    %v1458 = vld [vmem:[%s1424 + $0x108] sm:$0xff]
    %v1459 = vld [vmem:[%s1424 + $0x110] sm:$0xff]
    %v1460 = vld [vmem:[%s1424 + $0x118] sm:$0xff]
    %v1461 = vld [vmem:[%s1424 + $0x120] sm:$0xff]
    %v1462 = vld [vmem:[%s1424 + $0x128] sm:$0xff]
    %v1463 = vld [vmem:[%s1424 + $0x130] sm:$0xff]
    %v1464 = vld [vmem:[%s1424 + $0x138] sm:$0xff]
    %v1465 = vld [vmem:[%s1424 + $0x140] sm:$0xff]
    %v1466 = vld [vmem:[%s1424 + $0x148] sm:$0xff]
    %v1467 = vld [vmem:[%s1424 + $0x150] sm:$0xff]
    %v1468 = vld [vmem:[%s1424 + $0x158] sm:$0xff]
    %v1469 = vld [vmem:[%s1424 + $0x160] sm:$0xff]
    %v1470 = vld [vmem:[%s1424 + $0x168] sm:$0xff]
    %v1471 = vld [vmem:[%s1424 + $0x170] sm:$0xff]
    %v1472 = vld [vmem:[%s1424 + $0x178] sm:$0xff]
    %v1473 = vld [vmem:[%s1424 + $0x180] sm:$0xff]
    %v1474 = vld [vmem:[%s1424 + $0x188] sm:$0xff]
    %v1475 = vld [vmem:[%s1424 + $0x190] sm:$0xff]
    %v1476 = vld [vmem:[%s1424 + $0x198] sm:$0xff]
    %v1477 = vld [vmem:[%s1424 + $0x1a0] sm:$0xff]
    %v1478 = vld [vmem:[%s1424 + $0x1a8] sm:$0xff]
    %v1479 = vld [vmem:[%s1424 + $0x1b0] sm:$0xff]
    %v1480 = vld [vmem:[%s1424 + $0x1b8] sm:$0xff]
    %v1481 = vld [vmem:[%s1424 + $0x1c0] sm:$0xff]
    %v1482 = vld [vmem:[%s1424 + $0x1c8] sm:$0xff]
    %v1483 = vld [vmem:[%s1424 + $0x1d0] sm:$0xff]
    %v1484 = vld [vmem:[%s1424 + $0x1d8] sm:$0xff]
    %v1485 = vld [vmem:[%s1424 + $0x1e0] sm:$0xff]
    %v1486 = vld [vmem:[%s1424 + $0x1e8] sm:$0xff]
    %v1487 = vld [vmem:[%s1424 + $0x1f0] sm:$0xff]
    %v1488 = vld [vmem:[%s1424 + $0x1f8] sm:$0xff]
    %v1489 = vld [vmem:[%s1424 + $0x200] sm:$0xff]
    %v1490 = vld [vmem:[%s1424 + $0x208] sm:$0xff]
    %v1491 = vld [vmem:[%s1424 + $0x210] sm:$0xff]
    %v1492 = vld [vmem:[%s1424 + $0x218] sm:$0xff]
    %v1493 = vld [vmem:[%s1424 + $0x220] sm:$0xff]
    %v1494 = vld [vmem:[%s1424 + $0x228] sm:$0xff]
    %v1495 = vld [vmem:[%s1424 + $0x230] sm:$0xff]
    %v1496 = vld [vmem:[%s1424 + $0x238] sm:$0xff]
    %v1497 = vld [vmem:[%s1424 + $0x240] sm:$0xff]
    %v1498 = vld [vmem:[%s1424 + $0x248] sm:$0xff]
    %v1499 = vld [vmem:[%s1424 + $0x250] sm:$0xff]
    %v1500 = vld [vmem:[%s1424 + $0x258] sm:$0xff]
    %v1501 = vld [vmem:[%s1424 + $0x260] sm:$0xff]
    %v1502 = vld [vmem:[%s1424 + $0x268] sm:$0xff]
    %v1503 = vld [vmem:[%s1424 + $0x270] sm:$0xff]
    %v1504 = vld [vmem:[%s1424 + $0x278] sm:$0xff]
    %v1505 = vld [vmem:[%s1424 + $0x280] sm:$0xff]
    %v1506 = vld [vmem:[%s1424 + $0x288] sm:$0xff]
    %v1507 = vld [vmem:[%s1424 + $0x290] sm:$0xff]
    %v1508 = vld [vmem:[%s1424 + $0x298] sm:$0xff]
    %v1509 = vld [vmem:[%s1424 + $0x2a0] sm:$0xff]
    %v1510 = vld [vmem:[%s1424 + $0x2a8] sm:$0xff]
    %v1511 = vld [vmem:[%s1424 + $0x2b0] sm:$0xff]
    %v1512 = vld [vmem:[%s1424 + $0x2b8] sm:$0xff]
    %v1513 = vld [vmem:[%s1424 + $0x2c0] sm:$0xff]
    %v1514 = vld [vmem:[%s1424 + $0x2c8] sm:$0xff]
    %v1515 = vld [vmem:[%s1424 + $0x2d0] sm:$0xff]
    %v1516 = vld [vmem:[%s1424 + $0x2d8] sm:$0xff]
    %v1517 = vld [vmem:[%s1424 + $0x2e0] sm:$0xff]
    %v1518 = vld [vmem:[%s1424 + $0x2e8] sm:$0xff]
    %v1519 = vld [vmem:[%s1424 + $0x2f0] sm:$0xff]
    %v1520 = vld [vmem:[%s1424 + $0x2f8] sm:$0xff]
    %v1521 = vld [vmem:[%s1424 + $0x300] sm:$0xff]
    %v1522 = vld [vmem:[%s1424 + $0x308] sm:$0xff]
    %v1523 = vld [vmem:[%s1424 + $0x310] sm:$0xff]
    %v1524 = vld [vmem:[%s1424 + $0x318] sm:$0xff]
    %v1525 = vld [vmem:[%s1424 + $0x320] sm:$0xff]
    %v1526 = vld [vmem:[%s1424 + $0x328] sm:$0xff]
    %v1527 = vld [vmem:[%s1424 + $0x330] sm:$0xff]
    %v1528 = vld [vmem:[%s1424 + $0x338] sm:$0xff]
    %v1529 = vld [vmem:[%s1424 + $0x340] sm:$0xff]
    %v1530 = vld [vmem:[%s1424 + $0x348] sm:$0xff]
    %v1531 = vld [vmem:[%s1424 + $0x350] sm:$0xff]
    %v1532 = vld [vmem:[%s1424 + $0x358] sm:$0xff]
    %v1533 = vld [vmem:[%s1424 + $0x360] sm:$0xff]
    %v1534 = vld [vmem:[%s1424 + $0x368] sm:$0xff]
    %v1535 = vld [vmem:[%s1424 + $0x370] sm:$0xff]
    %v1536 = vld [vmem:[%s1424 + $0x378] sm:$0xff]
    %v1537 = vld [vmem:[%s1424 + $0x380] sm:$0xff]
    %v1538 = vld [vmem:[%s1424 + $0x388] sm:$0xff]
    %v1539 = vld [vmem:[%s1424 + $0x390] sm:$0xff]
    %v1540 = vld [vmem:[%s1424 + $0x398] sm:$0xff]
    %v1541 = vld [vmem:[%s1424 + $0x3a0] sm:$0xff]
    %v1542 = vld [vmem:[%s1424 + $0x3a8] sm:$0xff]
    %v1543 = vld [vmem:[%s1424 + $0x3b0] sm:$0xff]
    %v1544 = vld [vmem:[%s1424 + $0x3b8] sm:$0xff]
    %v1545 = vld [vmem:[%s1424 + $0x3c0] sm:$0xff]
    %v1546 = vld [vmem:[%s1424 + $0x3c8] sm:$0xff]
    %v1547 = vld [vmem:[%s1424 + $0x3d0] sm:$0xff]
    %v1548 = vld [vmem:[%s1424 + $0x3d8] sm:$0xff]
    %v1549 = vld [vmem:[%s1424 + $0x3e0] sm:$0xff]
    %v1550 = vld [vmem:[%s1424 + $0x3e8] sm:$0xff]
    %v1551 = vld [vmem:[%s1424 + $0x3f0] sm:$0xff]
    %v1552 = vld [vmem:[%s1424 + $0x3f8] sm:$0xff]
    %s1553 = scalar_lea.vmem [#allocation8], 8
    %v1554 = vld [vmem:[%s1553] sm:$0xff]
    %v1555 = vpack.c.bf16 %v1420, %v1420
    %v1556 = vpack.c.bf16 %v1421, %v1421
    %v1557 = vpack.c.bf16 %v1422, %v1422
    %v1558 = vpack.c.bf16 %v1423, %v1423
    %v1560 = vlaneseq
    %v1561 = vshrl.u32 %v1560, 7
    %v1562 = vsub.s32 0, %v1561
    %v1563 = vrot.slane %v1554, %v1562
    %v1564 = vlaneseq
    %v1565 = vshrl.u32 %v1564, 7
    %v1566 = vsub.s32 2, %v1565
    %v1567 = vrot.slane %v1554, %v1566
    %v1568 = vlaneseq
    %v1569 = vshrl.u32 %v1568, 7
    %v1570 = vsub.s32 4, %v1569
    %v1571 = vrot.slane %v1554, %v1570
    %v1572 = vlaneseq
    %v1573 = vshrl.u32 %v1572, 7
    %v1574 = vsub.s32 6, %v1573
    %v1575 = vrot.slane %v1554, %v1574
    %v1580 = vlaneseq
    %v1581 = vshrl.u32 %v1580, 7
    %v1582 = vsub.s32 0, %v1581
    %v1583 = vrot.slane %v1563, %v1582
    %v1584 = vlaneseq
    %v1585 = vshrl.u32 %v1584, 7
    %v1586 = vsub.s32 0, %v1585
    %v1587 = vrot.slane %v1567, %v1586
    %v1588 = vlaneseq
    %v1589 = vshrl.u32 %v1588, 7
    %v1590 = vsub.s32 0, %v1589
    %v1591 = vrot.slane %v1571, %v1590
    %v1592 = vlaneseq
    %v1593 = vshrl.u32 %v1592, 7
    %v1594 = vsub.s32 0, %v1593
    %v1595 = vrot.slane %v1575, %v1594
    %v1724 = vunpack.c.l.b16 %v1425
    %v1725 = vunpack.c.h.b16 %v1425
    %v1726 = vunpack.c.l.b16 %v1426
    %v1727 = vunpack.c.h.b16 %v1426
    %v1728 = vunpack.c.l.b16 %v1427
    %v1729 = vunpack.c.h.b16 %v1427
    %v1730 = vunpack.c.l.b16 %v1428
    %v1731 = vunpack.c.h.b16 %v1428
    %v1732 = vunpack.c.l.b16 %v1429
    %v1733 = vunpack.c.h.b16 %v1429
    %v1734 = vunpack.c.l.b16 %v1430
    %v1735 = vunpack.c.h.b16 %v1430
    %v1736 = vunpack.c.l.b16 %v1431
    %v1737 = vunpack.c.h.b16 %v1431
    %v1738 = vunpack.c.l.b16 %v1432
    %v1739 = vunpack.c.h.b16 %v1432
    %v1740 = vunpack.c.l.b16 %v1433
    %v1741 = vunpack.c.h.b16 %v1433
    %v1742 = vunpack.c.l.b16 %v1434
    %v1743 = vunpack.c.h.b16 %v1434
    %v1744 = vunpack.c.l.b16 %v1435
    %v1745 = vunpack.c.h.b16 %v1435
    %v1746 = vunpack.c.l.b16 %v1436
    %v1747 = vunpack.c.h.b16 %v1436
    %v1748 = vunpack.c.l.b16 %v1437
    %v1749 = vunpack.c.h.b16 %v1437
    %v1750 = vunpack.c.l.b16 %v1438
    %v1751 = vunpack.c.h.b16 %v1438
    %v1752 = vunpack.c.l.b16 %v1439
    %v1753 = vunpack.c.h.b16 %v1439
    %v1754 = vunpack.c.l.b16 %v1440
    %v1755 = vunpack.c.h.b16 %v1440
    %v1756 = vunpack.c.l.b16 %v1441
    %v1757 = vunpack.c.h.b16 %v1441
    %v1758 = vunpack.c.l.b16 %v1442
    %v1759 = vunpack.c.h.b16 %v1442
    %v1760 = vunpack.c.l.b16 %v1443
    %v1761 = vunpack.c.h.b16 %v1443
    %v1762 = vunpack.c.l.b16 %v1444
    %v1763 = vunpack.c.h.b16 %v1444
    %v1764 = vunpack.c.l.b16 %v1445
    %v1765 = vunpack.c.h.b16 %v1445
    %v1766 = vunpack.c.l.b16 %v1446
    %v1767 = vunpack.c.h.b16 %v1446
    %v1768 = vunpack.c.l.b16 %v1447
    %v1769 = vunpack.c.h.b16 %v1447
    %v1770 = vunpack.c.l.b16 %v1448
    %v1771 = vunpack.c.h.b16 %v1448
    %v1772 = vunpack.c.l.b16 %v1449
    %v1773 = vunpack.c.h.b16 %v1449
    %v1774 = vunpack.c.l.b16 %v1450
    %v1775 = vunpack.c.h.b16 %v1450
    %v1776 = vunpack.c.l.b16 %v1451
    %v1777 = vunpack.c.h.b16 %v1451
    %v1778 = vunpack.c.l.b16 %v1452
    %v1779 = vunpack.c.h.b16 %v1452
    %v1780 = vunpack.c.l.b16 %v1453
    %v1781 = vunpack.c.h.b16 %v1453
    %v1782 = vunpack.c.l.b16 %v1454
    %v1783 = vunpack.c.h.b16 %v1454
    %v1784 = vunpack.c.l.b16 %v1455
    %v1785 = vunpack.c.h.b16 %v1455
    %v1786 = vunpack.c.l.b16 %v1456
    %v1787 = vunpack.c.h.b16 %v1456
    %v1788 = vunpack.c.l.b16 %v1457
    %v1789 = vunpack.c.h.b16 %v1457
    %v1790 = vunpack.c.l.b16 %v1458
    %v1791 = vunpack.c.h.b16 %v1458
    %v1792 = vunpack.c.l.b16 %v1459
    %v1793 = vunpack.c.h.b16 %v1459
    %v1794 = vunpack.c.l.b16 %v1460
    %v1795 = vunpack.c.h.b16 %v1460
    %v1796 = vunpack.c.l.b16 %v1461
    %v1797 = vunpack.c.h.b16 %v1461
    %v1798 = vunpack.c.l.b16 %v1462
    %v1799 = vunpack.c.h.b16 %v1462
    %v1800 = vunpack.c.l.b16 %v1463
    %v1801 = vunpack.c.h.b16 %v1463
    %v1802 = vunpack.c.l.b16 %v1464
    %v1803 = vunpack.c.h.b16 %v1464
    %v1804 = vunpack.c.l.b16 %v1465
    %v1805 = vunpack.c.h.b16 %v1465
    %v1806 = vunpack.c.l.b16 %v1466
    %v1807 = vunpack.c.h.b16 %v1466
    %v1808 = vunpack.c.l.b16 %v1467
    %v1809 = vunpack.c.h.b16 %v1467
    %v1810 = vunpack.c.l.b16 %v1468
    %v1811 = vunpack.c.h.b16 %v1468
    %v1812 = vunpack.c.l.b16 %v1469
    %v1813 = vunpack.c.h.b16 %v1469
    %v1814 = vunpack.c.l.b16 %v1470
    %v1815 = vunpack.c.h.b16 %v1470
    %v1816 = vunpack.c.l.b16 %v1471
    %v1817 = vunpack.c.h.b16 %v1471
    %v1818 = vunpack.c.l.b16 %v1472
    %v1819 = vunpack.c.h.b16 %v1472
    %v1820 = vunpack.c.l.b16 %v1473
    %v1821 = vunpack.c.h.b16 %v1473
    %v1822 = vunpack.c.l.b16 %v1474
    %v1823 = vunpack.c.h.b16 %v1474
    %v1824 = vunpack.c.l.b16 %v1475
    %v1825 = vunpack.c.h.b16 %v1475
    %v1826 = vunpack.c.l.b16 %v1476
    %v1827 = vunpack.c.h.b16 %v1476
    %v1828 = vunpack.c.l.b16 %v1477
    %v1829 = vunpack.c.h.b16 %v1477
    %v1830 = vunpack.c.l.b16 %v1478
    %v1831 = vunpack.c.h.b16 %v1478
    %v1832 = vunpack.c.l.b16 %v1479
    %v1833 = vunpack.c.h.b16 %v1479
    %v1834 = vunpack.c.l.b16 %v1480
    %v1835 = vunpack.c.h.b16 %v1480
    %v1836 = vunpack.c.l.b16 %v1481
    %v1837 = vunpack.c.h.b16 %v1481
    %v1838 = vunpack.c.l.b16 %v1482
    %v1839 = vunpack.c.h.b16 %v1482
    %v1840 = vunpack.c.l.b16 %v1483
    %v1841 = vunpack.c.h.b16 %v1483
    %v1842 = vunpack.c.l.b16 %v1484
    %v1843 = vunpack.c.h.b16 %v1484
    %v1844 = vunpack.c.l.b16 %v1485
    %v1845 = vunpack.c.h.b16 %v1485
    %v1846 = vunpack.c.l.b16 %v1486
    %v1847 = vunpack.c.h.b16 %v1486
    %v1848 = vunpack.c.l.b16 %v1487
    %v1849 = vunpack.c.h.b16 %v1487
    %v1850 = vunpack.c.l.b16 %v1488
    %v1851 = vunpack.c.h.b16 %v1488
    %v1852 = vunpack.c.l.b16 %v1489
    %v1853 = vunpack.c.h.b16 %v1489
    %v1854 = vunpack.c.l.b16 %v1490
    %v1855 = vunpack.c.h.b16 %v1490
    %v1856 = vunpack.c.l.b16 %v1491
    %v1857 = vunpack.c.h.b16 %v1491
    %v1858 = vunpack.c.l.b16 %v1492
    %v1859 = vunpack.c.h.b16 %v1492
    %v1860 = vunpack.c.l.b16 %v1493
    %v1861 = vunpack.c.h.b16 %v1493
    %v1862 = vunpack.c.l.b16 %v1494
    %v1863 = vunpack.c.h.b16 %v1494
    %v1864 = vunpack.c.l.b16 %v1495
    %v1865 = vunpack.c.h.b16 %v1495
    %v1866 = vunpack.c.l.b16 %v1496
    %v1867 = vunpack.c.h.b16 %v1496
    %v1868 = vunpack.c.l.b16 %v1497
    %v1869 = vunpack.c.h.b16 %v1497
    %v1870 = vunpack.c.l.b16 %v1498
    %v1871 = vunpack.c.h.b16 %v1498
    %v1872 = vunpack.c.l.b16 %v1499
    %v1873 = vunpack.c.h.b16 %v1499
    %v1874 = vunpack.c.l.b16 %v1500
    %v1875 = vunpack.c.h.b16 %v1500
    %v1876 = vunpack.c.l.b16 %v1501
    %v1877 = vunpack.c.h.b16 %v1501
    %v1878 = vunpack.c.l.b16 %v1502
    %v1879 = vunpack.c.h.b16 %v1502
    %v1880 = vunpack.c.l.b16 %v1503
    %v1881 = vunpack.c.h.b16 %v1503
    %v1882 = vunpack.c.l.b16 %v1504
    %v1883 = vunpack.c.h.b16 %v1504
    %v1884 = vunpack.c.l.b16 %v1505
    %v1885 = vunpack.c.h.b16 %v1505
    %v1886 = vunpack.c.l.b16 %v1506
    %v1887 = vunpack.c.h.b16 %v1506
    %v1888 = vunpack.c.l.b16 %v1507
    %v1889 = vunpack.c.h.b16 %v1507
    %v1890 = vunpack.c.l.b16 %v1508
    %v1891 = vunpack.c.h.b16 %v1508
    %v1892 = vunpack.c.l.b16 %v1509
    %v1893 = vunpack.c.h.b16 %v1509
    %v1894 = vunpack.c.l.b16 %v1510
    %v1895 = vunpack.c.h.b16 %v1510
    %v1896 = vunpack.c.l.b16 %v1511
    %v1897 = vunpack.c.h.b16 %v1511
    %v1898 = vunpack.c.l.b16 %v1512
    %v1899 = vunpack.c.h.b16 %v1512
    %v1900 = vunpack.c.l.b16 %v1513
    %v1901 = vunpack.c.h.b16 %v1513
    %v1902 = vunpack.c.l.b16 %v1514
    %v1903 = vunpack.c.h.b16 %v1514
    %v1904 = vunpack.c.l.b16 %v1515
    %v1905 = vunpack.c.h.b16 %v1515
    %v1906 = vunpack.c.l.b16 %v1516
    %v1907 = vunpack.c.h.b16 %v1516
    %v1908 = vunpack.c.l.b16 %v1517
    %v1909 = vunpack.c.h.b16 %v1517
    %v1910 = vunpack.c.l.b16 %v1518
    %v1911 = vunpack.c.h.b16 %v1518
    %v1912 = vunpack.c.l.b16 %v1519
    %v1913 = vunpack.c.h.b16 %v1519
    %v1914 = vunpack.c.l.b16 %v1520
    %v1915 = vunpack.c.h.b16 %v1520
    %v1916 = vunpack.c.l.b16 %v1521
    %v1917 = vunpack.c.h.b16 %v1521
    %v1918 = vunpack.c.l.b16 %v1522
    %v1919 = vunpack.c.h.b16 %v1522
    %v1920 = vunpack.c.l.b16 %v1523
    %v1921 = vunpack.c.h.b16 %v1523
    %v1922 = vunpack.c.l.b16 %v1524
    %v1923 = vunpack.c.h.b16 %v1524
    %v1924 = vunpack.c.l.b16 %v1525
    %v1925 = vunpack.c.h.b16 %v1525
    %v1926 = vunpack.c.l.b16 %v1526
    %v1927 = vunpack.c.h.b16 %v1526
    %v1928 = vunpack.c.l.b16 %v1527
    %v1929 = vunpack.c.h.b16 %v1527
    %v1930 = vunpack.c.l.b16 %v1528
    %v1931 = vunpack.c.h.b16 %v1528
    %v1932 = vunpack.c.l.b16 %v1529
    %v1933 = vunpack.c.h.b16 %v1529
    %v1934 = vunpack.c.l.b16 %v1530
    %v1935 = vunpack.c.h.b16 %v1530
    %v1936 = vunpack.c.l.b16 %v1531
    %v1937 = vunpack.c.h.b16 %v1531
    %v1938 = vunpack.c.l.b16 %v1532
    %v1939 = vunpack.c.h.b16 %v1532
    %v1940 = vunpack.c.l.b16 %v1533
    %v1941 = vunpack.c.h.b16 %v1533
    %v1942 = vunpack.c.l.b16 %v1534
    %v1943 = vunpack.c.h.b16 %v1534
    %v1944 = vunpack.c.l.b16 %v1535
    %v1945 = vunpack.c.h.b16 %v1535
    %v1946 = vunpack.c.l.b16 %v1536
    %v1947 = vunpack.c.h.b16 %v1536
    %v1948 = vunpack.c.l.b16 %v1537
    %v1949 = vunpack.c.h.b16 %v1537
    %v1950 = vunpack.c.l.b16 %v1538
    %v1951 = vunpack.c.h.b16 %v1538
    %v1952 = vunpack.c.l.b16 %v1539
    %v1953 = vunpack.c.h.b16 %v1539
    %v1954 = vunpack.c.l.b16 %v1540
    %v1955 = vunpack.c.h.b16 %v1540
    %v1956 = vunpack.c.l.b16 %v1541
    %v1957 = vunpack.c.h.b16 %v1541
    %v1958 = vunpack.c.l.b16 %v1542
    %v1959 = vunpack.c.h.b16 %v1542
    %v1960 = vunpack.c.l.b16 %v1543
    %v1961 = vunpack.c.h.b16 %v1543
    %v1962 = vunpack.c.l.b16 %v1544
    %v1963 = vunpack.c.h.b16 %v1544
    %v1964 = vunpack.c.l.b16 %v1545
    %v1965 = vunpack.c.h.b16 %v1545
    %v1966 = vunpack.c.l.b16 %v1546
    %v1967 = vunpack.c.h.b16 %v1546
    %v1968 = vunpack.c.l.b16 %v1547
    %v1969 = vunpack.c.h.b16 %v1547
    %v1970 = vunpack.c.l.b16 %v1548
    %v1971 = vunpack.c.h.b16 %v1548
    %v1972 = vunpack.c.l.b16 %v1549
    %v1973 = vunpack.c.h.b16 %v1549
    %v1974 = vunpack.c.l.b16 %v1550
    %v1975 = vunpack.c.h.b16 %v1550
    %v1976 = vunpack.c.l.b16 %v1551
    %v1977 = vunpack.c.h.b16 %v1551
    %v1978 = vunpack.c.l.b16 %v1552
    %v1979 = vunpack.c.h.b16 %v1552
    %v1980 = vpack.c.b16 %v1728, %v1724
    %v1981 = vpack.c.b16 %v1729, %v1725
    %v1982 = vpack.c.b16 %v1730, %v1726
    %v1983 = vpack.c.b16 %v1731, %v1727
    %v1984 = vpack.c.b16 %v1736, %v1732
    %v1985 = vpack.c.b16 %v1737, %v1733
    %v1986 = vpack.c.b16 %v1738, %v1734
    %v1987 = vpack.c.b16 %v1739, %v1735
    %v1988 = vpack.c.b16 %v1744, %v1740
    %v1989 = vpack.c.b16 %v1745, %v1741
    %v1990 = vpack.c.b16 %v1746, %v1742
    %v1991 = vpack.c.b16 %v1747, %v1743
    %v1992 = vpack.c.b16 %v1752, %v1748
    %v1993 = vpack.c.b16 %v1753, %v1749
    %v1994 = vpack.c.b16 %v1754, %v1750
    %v1995 = vpack.c.b16 %v1755, %v1751
    %v1996 = vpack.c.b16 %v1760, %v1756
    %v1997 = vpack.c.b16 %v1761, %v1757
    %v1998 = vpack.c.b16 %v1762, %v1758
    %v1999 = vpack.c.b16 %v1763, %v1759
    %v2000 = vpack.c.b16 %v1768, %v1764
    %v2001 = vpack.c.b16 %v1769, %v1765
    %v2002 = vpack.c.b16 %v1770, %v1766
    %v2003 = vpack.c.b16 %v1771, %v1767
    %v2004 = vpack.c.b16 %v1776, %v1772
    %v2005 = vpack.c.b16 %v1777, %v1773
    %v2006 = vpack.c.b16 %v1778, %v1774
    %v2007 = vpack.c.b16 %v1779, %v1775
    %v2008 = vpack.c.b16 %v1784, %v1780
    %v2009 = vpack.c.b16 %v1785, %v1781
    %v2010 = vpack.c.b16 %v1786, %v1782
    %v2011 = vpack.c.b16 %v1787, %v1783
    %v2012 = vpack.c.b16 %v1792, %v1788
    %v2013 = vpack.c.b16 %v1793, %v1789
    %v2014 = vpack.c.b16 %v1794, %v1790
    %v2015 = vpack.c.b16 %v1795, %v1791
    %v2016 = vpack.c.b16 %v1800, %v1796
    %v2017 = vpack.c.b16 %v1801, %v1797
    %v2018 = vpack.c.b16 %v1802, %v1798
    %v2019 = vpack.c.b16 %v1803, %v1799
    %v2020 = vpack.c.b16 %v1808, %v1804
    %v2021 = vpack.c.b16 %v1809, %v1805
    %v2022 = vpack.c.b16 %v1810, %v1806
    %v2023 = vpack.c.b16 %v1811, %v1807
    %v2024 = vpack.c.b16 %v1816, %v1812
    %v2025 = vpack.c.b16 %v1817, %v1813
    %v2026 = vpack.c.b16 %v1818, %v1814
    %v2027 = vpack.c.b16 %v1819, %v1815
    %v2028 = vpack.c.b16 %v1824, %v1820
    %v2029 = vpack.c.b16 %v1825, %v1821
    %v2030 = vpack.c.b16 %v1826, %v1822
    %v2031 = vpack.c.b16 %v1827, %v1823
    %v2032 = vpack.c.b16 %v1832, %v1828
    %v2033 = vpack.c.b16 %v1833, %v1829
    %v2034 = vpack.c.b16 %v1834, %v1830
    %v2035 = vpack.c.b16 %v1835, %v1831
    %v2036 = vpack.c.b16 %v1840, %v1836
    %v2037 = vpack.c.b16 %v1841, %v1837
    %v2038 = vpack.c.b16 %v1842, %v1838
    %v2039 = vpack.c.b16 %v1843, %v1839
    %v2040 = vpack.c.b16 %v1848, %v1844
    %v2041 = vpack.c.b16 %v1849, %v1845
    %v2042 = vpack.c.b16 %v1850, %v1846
    %v2043 = vpack.c.b16 %v1851, %v1847
    %v2044 = vpack.c.b16 %v1856, %v1852
    %v2045 = vpack.c.b16 %v1857, %v1853
    %v2046 = vpack.c.b16 %v1858, %v1854
    %v2047 = vpack.c.b16 %v1859, %v1855
    %v2048 = vpack.c.b16 %v1864, %v1860
    %v2049 = vpack.c.b16 %v1865, %v1861
    %v2050 = vpack.c.b16 %v1866, %v1862
    %v2051 = vpack.c.b16 %v1867, %v1863
    %v2052 = vpack.c.b16 %v1872, %v1868
    %v2053 = vpack.c.b16 %v1873, %v1869
    %v2054 = vpack.c.b16 %v1874, %v1870
    %v2055 = vpack.c.b16 %v1875, %v1871
    %v2056 = vpack.c.b16 %v1880, %v1876
    %v2057 = vpack.c.b16 %v1881, %v1877
    %v2058 = vpack.c.b16 %v1882, %v1878
    %v2059 = vpack.c.b16 %v1883, %v1879
    %v2060 = vpack.c.b16 %v1888, %v1884
    %v2061 = vpack.c.b16 %v1889, %v1885
    %v2062 = vpack.c.b16 %v1890, %v1886
    %v2063 = vpack.c.b16 %v1891, %v1887
    %v2064 = vpack.c.b16 %v1896, %v1892
    %v2065 = vpack.c.b16 %v1897, %v1893
    %v2066 = vpack.c.b16 %v1898, %v1894
    %v2067 = vpack.c.b16 %v1899, %v1895
    %v2068 = vpack.c.b16 %v1904, %v1900
    %v2069 = vpack.c.b16 %v1905, %v1901
    %v2070 = vpack.c.b16 %v1906, %v1902
    %v2071 = vpack.c.b16 %v1907, %v1903
    %v2072 = vpack.c.b16 %v1912, %v1908
    %v2073 = vpack.c.b16 %v1913, %v1909
    %v2074 = vpack.c.b16 %v1914, %v1910
    %v2075 = vpack.c.b16 %v1915, %v1911
    %v2076 = vpack.c.b16 %v1920, %v1916
    %v2077 = vpack.c.b16 %v1921, %v1917
    %v2078 = vpack.c.b16 %v1922, %v1918
    %v2079 = vpack.c.b16 %v1923, %v1919
    %v2080 = vpack.c.b16 %v1928, %v1924
    %v2081 = vpack.c.b16 %v1929, %v1925
    %v2082 = vpack.c.b16 %v1930, %v1926
    %v2083 = vpack.c.b16 %v1931, %v1927
    %v2084 = vpack.c.b16 %v1936, %v1932
    %v2085 = vpack.c.b16 %v1937, %v1933
    %v2086 = vpack.c.b16 %v1938, %v1934
    %v2087 = vpack.c.b16 %v1939, %v1935
    %v2088 = vpack.c.b16 %v1944, %v1940
    %v2089 = vpack.c.b16 %v1945, %v1941
    %v2090 = vpack.c.b16 %v1946, %v1942
    %v2091 = vpack.c.b16 %v1947, %v1943
    %v2092 = vpack.c.b16 %v1952, %v1948
    %v2093 = vpack.c.b16 %v1953, %v1949
    %v2094 = vpack.c.b16 %v1954, %v1950
    %v2095 = vpack.c.b16 %v1955, %v1951
    %v2096 = vpack.c.b16 %v1960, %v1956
    %v2097 = vpack.c.b16 %v1961, %v1957
    %v2098 = vpack.c.b16 %v1962, %v1958
    %v2099 = vpack.c.b16 %v1963, %v1959
    %v2100 = vpack.c.b16 %v1968, %v1964
    %v2101 = vpack.c.b16 %v1969, %v1965
    %v2102 = vpack.c.b16 %v1970, %v1966
    %v2103 = vpack.c.b16 %v1971, %v1967
    %v2104 = vpack.c.b16 %v1976, %v1972
    %v2105 = vpack.c.b16 %v1977, %v1973
    %v2106 = vpack.c.b16 %v1978, %v1974
    %v2107 = vpack.c.b16 %v1979, %v1975
    %2236 = vmatprep.subr.bf16.mxu0 %v2009
    %2237 = vmatpush1.bf16.msra.mxu0 %v2008
    %2238 = vmatprep.subr.bf16.mxu0 %v2005
    %2239 = vmatpush1.bf16.msra.mxu0 %v2004
    %2240 = vmatprep.subr.bf16.mxu0 %v2001
    %2241 = vmatpush1.bf16.msra.mxu0 %v2000
    %2242 = vmatprep.subr.bf16.mxu0 %v1997
    %2243 = vmatpush1.bf16.msra.mxu0 %v1996
    %2244 = vmatprep.subr.bf16.mxu0 %v1993
    %2245 = vmatpush1.bf16.msra.mxu0 %v1992
    %2246 = vmatprep.subr.bf16.mxu0 %v1989
    %2247 = vmatpush1.bf16.msra.mxu0 %v1988
    %2248 = vmatprep.subr.bf16.mxu0 %v1985
    %2249 = vmatpush1.bf16.msra.mxu0 %v1984
    %2250 = vmatprep.subr.bf16.mxu0 %v1981
    %2251 = vmatpush1.bf16.msra.mxu0 %v1980
    %2252 = vmatprep.subr.bf16.mxu0 %v2041
    %2253 = vmatpush2.bf16.msra.mxu0 %v2040
    %2254 = vmatprep.subr.bf16.mxu0 %v2037
    %2255 = vmatpush2.bf16.msra.mxu0 %v2036
    %2256 = vmatprep.subr.bf16.mxu0 %v2033
    %2257 = vmatpush2.bf16.msra.mxu0 %v2032
    %2258 = vmatprep.subr.bf16.mxu0 %v2029
    %2259 = vmatpush2.bf16.msra.mxu0 %v2028
    %2260 = vmatprep.subr.bf16.mxu0 %v2025
    %2261 = vmatpush2.bf16.msra.mxu0 %v2024
    %2262 = vmatprep.subr.bf16.mxu0 %v2021
    %2263 = vmatpush2.bf16.msra.mxu0 %v2020
    %2264 = vmatprep.subr.bf16.mxu0 %v2017
    %2265 = vmatpush2.bf16.msra.mxu0 %v2016
    %2266 = vmatprep.subr.bf16.mxu0 %v2013
    %2267 = vmatpush2.bf16.msra.mxu0 %v2012
    %2268 = vmatprep.mubr.bf16.mxu0 %v1556
    %2269 = vmatmul.mubr.bf16.gmra.mxu0 %v1555
    %v2270 = vpop.f32.mrf.mxu0
    %v2271 = vadd.f32 %v1583, %v2270
    %v2272 = vpop.f32.mrf.mxu0
    %v2273 = vadd.f32 %v1587, %v2272
    %v2274 = vpop.f32.mrf.mxu0
    %v2275 = vpop.f32.mrf.mxu0
    %2276 = vdwg.mxu0
    %2277 = vmatprep.subr.bf16.mxu0 %v2073
    %2278 = vmatpush1.bf16.msra.mxu0 %v2072
    %2279 = vmatprep.subr.bf16.mxu0 %v2069
    %2280 = vmatpush1.bf16.msra.mxu0 %v2068
    %2281 = vmatprep.subr.bf16.mxu0 %v2065
    %2282 = vmatpush1.bf16.msra.mxu0 %v2064
    %2283 = vmatprep.subr.bf16.mxu0 %v2061
    %2284 = vmatpush1.bf16.msra.mxu0 %v2060
    %2285 = vmatprep.subr.bf16.mxu0 %v2057
    %2286 = vmatpush1.bf16.msra.mxu0 %v2056
    %2287 = vmatprep.subr.bf16.mxu0 %v2053
    %2288 = vmatpush1.bf16.msra.mxu0 %v2052
    %2289 = vmatprep.subr.bf16.mxu0 %v2049
    %2290 = vmatpush1.bf16.msra.mxu0 %v2048
    %2291 = vmatprep.subr.bf16.mxu0 %v2045
    %2292 = vmatpush1.bf16.msra.mxu0 %v2044
    %2293 = vmatprep.subr.bf16.mxu0 %v2105
    %2294 = vmatpush2.bf16.msra.mxu0 %v2104
    %2295 = vmatprep.subr.bf16.mxu0 %v2101
    %2296 = vmatpush2.bf16.msra.mxu0 %v2100
    %2297 = vmatprep.subr.bf16.mxu0 %v2097
    %2298 = vmatpush2.bf16.msra.mxu0 %v2096
    %2299 = vmatprep.subr.bf16.mxu0 %v2093
    %2300 = vmatpush2.bf16.msra.mxu0 %v2092
    %2301 = vmatprep.subr.bf16.mxu0 %v2089
    %2302 = vmatpush2.bf16.msra.mxu0 %v2088
    %2303 = vmatprep.subr.bf16.mxu0 %v2085
    %2304 = vmatpush2.bf16.msra.mxu0 %v2084
    %2305 = vmatprep.subr.bf16.mxu0 %v2081
    %2306 = vmatpush2.bf16.msra.mxu0 %v2080
    %2307 = vmatprep.subr.bf16.mxu0 %v2077
    %2308 = vmatpush2.bf16.msra.mxu0 %v2076
    %2309 = vmatprep.mubr.bf16.mxu0 %v1558
    %2310 = vmatmul.mubr.bf16.gmra.mxu0 %v1557
    %v2311 = vpop.f32.mrf.mxu0
    %v2312 = vadd.f32 %v2271, %v2311
    %v2313 = vpop.f32.mrf.mxu0
    %v2314 = vadd.f32 %v2273, %v2313
    %v2315 = vpop.f32.mrf.mxu0
    %v2316 = vpop.f32.mrf.mxu0
    %2317 = vdwg.mxu0
    %2318 = vmatprep.subr.bf16.mxu0 %v2011
    %2319 = vmatpush1.bf16.msra.mxu0 %v2010
    %2320 = vmatprep.subr.bf16.mxu0 %v2007
    %2321 = vmatpush1.bf16.msra.mxu0 %v2006
    %2322 = vmatprep.subr.bf16.mxu0 %v2003
    %2323 = vmatpush1.bf16.msra.mxu0 %v2002
    %2324 = vmatprep.subr.bf16.mxu0 %v1999
    %2325 = vmatpush1.bf16.msra.mxu0 %v1998
    %2326 = vmatprep.subr.bf16.mxu0 %v1995
    %2327 = vmatpush1.bf16.msra.mxu0 %v1994
    %2328 = vmatprep.subr.bf16.mxu0 %v1991
    %2329 = vmatpush1.bf16.msra.mxu0 %v1990
    %2330 = vmatprep.subr.bf16.mxu0 %v1987
    %2331 = vmatpush1.bf16.msra.mxu0 %v1986
    %2332 = vmatprep.subr.bf16.mxu0 %v1983
    %2333 = vmatpush1.bf16.msra.mxu0 %v1982
    %2334 = vmatprep.subr.bf16.mxu0 %v2043
    %2335 = vmatpush2.bf16.msra.mxu0 %v2042
    %2336 = vmatprep.subr.bf16.mxu0 %v2039
    %2337 = vmatpush2.bf16.msra.mxu0 %v2038
    %2338 = vmatprep.subr.bf16.mxu0 %v2035
    %2339 = vmatpush2.bf16.msra.mxu0 %v2034
    %2340 = vmatprep.subr.bf16.mxu0 %v2031
    %2341 = vmatpush2.bf16.msra.mxu0 %v2030
    %2342 = vmatprep.subr.bf16.mxu0 %v2027
    %2343 = vmatpush2.bf16.msra.mxu0 %v2026
    %2344 = vmatprep.subr.bf16.mxu0 %v2023
    %2345 = vmatpush2.bf16.msra.mxu0 %v2022
    %2346 = vmatprep.subr.bf16.mxu0 %v2019
    %2347 = vmatpush2.bf16.msra.mxu0 %v2018
    %2348 = vmatprep.subr.bf16.mxu0 %v2015
    %2349 = vmatpush2.bf16.msra.mxu0 %v2014
    %2350 = vmatprep.mubr.bf16.mxu0 %v1556
    %2351 = vmatmul.mubr.bf16.gmra.mxu0 %v1555
    %v2352 = vpop.f32.mrf.mxu0
    %v2353 = vadd.f32 %v1591, %v2352
    %v2354 = vpop.f32.mrf.mxu0
    %v2355 = vadd.f32 %v1595, %v2354
    %v2356 = vpop.f32.mrf.mxu0
    %v2357 = vpop.f32.mrf.mxu0
    %2358 = vdwg.mxu0
    %2359 = vmatprep.subr.bf16.mxu0 %v2075
    %2360 = vmatpush1.bf16.msra.mxu0 %v2074
    %2361 = vmatprep.subr.bf16.mxu0 %v2071
    %2362 = vmatpush1.bf16.msra.mxu0 %v2070
    %2363 = vmatprep.subr.bf16.mxu0 %v2067
    %2364 = vmatpush1.bf16.msra.mxu0 %v2066
    %2365 = vmatprep.subr.bf16.mxu0 %v2063
    %2366 = vmatpush1.bf16.msra.mxu0 %v2062
    %2367 = vmatprep.subr.bf16.mxu0 %v2059
    %2368 = vmatpush1.bf16.msra.mxu0 %v2058
    %2369 = vmatprep.subr.bf16.mxu0 %v2055
    %2370 = vmatpush1.bf16.msra.mxu0 %v2054
    %2371 = vmatprep.subr.bf16.mxu0 %v2051
    %2372 = vmatpush1.bf16.msra.mxu0 %v2050
    %2373 = vmatprep.subr.bf16.mxu0 %v2047
    %2374 = vmatpush1.bf16.msra.mxu0 %v2046
    %2375 = vmatprep.subr.bf16.mxu0 %v2107
    %2376 = vmatpush2.bf16.msra.mxu0 %v2106
    %2377 = vmatprep.subr.bf16.mxu0 %v2103
    %2378 = vmatpush2.bf16.msra.mxu0 %v2102
    %2379 = vmatprep.subr.bf16.mxu0 %v2099
    %2380 = vmatpush2.bf16.msra.mxu0 %v2098
    %2381 = vmatprep.subr.bf16.mxu0 %v2095
    %2382 = vmatpush2.bf16.msra.mxu0 %v2094
    %2383 = vmatprep.subr.bf16.mxu0 %v2091
    %2384 = vmatpush2.bf16.msra.mxu0 %v2090
    %2385 = vmatprep.subr.bf16.mxu0 %v2087
    %2386 = vmatpush2.bf16.msra.mxu0 %v2086
    %2387 = vmatprep.subr.bf16.mxu0 %v2083
    %2388 = vmatpush2.bf16.msra.mxu0 %v2082
    %2389 = vmatprep.subr.bf16.mxu0 %v2079
    %2390 = vmatpush2.bf16.msra.mxu0 %v2078
    %2391 = vmatprep.mubr.bf16.mxu0 %v1558
    %2392 = vmatmul.mubr.bf16.gmra.mxu0 %v1557
    %v2393 = vpop.f32.mrf.mxu0
    %v2394 = vadd.f32 %v2353, %v2393
    %v2395 = vpop.f32.mrf.mxu0
    %v2396 = vadd.f32 %v2355, %v2395
    %v2397 = vpop.f32.mrf.mxu0
    %v2398 = vpop.f32.mrf.mxu0
    %2399 = vdwg.mxu0
    %vm2400 = vcmp.gt.f32.partialorder %v2312, 0.0
    %vm2401 = vcmp.gt.f32.partialorder %v2314, 0.0
    %vm2402 = vcmp.gt.f32.partialorder %v2394, 0.0
    %vm2403 = vcmp.gt.f32.partialorder %v2396, 0.0
    %v2404 = vlaneseq
    %v2405 = vshrl.u32 %v2404, 7
    %v2406 = vsub.s32 1, %v2405
    %v2407 = vrot.slane %v1554, %v2406
    %v2408 = vlaneseq
    %v2409 = vshrl.u32 %v2408, 7
    %v2410 = vsub.s32 3, %v2409
    %v2411 = vrot.slane %v1554, %v2410
    %v2412 = vlaneseq
    %v2413 = vshrl.u32 %v2412, 7
    %v2414 = vsub.s32 5, %v2413
    %v2415 = vrot.slane %v1554, %v2414
    %v2416 = vlaneseq
    %v2417 = vshrl.u32 %v2416, 7
    %v2418 = vsub.s32 7, %v2417
    %v2419 = vrot.slane %v1554, %v2418
    %v2424 = vlaneseq
    %v2425 = vshrl.u32 %v2424, 7
    %v2426 = vsub.s32 1, %v2425
    %v2427 = vrot.slane %v2407, %v2426
    %v2428 = vlaneseq
    %v2429 = vshrl.u32 %v2428, 7
    %v2430 = vsub.s32 1, %v2429
    %v2431 = vrot.slane %v2411, %v2430
    %v2432 = vlaneseq
    %v2433 = vshrl.u32 %v2432, 7
    %v2434 = vsub.s32 1, %v2433
    %v2435 = vrot.slane %v2415, %v2434
    %v2436 = vlaneseq
    %v2437 = vshrl.u32 %v2436, 7
    %v2438 = vsub.s32 1, %v2437
    %v2439 = vrot.slane %v2419, %v2438
    %v2440 = vmul.f32 %v2427, %v2312
    %v2441 = vmul.f32 %v2431, %v2314
    %v2442 = vmul.f32 %v2435, %v2394
    %v2443 = vmul.f32 %v2439, %v2396
    %v2444 = vsel %vm2400, %v2312, %v2440
    %v2445 = vsel %vm2401, %v2314, %v2441
    %v2446 = vsel %vm2402, %v2394, %v2442
    %v2447 = vsel %vm2403, %v2396, %v2443
    %v2448 = vadd.f32 %v1420, %v2444
    %v2449 = vadd.f32 %v1421, %v2445
    %v2450 = vadd.f32 %v1422, %v2446
    %v2451 = vadd.f32 %v1423, %v2447
    %s2452 = scalar_lea.vmem [#allocation7], 2048
    %v2453 = vld [vmem:[%s2452] sm:$0xff]
    %v2454 = vld [vmem:[%s2452 + $0x8] sm:$0xff]
    %v2455 = vld [vmem:[%s2452 + $0x10] sm:$0xff]
    %v2456 = vld [vmem:[%s2452 + $0x18] sm:$0xff]
    %v2457 = vld [vmem:[%s2452 + $0x20] sm:$0xff]
    %v2458 = vld [vmem:[%s2452 + $0x28] sm:$0xff]
    %v2459 = vld [vmem:[%s2452 + $0x30] sm:$0xff]
    %v2460 = vld [vmem:[%s2452 + $0x38] sm:$0xff]
    %v2461 = vld [vmem:[%s2452 + $0x40] sm:$0xff]
    %v2462 = vld [vmem:[%s2452 + $0x48] sm:$0xff]
    %v2463 = vld [vmem:[%s2452 + $0x50] sm:$0xff]
    %v2464 = vld [vmem:[%s2452 + $0x58] sm:$0xff]
    %v2465 = vld [vmem:[%s2452 + $0x60] sm:$0xff]
    %v2466 = vld [vmem:[%s2452 + $0x68] sm:$0xff]
    %v2467 = vld [vmem:[%s2452 + $0x70] sm:$0xff]
    %v2468 = vld [vmem:[%s2452 + $0x78] sm:$0xff]
    %v2469 = vld [vmem:[%s2452 + $0x80] sm:$0xff]
    %v2470 = vld [vmem:[%s2452 + $0x88] sm:$0xff]
    %v2471 = vld [vmem:[%s2452 + $0x90] sm:$0xff]
    %v2472 = vld [vmem:[%s2452 + $0x98] sm:$0xff]
    %v2473 = vld [vmem:[%s2452 + $0xa0] sm:$0xff]
    %v2474 = vld [vmem:[%s2452 + $0xa8] sm:$0xff]
    %v2475 = vld [vmem:[%s2452 + $0xb0] sm:$0xff]
    %v2476 = vld [vmem:[%s2452 + $0xb8] sm:$0xff]
    %v2477 = vld [vmem:[%s2452 + $0xc0] sm:$0xff]
    %v2478 = vld [vmem:[%s2452 + $0xc8] sm:$0xff]
    %v2479 = vld [vmem:[%s2452 + $0xd0] sm:$0xff]
    %v2480 = vld [vmem:[%s2452 + $0xd8] sm:$0xff]
    %v2481 = vld [vmem:[%s2452 + $0xe0] sm:$0xff]
    %v2482 = vld [vmem:[%s2452 + $0xe8] sm:$0xff]
    %v2483 = vld [vmem:[%s2452 + $0xf0] sm:$0xff]
    %v2484 = vld [vmem:[%s2452 + $0xf8] sm:$0xff]
    %v2485 = vld [vmem:[%s2452 + $0x100] sm:$0xff]
    %v2486 = vld [vmem:[%s2452 + $0x108] sm:$0xff]
    %v2487 = vld [vmem:[%s2452 + $0x110] sm:$0xff]
    %v2488 = vld [vmem:[%s2452 + $0x118] sm:$0xff]
    %v2489 = vld [vmem:[%s2452 + $0x120] sm:$0xff]
    %v2490 = vld [vmem:[%s2452 + $0x128] sm:$0xff]
    %v2491 = vld [vmem:[%s2452 + $0x130] sm:$0xff]
    %v2492 = vld [vmem:[%s2452 + $0x138] sm:$0xff]
    %v2493 = vld [vmem:[%s2452 + $0x140] sm:$0xff]
    %v2494 = vld [vmem:[%s2452 + $0x148] sm:$0xff]
    %v2495 = vld [vmem:[%s2452 + $0x150] sm:$0xff]
    %v2496 = vld [vmem:[%s2452 + $0x158] sm:$0xff]
    %v2497 = vld [vmem:[%s2452 + $0x160] sm:$0xff]
    %v2498 = vld [vmem:[%s2452 + $0x168] sm:$0xff]
    %v2499 = vld [vmem:[%s2452 + $0x170] sm:$0xff]
    %v2500 = vld [vmem:[%s2452 + $0x178] sm:$0xff]
    %v2501 = vld [vmem:[%s2452 + $0x180] sm:$0xff]
    %v2502 = vld [vmem:[%s2452 + $0x188] sm:$0xff]
    %v2503 = vld [vmem:[%s2452 + $0x190] sm:$0xff]
    %v2504 = vld [vmem:[%s2452 + $0x198] sm:$0xff]
    %v2505 = vld [vmem:[%s2452 + $0x1a0] sm:$0xff]
    %v2506 = vld [vmem:[%s2452 + $0x1a8] sm:$0xff]
    %v2507 = vld [vmem:[%s2452 + $0x1b0] sm:$0xff]
    %v2508 = vld [vmem:[%s2452 + $0x1b8] sm:$0xff]
    %v2509 = vld [vmem:[%s2452 + $0x1c0] sm:$0xff]
    %v2510 = vld [vmem:[%s2452 + $0x1c8] sm:$0xff]
    %v2511 = vld [vmem:[%s2452 + $0x1d0] sm:$0xff]
    %v2512 = vld [vmem:[%s2452 + $0x1d8] sm:$0xff]
    %v2513 = vld [vmem:[%s2452 + $0x1e0] sm:$0xff]
    %v2514 = vld [vmem:[%s2452 + $0x1e8] sm:$0xff]
    %v2515 = vld [vmem:[%s2452 + $0x1f0] sm:$0xff]
    %v2516 = vld [vmem:[%s2452 + $0x1f8] sm:$0xff]
    %v2517 = vld [vmem:[%s2452 + $0x200] sm:$0xff]
    %v2518 = vld [vmem:[%s2452 + $0x208] sm:$0xff]
    %v2519 = vld [vmem:[%s2452 + $0x210] sm:$0xff]
    %v2520 = vld [vmem:[%s2452 + $0x218] sm:$0xff]
    %v2521 = vld [vmem:[%s2452 + $0x220] sm:$0xff]
    %v2522 = vld [vmem:[%s2452 + $0x228] sm:$0xff]
    %v2523 = vld [vmem:[%s2452 + $0x230] sm:$0xff]
    %v2524 = vld [vmem:[%s2452 + $0x238] sm:$0xff]
    %v2525 = vld [vmem:[%s2452 + $0x240] sm:$0xff]
    %v2526 = vld [vmem:[%s2452 + $0x248] sm:$0xff]
    %v2527 = vld [vmem:[%s2452 + $0x250] sm:$0xff]
    %v2528 = vld [vmem:[%s2452 + $0x258] sm:$0xff]
    %v2529 = vld [vmem:[%s2452 + $0x260] sm:$0xff]
    %v2530 = vld [vmem:[%s2452 + $0x268] sm:$0xff]
    %v2531 = vld [vmem:[%s2452 + $0x270] sm:$0xff]
    %v2532 = vld [vmem:[%s2452 + $0x278] sm:$0xff]
    %v2533 = vld [vmem:[%s2452 + $0x280] sm:$0xff]
    %v2534 = vld [vmem:[%s2452 + $0x288] sm:$0xff]
    %v2535 = vld [vmem:[%s2452 + $0x290] sm:$0xff]
    %v2536 = vld [vmem:[%s2452 + $0x298] sm:$0xff]
    %v2537 = vld [vmem:[%s2452 + $0x2a0] sm:$0xff]
    %v2538 = vld [vmem:[%s2452 + $0x2a8] sm:$0xff]
    %v2539 = vld [vmem:[%s2452 + $0x2b0] sm:$0xff]
    %v2540 = vld [vmem:[%s2452 + $0x2b8] sm:$0xff]
    %v2541 = vld [vmem:[%s2452 + $0x2c0] sm:$0xff]
    %v2542 = vld [vmem:[%s2452 + $0x2c8] sm:$0xff]
    %v2543 = vld [vmem:[%s2452 + $0x2d0] sm:$0xff]
    %v2544 = vld [vmem:[%s2452 + $0x2d8] sm:$0xff]
    %v2545 = vld [vmem:[%s2452 + $0x2e0] sm:$0xff]
    %v2546 = vld [vmem:[%s2452 + $0x2e8] sm:$0xff]
    %v2547 = vld [vmem:[%s2452 + $0x2f0] sm:$0xff]
    %v2548 = vld [vmem:[%s2452 + $0x2f8] sm:$0xff]
    %v2549 = vld [vmem:[%s2452 + $0x300] sm:$0xff]
    %v2550 = vld [vmem:[%s2452 + $0x308] sm:$0xff]
    %v2551 = vld [vmem:[%s2452 + $0x310] sm:$0xff]
    %v2552 = vld [vmem:[%s2452 + $0x318] sm:$0xff]
    %v2553 = vld [vmem:[%s2452 + $0x320] sm:$0xff]
    %v2554 = vld [vmem:[%s2452 + $0x328] sm:$0xff]
    %v2555 = vld [vmem:[%s2452 + $0x330] sm:$0xff]
    %v2556 = vld [vmem:[%s2452 + $0x338] sm:$0xff]
    %v2557 = vld [vmem:[%s2452 + $0x340] sm:$0xff]
    %v2558 = vld [vmem:[%s2452 + $0x348] sm:$0xff]
    %v2559 = vld [vmem:[%s2452 + $0x350] sm:$0xff]
    %v2560 = vld [vmem:[%s2452 + $0x358] sm:$0xff]
    %v2561 = vld [vmem:[%s2452 + $0x360] sm:$0xff]
    %v2562 = vld [vmem:[%s2452 + $0x368] sm:$0xff]
    %v2563 = vld [vmem:[%s2452 + $0x370] sm:$0xff]
    %v2564 = vld [vmem:[%s2452 + $0x378] sm:$0xff]
    %v2565 = vld [vmem:[%s2452 + $0x380] sm:$0xff]
    %v2566 = vld [vmem:[%s2452 + $0x388] sm:$0xff]
    %v2567 = vld [vmem:[%s2452 + $0x390] sm:$0xff]
    %v2568 = vld [vmem:[%s2452 + $0x398] sm:$0xff]
    %v2569 = vld [vmem:[%s2452 + $0x3a0] sm:$0xff]
    %v2570 = vld [vmem:[%s2452 + $0x3a8] sm:$0xff]
    %v2571 = vld [vmem:[%s2452 + $0x3b0] sm:$0xff]
    %v2572 = vld [vmem:[%s2452 + $0x3b8] sm:$0xff]
    %v2573 = vld [vmem:[%s2452 + $0x3c0] sm:$0xff]
    %v2574 = vld [vmem:[%s2452 + $0x3c8] sm:$0xff]
    %v2575 = vld [vmem:[%s2452 + $0x3d0] sm:$0xff]
    %v2576 = vld [vmem:[%s2452 + $0x3d8] sm:$0xff]
    %v2577 = vld [vmem:[%s2452 + $0x3e0] sm:$0xff]
    %v2578 = vld [vmem:[%s2452 + $0x3e8] sm:$0xff]
    %v2579 = vld [vmem:[%s2452 + $0x3f0] sm:$0xff]
    %v2580 = vld [vmem:[%s2452 + $0x3f8] sm:$0xff]
    %s2581 = scalar_lea.vmem [#allocation8], 16
    %v2582 = vld [vmem:[%s2581] sm:$0xff]
    %v2583 = vpack.c.bf16 %v2448, %v2448
    %v2584 = vpack.c.bf16 %v2449, %v2449
    %v2585 = vpack.c.bf16 %v2450, %v2450
    %v2586 = vpack.c.bf16 %v2451, %v2451
    %v2588 = vlaneseq
    %v2589 = vshrl.u32 %v2588, 7
    %v2590 = vsub.s32 0, %v2589
    %v2591 = vrot.slane %v2582, %v2590
    %v2592 = vlaneseq
    %v2593 = vshrl.u32 %v2592, 7
    %v2594 = vsub.s32 2, %v2593
    %v2595 = vrot.slane %v2582, %v2594
    %v2596 = vlaneseq
    %v2597 = vshrl.u32 %v2596, 7
    %v2598 = vsub.s32 4, %v2597
    %v2599 = vrot.slane %v2582, %v2598
    %v2600 = vlaneseq
    %v2601 = vshrl.u32 %v2600, 7
    %v2602 = vsub.s32 6, %v2601
    %v2603 = vrot.slane %v2582, %v2602
    %v2608 = vlaneseq
    %v2609 = vshrl.u32 %v2608, 7
    %v2610 = vsub.s32 0, %v2609
    %v2611 = vrot.slane %v2591, %v2610
    %v2612 = vlaneseq
    %v2613 = vshrl.u32 %v2612, 7
    %v2614 = vsub.s32 0, %v2613
    %v2615 = vrot.slane %v2595, %v2614
    %v2616 = vlaneseq
    %v2617 = vshrl.u32 %v2616, 7
    %v2618 = vsub.s32 0, %v2617
    %v2619 = vrot.slane %v2599, %v2618
    %v2620 = vlaneseq
    %v2621 = vshrl.u32 %v2620, 7
    %v2622 = vsub.s32 0, %v2621
    %v2623 = vrot.slane %v2603, %v2622
    %v2752 = vunpack.c.l.b16 %v2453
    %v2753 = vunpack.c.h.b16 %v2453
    %v2754 = vunpack.c.l.b16 %v2454
    %v2755 = vunpack.c.h.b16 %v2454
    %v2756 = vunpack.c.l.b16 %v2455
    %v2757 = vunpack.c.h.b16 %v2455
    %v2758 = vunpack.c.l.b16 %v2456
    %v2759 = vunpack.c.h.b16 %v2456
    %v2760 = vunpack.c.l.b16 %v2457
    %v2761 = vunpack.c.h.b16 %v2457
    %v2762 = vunpack.c.l.b16 %v2458
    %v2763 = vunpack.c.h.b16 %v2458
    %v2764 = vunpack.c.l.b16 %v2459
    %v2765 = vunpack.c.h.b16 %v2459
    %v2766 = vunpack.c.l.b16 %v2460
    %v2767 = vunpack.c.h.b16 %v2460
    %v2768 = vunpack.c.l.b16 %v2461
    %v2769 = vunpack.c.h.b16 %v2461
    %v2770 = vunpack.c.l.b16 %v2462
    %v2771 = vunpack.c.h.b16 %v2462
    %v2772 = vunpack.c.l.b16 %v2463
    %v2773 = vunpack.c.h.b16 %v2463
    %v2774 = vunpack.c.l.b16 %v2464
    %v2775 = vunpack.c.h.b16 %v2464
    %v2776 = vunpack.c.l.b16 %v2465
    %v2777 = vunpack.c.h.b16 %v2465
    %v2778 = vunpack.c.l.b16 %v2466
    %v2779 = vunpack.c.h.b16 %v2466
    %v2780 = vunpack.c.l.b16 %v2467
    %v2781 = vunpack.c.h.b16 %v2467
    %v2782 = vunpack.c.l.b16 %v2468
    %v2783 = vunpack.c.h.b16 %v2468
    %v2784 = vunpack.c.l.b16 %v2469
    %v2785 = vunpack.c.h.b16 %v2469
    %v2786 = vunpack.c.l.b16 %v2470
    %v2787 = vunpack.c.h.b16 %v2470
    %v2788 = vunpack.c.l.b16 %v2471
    %v2789 = vunpack.c.h.b16 %v2471
    %v2790 = vunpack.c.l.b16 %v2472
    %v2791 = vunpack.c.h.b16 %v2472
    %v2792 = vunpack.c.l.b16 %v2473
    %v2793 = vunpack.c.h.b16 %v2473
    %v2794 = vunpack.c.l.b16 %v2474
    %v2795 = vunpack.c.h.b16 %v2474
    %v2796 = vunpack.c.l.b16 %v2475
    %v2797 = vunpack.c.h.b16 %v2475
    %v2798 = vunpack.c.l.b16 %v2476
    %v2799 = vunpack.c.h.b16 %v2476
    %v2800 = vunpack.c.l.b16 %v2477
    %v2801 = vunpack.c.h.b16 %v2477
    %v2802 = vunpack.c.l.b16 %v2478
    %v2803 = vunpack.c.h.b16 %v2478
    %v2804 = vunpack.c.l.b16 %v2479
    %v2805 = vunpack.c.h.b16 %v2479
    %v2806 = vunpack.c.l.b16 %v2480
    %v2807 = vunpack.c.h.b16 %v2480
    %v2808 = vunpack.c.l.b16 %v2481
    %v2809 = vunpack.c.h.b16 %v2481
    %v2810 = vunpack.c.l.b16 %v2482
    %v2811 = vunpack.c.h.b16 %v2482
    %v2812 = vunpack.c.l.b16 %v2483
    %v2813 = vunpack.c.h.b16 %v2483
    %v2814 = vunpack.c.l.b16 %v2484
    %v2815 = vunpack.c.h.b16 %v2484
    %v2816 = vunpack.c.l.b16 %v2485
    %v2817 = vunpack.c.h.b16 %v2485
    %v2818 = vunpack.c.l.b16 %v2486
    %v2819 = vunpack.c.h.b16 %v2486
    %v2820 = vunpack.c.l.b16 %v2487
    %v2821 = vunpack.c.h.b16 %v2487
    %v2822 = vunpack.c.l.b16 %v2488
    %v2823 = vunpack.c.h.b16 %v2488
    %v2824 = vunpack.c.l.b16 %v2489
    %v2825 = vunpack.c.h.b16 %v2489
    %v2826 = vunpack.c.l.b16 %v2490
    %v2827 = vunpack.c.h.b16 %v2490
    %v2828 = vunpack.c.l.b16 %v2491
    %v2829 = vunpack.c.h.b16 %v2491
    %v2830 = vunpack.c.l.b16 %v2492
    %v2831 = vunpack.c.h.b16 %v2492
    %v2832 = vunpack.c.l.b16 %v2493
    %v2833 = vunpack.c.h.b16 %v2493
    %v2834 = vunpack.c.l.b16 %v2494
    %v2835 = vunpack.c.h.b16 %v2494
    %v2836 = vunpack.c.l.b16 %v2495
    %v2837 = vunpack.c.h.b16 %v2495
    %v2838 = vunpack.c.l.b16 %v2496
    %v2839 = vunpack.c.h.b16 %v2496
    %v2840 = vunpack.c.l.b16 %v2497
    %v2841 = vunpack.c.h.b16 %v2497
    %v2842 = vunpack.c.l.b16 %v2498
    %v2843 = vunpack.c.h.b16 %v2498
    %v2844 = vunpack.c.l.b16 %v2499
    %v2845 = vunpack.c.h.b16 %v2499
    %v2846 = vunpack.c.l.b16 %v2500
    %v2847 = vunpack.c.h.b16 %v2500
    %v2848 = vunpack.c.l.b16 %v2501
    %v2849 = vunpack.c.h.b16 %v2501
    %v2850 = vunpack.c.l.b16 %v2502
    %v2851 = vunpack.c.h.b16 %v2502
    %v2852 = vunpack.c.l.b16 %v2503
    %v2853 = vunpack.c.h.b16 %v2503
    %v2854 = vunpack.c.l.b16 %v2504
    %v2855 = vunpack.c.h.b16 %v2504
    %v2856 = vunpack.c.l.b16 %v2505
    %v2857 = vunpack.c.h.b16 %v2505
    %v2858 = vunpack.c.l.b16 %v2506
    %v2859 = vunpack.c.h.b16 %v2506
    %v2860 = vunpack.c.l.b16 %v2507
    %v2861 = vunpack.c.h.b16 %v2507
    %v2862 = vunpack.c.l.b16 %v2508
    %v2863 = vunpack.c.h.b16 %v2508
    %v2864 = vunpack.c.l.b16 %v2509
    %v2865 = vunpack.c.h.b16 %v2509
    %v2866 = vunpack.c.l.b16 %v2510
    %v2867 = vunpack.c.h.b16 %v2510
    %v2868 = vunpack.c.l.b16 %v2511
    %v2869 = vunpack.c.h.b16 %v2511
    %v2870 = vunpack.c.l.b16 %v2512
    %v2871 = vunpack.c.h.b16 %v2512
    %v2872 = vunpack.c.l.b16 %v2513
    %v2873 = vunpack.c.h.b16 %v2513
    %v2874 = vunpack.c.l.b16 %v2514
    %v2875 = vunpack.c.h.b16 %v2514
    %v2876 = vunpack.c.l.b16 %v2515
    %v2877 = vunpack.c.h.b16 %v2515
    %v2878 = vunpack.c.l.b16 %v2516
    %v2879 = vunpack.c.h.b16 %v2516
    %v2880 = vunpack.c.l.b16 %v2517
    %v2881 = vunpack.c.h.b16 %v2517
    %v2882 = vunpack.c.l.b16 %v2518
    %v2883 = vunpack.c.h.b16 %v2518
    %v2884 = vunpack.c.l.b16 %v2519
    %v2885 = vunpack.c.h.b16 %v2519
    %v2886 = vunpack.c.l.b16 %v2520
    %v2887 = vunpack.c.h.b16 %v2520
    %v2888 = vunpack.c.l.b16 %v2521
    %v2889 = vunpack.c.h.b16 %v2521
    %v2890 = vunpack.c.l.b16 %v2522
    %v2891 = vunpack.c.h.b16 %v2522
    %v2892 = vunpack.c.l.b16 %v2523
    %v2893 = vunpack.c.h.b16 %v2523
    %v2894 = vunpack.c.l.b16 %v2524
    %v2895 = vunpack.c.h.b16 %v2524
    %v2896 = vunpack.c.l.b16 %v2525
    %v2897 = vunpack.c.h.b16 %v2525
    %v2898 = vunpack.c.l.b16 %v2526
    %v2899 = vunpack.c.h.b16 %v2526
    %v2900 = vunpack.c.l.b16 %v2527
    %v2901 = vunpack.c.h.b16 %v2527
    %v2902 = vunpack.c.l.b16 %v2528
    %v2903 = vunpack.c.h.b16 %v2528
    %v2904 = vunpack.c.l.b16 %v2529
    %v2905 = vunpack.c.h.b16 %v2529
    %v2906 = vunpack.c.l.b16 %v2530
    %v2907 = vunpack.c.h.b16 %v2530
    %v2908 = vunpack.c.l.b16 %v2531
    %v2909 = vunpack.c.h.b16 %v2531
    %v2910 = vunpack.c.l.b16 %v2532
    %v2911 = vunpack.c.h.b16 %v2532
    %v2912 = vunpack.c.l.b16 %v2533
    %v2913 = vunpack.c.h.b16 %v2533
    %v2914 = vunpack.c.l.b16 %v2534
    %v2915 = vunpack.c.h.b16 %v2534
    %v2916 = vunpack.c.l.b16 %v2535
    %v2917 = vunpack.c.h.b16 %v2535
    %v2918 = vunpack.c.l.b16 %v2536
    %v2919 = vunpack.c.h.b16 %v2536
    %v2920 = vunpack.c.l.b16 %v2537
    %v2921 = vunpack.c.h.b16 %v2537
    %v2922 = vunpack.c.l.b16 %v2538
    %v2923 = vunpack.c.h.b16 %v2538
    %v2924 = vunpack.c.l.b16 %v2539
    %v2925 = vunpack.c.h.b16 %v2539
    %v2926 = vunpack.c.l.b16 %v2540
    %v2927 = vunpack.c.h.b16 %v2540
    %v2928 = vunpack.c.l.b16 %v2541
    %v2929 = vunpack.c.h.b16 %v2541
    %v2930 = vunpack.c.l.b16 %v2542
    %v2931 = vunpack.c.h.b16 %v2542
    %v2932 = vunpack.c.l.b16 %v2543
    %v2933 = vunpack.c.h.b16 %v2543
    %v2934 = vunpack.c.l.b16 %v2544
    %v2935 = vunpack.c.h.b16 %v2544
    %v2936 = vunpack.c.l.b16 %v2545
    %v2937 = vunpack.c.h.b16 %v2545
    %v2938 = vunpack.c.l.b16 %v2546
    %v2939 = vunpack.c.h.b16 %v2546
    %v2940 = vunpack.c.l.b16 %v2547
    %v2941 = vunpack.c.h.b16 %v2547
    %v2942 = vunpack.c.l.b16 %v2548
    %v2943 = vunpack.c.h.b16 %v2548
    %v2944 = vunpack.c.l.b16 %v2549
    %v2945 = vunpack.c.h.b16 %v2549
    %v2946 = vunpack.c.l.b16 %v2550
    %v2947 = vunpack.c.h.b16 %v2550
    %v2948 = vunpack.c.l.b16 %v2551
    %v2949 = vunpack.c.h.b16 %v2551
    %v2950 = vunpack.c.l.b16 %v2552
    %v2951 = vunpack.c.h.b16 %v2552
    %v2952 = vunpack.c.l.b16 %v2553
    %v2953 = vunpack.c.h.b16 %v2553
    %v2954 = vunpack.c.l.b16 %v2554
    %v2955 = vunpack.c.h.b16 %v2554
    %v2956 = vunpack.c.l.b16 %v2555
    %v2957 = vunpack.c.h.b16 %v2555
    %v2958 = vunpack.c.l.b16 %v2556
    %v2959 = vunpack.c.h.b16 %v2556
    %v2960 = vunpack.c.l.b16 %v2557
    %v2961 = vunpack.c.h.b16 %v2557
    %v2962 = vunpack.c.l.b16 %v2558
    %v2963 = vunpack.c.h.b16 %v2558
    %v2964 = vunpack.c.l.b16 %v2559
    %v2965 = vunpack.c.h.b16 %v2559
    %v2966 = vunpack.c.l.b16 %v2560
    %v2967 = vunpack.c.h.b16 %v2560
    %v2968 = vunpack.c.l.b16 %v2561
    %v2969 = vunpack.c.h.b16 %v2561
    %v2970 = vunpack.c.l.b16 %v2562
    %v2971 = vunpack.c.h.b16 %v2562
    %v2972 = vunpack.c.l.b16 %v2563
    %v2973 = vunpack.c.h.b16 %v2563
    %v2974 = vunpack.c.l.b16 %v2564
    %v2975 = vunpack.c.h.b16 %v2564
    %v2976 = vunpack.c.l.b16 %v2565
    %v2977 = vunpack.c.h.b16 %v2565
    %v2978 = vunpack.c.l.b16 %v2566
    %v2979 = vunpack.c.h.b16 %v2566
    %v2980 = vunpack.c.l.b16 %v2567
    %v2981 = vunpack.c.h.b16 %v2567
    %v2982 = vunpack.c.l.b16 %v2568
    %v2983 = vunpack.c.h.b16 %v2568
    %v2984 = vunpack.c.l.b16 %v2569
    %v2985 = vunpack.c.h.b16 %v2569
    %v2986 = vunpack.c.l.b16 %v2570
    %v2987 = vunpack.c.h.b16 %v2570
    %v2988 = vunpack.c.l.b16 %v2571
    %v2989 = vunpack.c.h.b16 %v2571
    %v2990 = vunpack.c.l.b16 %v2572
    %v2991 = vunpack.c.h.b16 %v2572
    %v2992 = vunpack.c.l.b16 %v2573
    %v2993 = vunpack.c.h.b16 %v2573
    %v2994 = vunpack.c.l.b16 %v2574
    %v2995 = vunpack.c.h.b16 %v2574
    %v2996 = vunpack.c.l.b16 %v2575
    %v2997 = vunpack.c.h.b16 %v2575
    %v2998 = vunpack.c.l.b16 %v2576
    %v2999 = vunpack.c.h.b16 %v2576
    %v3000 = vunpack.c.l.b16 %v2577
    %v3001 = vunpack.c.h.b16 %v2577
    %v3002 = vunpack.c.l.b16 %v2578
    %v3003 = vunpack.c.h.b16 %v2578
    %v3004 = vunpack.c.l.b16 %v2579
    %v3005 = vunpack.c.h.b16 %v2579
    %v3006 = vunpack.c.l.b16 %v2580
    %v3007 = vunpack.c.h.b16 %v2580
    %v3008 = vpack.c.b16 %v2756, %v2752
    %v3009 = vpack.c.b16 %v2757, %v2753
    %v3010 = vpack.c.b16 %v2758, %v2754
    %v3011 = vpack.c.b16 %v2759, %v2755
    %v3012 = vpack.c.b16 %v2764, %v2760
    %v3013 = vpack.c.b16 %v2765, %v2761
    %v3014 = vpack.c.b16 %v2766, %v2762
    %v3015 = vpack.c.b16 %v2767, %v2763
    %v3016 = vpack.c.b16 %v2772, %v2768
    %v3017 = vpack.c.b16 %v2773, %v2769
    %v3018 = vpack.c.b16 %v2774, %v2770
    %v3019 = vpack.c.b16 %v2775, %v2771
    %v3020 = vpack.c.b16 %v2780, %v2776
    %v3021 = vpack.c.b16 %v2781, %v2777
    %v3022 = vpack.c.b16 %v2782, %v2778
    %v3023 = vpack.c.b16 %v2783, %v2779
    %v3024 = vpack.c.b16 %v2788, %v2784
    %v3025 = vpack.c.b16 %v2789, %v2785
    %v3026 = vpack.c.b16 %v2790, %v2786
    %v3027 = vpack.c.b16 %v2791, %v2787
    %v3028 = vpack.c.b16 %v2796, %v2792
    %v3029 = vpack.c.b16 %v2797, %v2793
    %v3030 = vpack.c.b16 %v2798, %v2794
    %v3031 = vpack.c.b16 %v2799, %v2795
    %v3032 = vpack.c.b16 %v2804, %v2800
    %v3033 = vpack.c.b16 %v2805, %v2801
    %v3034 = vpack.c.b16 %v2806, %v2802
    %v3035 = vpack.c.b16 %v2807, %v2803
    %v3036 = vpack.c.b16 %v2812, %v2808
    %v3037 = vpack.c.b16 %v2813, %v2809
    %v3038 = vpack.c.b16 %v2814, %v2810
    %v3039 = vpack.c.b16 %v2815, %v2811
    %v3040 = vpack.c.b16 %v2820, %v2816
    %v3041 = vpack.c.b16 %v2821, %v2817
    %v3042 = vpack.c.b16 %v2822, %v2818
    %v3043 = vpack.c.b16 %v2823, %v2819
    %v3044 = vpack.c.b16 %v2828, %v2824
    %v3045 = vpack.c.b16 %v2829, %v2825
    %v3046 = vpack.c.b16 %v2830, %v2826
    %v3047 = vpack.c.b16 %v2831, %v2827
    %v3048 = vpack.c.b16 %v2836, %v2832
    %v3049 = vpack.c.b16 %v2837, %v2833
    %v3050 = vpack.c.b16 %v2838, %v2834
    %v3051 = vpack.c.b16 %v2839, %v2835
    %v3052 = vpack.c.b16 %v2844, %v2840
    %v3053 = vpack.c.b16 %v2845, %v2841
    %v3054 = vpack.c.b16 %v2846, %v2842
    %v3055 = vpack.c.b16 %v2847, %v2843
    %v3056 = vpack.c.b16 %v2852, %v2848
    %v3057 = vpack.c.b16 %v2853, %v2849
    %v3058 = vpack.c.b16 %v2854, %v2850
    %v3059 = vpack.c.b16 %v2855, %v2851
    %v3060 = vpack.c.b16 %v2860, %v2856
    %v3061 = vpack.c.b16 %v2861, %v2857
    %v3062 = vpack.c.b16 %v2862, %v2858
    %v3063 = vpack.c.b16 %v2863, %v2859
    %v3064 = vpack.c.b16 %v2868, %v2864
    %v3065 = vpack.c.b16 %v2869, %v2865
    %v3066 = vpack.c.b16 %v2870, %v2866
    %v3067 = vpack.c.b16 %v2871, %v2867
    %v3068 = vpack.c.b16 %v2876, %v2872
    %v3069 = vpack.c.b16 %v2877, %v2873
    %v3070 = vpack.c.b16 %v2878, %v2874
    %v3071 = vpack.c.b16 %v2879, %v2875
    %v3072 = vpack.c.b16 %v2884, %v2880
    %v3073 = vpack.c.b16 %v2885, %v2881
    %v3074 = vpack.c.b16 %v2886, %v2882
    %v3075 = vpack.c.b16 %v2887, %v2883
    %v3076 = vpack.c.b16 %v2892, %v2888
    %v3077 = vpack.c.b16 %v2893, %v2889
    %v3078 = vpack.c.b16 %v2894, %v2890
    %v3079 = vpack.c.b16 %v2895, %v2891
    %v3080 = vpack.c.b16 %v2900, %v2896
    %v3081 = vpack.c.b16 %v2901, %v2897
    %v3082 = vpack.c.b16 %v2902, %v2898
    %v3083 = vpack.c.b16 %v2903, %v2899
    %v3084 = vpack.c.b16 %v2908, %v2904
    %v3085 = vpack.c.b16 %v2909, %v2905
    %v3086 = vpack.c.b16 %v2910, %v2906
    %v3087 = vpack.c.b16 %v2911, %v2907
    %v3088 = vpack.c.b16 %v2916, %v2912
    %v3089 = vpack.c.b16 %v2917, %v2913
    %v3090 = vpack.c.b16 %v2918, %v2914
    %v3091 = vpack.c.b16 %v2919, %v2915
    %v3092 = vpack.c.b16 %v2924, %v2920
    %v3093 = vpack.c.b16 %v2925, %v2921
    %v3094 = vpack.c.b16 %v2926, %v2922
    %v3095 = vpack.c.b16 %v2927, %v2923
    %v3096 = vpack.c.b16 %v2932, %v2928
    %v3097 = vpack.c.b16 %v2933, %v2929
    %v3098 = vpack.c.b16 %v2934, %v2930
    %v3099 = vpack.c.b16 %v2935, %v2931
    %v3100 = vpack.c.b16 %v2940, %v2936
    %v3101 = vpack.c.b16 %v2941, %v2937
    %v3102 = vpack.c.b16 %v2942, %v2938
    %v3103 = vpack.c.b16 %v2943, %v2939
    %v3104 = vpack.c.b16 %v2948, %v2944
    %v3105 = vpack.c.b16 %v2949, %v2945
    %v3106 = vpack.c.b16 %v2950, %v2946
    %v3107 = vpack.c.b16 %v2951, %v2947
    %v3108 = vpack.c.b16 %v2956, %v2952
    %v3109 = vpack.c.b16 %v2957, %v2953
    %v3110 = vpack.c.b16 %v2958, %v2954
    %v3111 = vpack.c.b16 %v2959, %v2955
    %v3112 = vpack.c.b16 %v2964, %v2960
    %v3113 = vpack.c.b16 %v2965, %v2961
    %v3114 = vpack.c.b16 %v2966, %v2962
    %v3115 = vpack.c.b16 %v2967, %v2963
    %v3116 = vpack.c.b16 %v2972, %v2968
    %v3117 = vpack.c.b16 %v2973, %v2969
    %v3118 = vpack.c.b16 %v2974, %v2970
    %v3119 = vpack.c.b16 %v2975, %v2971
    %v3120 = vpack.c.b16 %v2980, %v2976
    %v3121 = vpack.c.b16 %v2981, %v2977
    %v3122 = vpack.c.b16 %v2982, %v2978
    %v3123 = vpack.c.b16 %v2983, %v2979
    %v3124 = vpack.c.b16 %v2988, %v2984
    %v3125 = vpack.c.b16 %v2989, %v2985
    %v3126 = vpack.c.b16 %v2990, %v2986
    %v3127 = vpack.c.b16 %v2991, %v2987
    %v3128 = vpack.c.b16 %v2996, %v2992
    %v3129 = vpack.c.b16 %v2997, %v2993
    %v3130 = vpack.c.b16 %v2998, %v2994
    %v3131 = vpack.c.b16 %v2999, %v2995
    %v3132 = vpack.c.b16 %v3004, %v3000
    %v3133 = vpack.c.b16 %v3005, %v3001
    %v3134 = vpack.c.b16 %v3006, %v3002
    %v3135 = vpack.c.b16 %v3007, %v3003
    %3264 = vmatprep.subr.bf16.mxu0 %v3037
    %3265 = vmatpush1.bf16.msra.mxu0 %v3036
    %3266 = vmatprep.subr.bf16.mxu0 %v3033
    %3267 = vmatpush1.bf16.msra.mxu0 %v3032
    %3268 = vmatprep.subr.bf16.mxu0 %v3029
    %3269 = vmatpush1.bf16.msra.mxu0 %v3028
    %3270 = vmatprep.subr.bf16.mxu0 %v3025
    %3271 = vmatpush1.bf16.msra.mxu0 %v3024
    %3272 = vmatprep.subr.bf16.mxu0 %v3021
    %3273 = vmatpush1.bf16.msra.mxu0 %v3020
    %3274 = vmatprep.subr.bf16.mxu0 %v3017
    %3275 = vmatpush1.bf16.msra.mxu0 %v3016
    %3276 = vmatprep.subr.bf16.mxu0 %v3013
    %3277 = vmatpush1.bf16.msra.mxu0 %v3012
    %3278 = vmatprep.subr.bf16.mxu0 %v3009
    %3279 = vmatpush1.bf16.msra.mxu0 %v3008
    %3280 = vmatprep.subr.bf16.mxu0 %v3069
    %3281 = vmatpush2.bf16.msra.mxu0 %v3068
    %3282 = vmatprep.subr.bf16.mxu0 %v3065
    %3283 = vmatpush2.bf16.msra.mxu0 %v3064
    %3284 = vmatprep.subr.bf16.mxu0 %v3061
    %3285 = vmatpush2.bf16.msra.mxu0 %v3060
    %3286 = vmatprep.subr.bf16.mxu0 %v3057
    %3287 = vmatpush2.bf16.msra.mxu0 %v3056
    %3288 = vmatprep.subr.bf16.mxu0 %v3053
    %3289 = vmatpush2.bf16.msra.mxu0 %v3052
    %3290 = vmatprep.subr.bf16.mxu0 %v3049
    %3291 = vmatpush2.bf16.msra.mxu0 %v3048
    %3292 = vmatprep.subr.bf16.mxu0 %v3045
    %3293 = vmatpush2.bf16.msra.mxu0 %v3044
    %3294 = vmatprep.subr.bf16.mxu0 %v3041
    %3295 = vmatpush2.bf16.msra.mxu0 %v3040
    %3296 = vmatprep.mubr.bf16.mxu0 %v2584
    %3297 = vmatmul.mubr.bf16.gmra.mxu0 %v2583
    %v3298 = vpop.f32.mrf.mxu0
    %v3299 = vadd.f32 %v2611, %v3298
    %v3300 = vpop.f32.mrf.mxu0
    %v3301 = vadd.f32 %v2615, %v3300
    %v3302 = vpop.f32.mrf.mxu0
    %v3303 = vpop.f32.mrf.mxu0
    %3304 = vdwg.mxu0
    %3305 = vmatprep.subr.bf16.mxu0 %v3101
    %3306 = vmatpush1.bf16.msra.mxu0 %v3100
    %3307 = vmatprep.subr.bf16.mxu0 %v3097
    %3308 = vmatpush1.bf16.msra.mxu0 %v3096
    %3309 = vmatprep.subr.bf16.mxu0 %v3093
    %3310 = vmatpush1.bf16.msra.mxu0 %v3092
    %3311 = vmatprep.subr.bf16.mxu0 %v3089
    %3312 = vmatpush1.bf16.msra.mxu0 %v3088
    %3313 = vmatprep.subr.bf16.mxu0 %v3085
    %3314 = vmatpush1.bf16.msra.mxu0 %v3084
    %3315 = vmatprep.subr.bf16.mxu0 %v3081
    %3316 = vmatpush1.bf16.msra.mxu0 %v3080
    %3317 = vmatprep.subr.bf16.mxu0 %v3077
    %3318 = vmatpush1.bf16.msra.mxu0 %v3076
    %3319 = vmatprep.subr.bf16.mxu0 %v3073
    %3320 = vmatpush1.bf16.msra.mxu0 %v3072
    %3321 = vmatprep.subr.bf16.mxu0 %v3133
    %3322 = vmatpush2.bf16.msra.mxu0 %v3132
    %3323 = vmatprep.subr.bf16.mxu0 %v3129
    %3324 = vmatpush2.bf16.msra.mxu0 %v3128
    %3325 = vmatprep.subr.bf16.mxu0 %v3125
    %3326 = vmatpush2.bf16.msra.mxu0 %v3124
    %3327 = vmatprep.subr.bf16.mxu0 %v3121
    %3328 = vmatpush2.bf16.msra.mxu0 %v3120
    %3329 = vmatprep.subr.bf16.mxu0 %v3117
    %3330 = vmatpush2.bf16.msra.mxu0 %v3116
    %3331 = vmatprep.subr.bf16.mxu0 %v3113
    %3332 = vmatpush2.bf16.msra.mxu0 %v3112
    %3333 = vmatprep.subr.bf16.mxu0 %v3109
    %3334 = vmatpush2.bf16.msra.mxu0 %v3108
    %3335 = vmatprep.subr.bf16.mxu0 %v3105
    %3336 = vmatpush2.bf16.msra.mxu0 %v3104
    %3337 = vmatprep.mubr.bf16.mxu0 %v2586
    %3338 = vmatmul.mubr.bf16.gmra.mxu0 %v2585
    %v3339 = vpop.f32.mrf.mxu0
    %v3340 = vadd.f32 %v3299, %v3339
    %v3341 = vpop.f32.mrf.mxu0
    %v3342 = vadd.f32 %v3301, %v3341
    %v3343 = vpop.f32.mrf.mxu0
    %v3344 = vpop.f32.mrf.mxu0
    %3345 = vdwg.mxu0
    %3346 = vmatprep.subr.bf16.mxu0 %v3039
    %3347 = vmatpush1.bf16.msra.mxu0 %v3038
    %3348 = vmatprep.subr.bf16.mxu0 %v3035
    %3349 = vmatpush1.bf16.msra.mxu0 %v3034
    %3350 = vmatprep.subr.bf16.mxu0 %v3031
    %3351 = vmatpush1.bf16.msra.mxu0 %v3030
    %3352 = vmatprep.subr.bf16.mxu0 %v3027
    %3353 = vmatpush1.bf16.msra.mxu0 %v3026
    %3354 = vmatprep.subr.bf16.mxu0 %v3023
    %3355 = vmatpush1.bf16.msra.mxu0 %v3022
    %3356 = vmatprep.subr.bf16.mxu0 %v3019
    %3357 = vmatpush1.bf16.msra.mxu0 %v3018
    %3358 = vmatprep.subr.bf16.mxu0 %v3015
    %3359 = vmatpush1.bf16.msra.mxu0 %v3014
    %3360 = vmatprep.subr.bf16.mxu0 %v3011
    %3361 = vmatpush1.bf16.msra.mxu0 %v3010
    %3362 = vmatprep.subr.bf16.mxu0 %v3071
    %3363 = vmatpush2.bf16.msra.mxu0 %v3070
    %3364 = vmatprep.subr.bf16.mxu0 %v3067
    %3365 = vmatpush2.bf16.msra.mxu0 %v3066
    %3366 = vmatprep.subr.bf16.mxu0 %v3063
    %3367 = vmatpush2.bf16.msra.mxu0 %v3062
    %3368 = vmatprep.subr.bf16.mxu0 %v3059
    %3369 = vmatpush2.bf16.msra.mxu0 %v3058
    %3370 = vmatprep.subr.bf16.mxu0 %v3055
    %3371 = vmatpush2.bf16.msra.mxu0 %v3054
    %3372 = vmatprep.subr.bf16.mxu0 %v3051
    %3373 = vmatpush2.bf16.msra.mxu0 %v3050
    %3374 = vmatprep.subr.bf16.mxu0 %v3047
    %3375 = vmatpush2.bf16.msra.mxu0 %v3046
    %3376 = vmatprep.subr.bf16.mxu0 %v3043
    %3377 = vmatpush2.bf16.msra.mxu0 %v3042
    %3378 = vmatprep.mubr.bf16.mxu0 %v2584
    %3379 = vmatmul.mubr.bf16.gmra.mxu0 %v2583
    %v3380 = vpop.f32.mrf.mxu0
    %v3381 = vadd.f32 %v2619, %v3380
    %v3382 = vpop.f32.mrf.mxu0
    %v3383 = vadd.f32 %v2623, %v3382
    %v3384 = vpop.f32.mrf.mxu0
    %v3385 = vpop.f32.mrf.mxu0
    %3386 = vdwg.mxu0
    %3387 = vmatprep.subr.bf16.mxu0 %v3103
    %3388 = vmatpush1.bf16.msra.mxu0 %v3102
    %3389 = vmatprep.subr.bf16.mxu0 %v3099
    %3390 = vmatpush1.bf16.msra.mxu0 %v3098
    %3391 = vmatprep.subr.bf16.mxu0 %v3095
    %3392 = vmatpush1.bf16.msra.mxu0 %v3094
    %3393 = vmatprep.subr.bf16.mxu0 %v3091
    %3394 = vmatpush1.bf16.msra.mxu0 %v3090
    %3395 = vmatprep.subr.bf16.mxu0 %v3087
    %3396 = vmatpush1.bf16.msra.mxu0 %v3086
    %3397 = vmatprep.subr.bf16.mxu0 %v3083
    %3398 = vmatpush1.bf16.msra.mxu0 %v3082
    %3399 = vmatprep.subr.bf16.mxu0 %v3079
    %3400 = vmatpush1.bf16.msra.mxu0 %v3078
    %3401 = vmatprep.subr.bf16.mxu0 %v3075
    %3402 = vmatpush1.bf16.msra.mxu0 %v3074
    %3403 = vmatprep.subr.bf16.mxu0 %v3135
    %3404 = vmatpush2.bf16.msra.mxu0 %v3134
    %3405 = vmatprep.subr.bf16.mxu0 %v3131
    %3406 = vmatpush2.bf16.msra.mxu0 %v3130
    %3407 = vmatprep.subr.bf16.mxu0 %v3127
    %3408 = vmatpush2.bf16.msra.mxu0 %v3126
    %3409 = vmatprep.subr.bf16.mxu0 %v3123
    %3410 = vmatpush2.bf16.msra.mxu0 %v3122
    %3411 = vmatprep.subr.bf16.mxu0 %v3119
    %3412 = vmatpush2.bf16.msra.mxu0 %v3118
    %3413 = vmatprep.subr.bf16.mxu0 %v3115
    %3414 = vmatpush2.bf16.msra.mxu0 %v3114
    %3415 = vmatprep.subr.bf16.mxu0 %v3111
    %3416 = vmatpush2.bf16.msra.mxu0 %v3110
    %3417 = vmatprep.subr.bf16.mxu0 %v3107
    %3418 = vmatpush2.bf16.msra.mxu0 %v3106
    %3419 = vmatprep.mubr.bf16.mxu0 %v2586
    %3420 = vmatmul.mubr.bf16.gmra.mxu0 %v2585
    %v3421 = vpop.f32.mrf.mxu0
    %v3422 = vadd.f32 %v3381, %v3421
    %v3423 = vpop.f32.mrf.mxu0
    %v3424 = vadd.f32 %v3383, %v3423
    %v3425 = vpop.f32.mrf.mxu0
    %v3426 = vpop.f32.mrf.mxu0
    %3427 = vdwg.mxu0
    %vm3428 = vcmp.gt.f32.partialorder %v3340, 0.0
    %vm3429 = vcmp.gt.f32.partialorder %v3342, 0.0
    %vm3430 = vcmp.gt.f32.partialorder %v3422, 0.0
    %vm3431 = vcmp.gt.f32.partialorder %v3424, 0.0
    %v3432 = vlaneseq
    %v3433 = vshrl.u32 %v3432, 7
    %v3434 = vsub.s32 1, %v3433
    %v3435 = vrot.slane %v2582, %v3434
    %v3436 = vlaneseq
    %v3437 = vshrl.u32 %v3436, 7
    %v3438 = vsub.s32 3, %v3437
    %v3439 = vrot.slane %v2582, %v3438
    %v3440 = vlaneseq
    %v3441 = vshrl.u32 %v3440, 7
    %v3442 = vsub.s32 5, %v3441
    %v3443 = vrot.slane %v2582, %v3442
    %v3444 = vlaneseq
    %v3445 = vshrl.u32 %v3444, 7
    %v3446 = vsub.s32 7, %v3445
    %v3447 = vrot.slane %v2582, %v3446
    %v3452 = vlaneseq
    %v3453 = vshrl.u32 %v3452, 7
    %v3454 = vsub.s32 1, %v3453
    %v3455 = vrot.slane %v3435, %v3454
    %v3456 = vlaneseq
    %v3457 = vshrl.u32 %v3456, 7
    %v3458 = vsub.s32 1, %v3457
    %v3459 = vrot.slane %v3439, %v3458
    %v3460 = vlaneseq
    %v3461 = vshrl.u32 %v3460, 7
    %v3462 = vsub.s32 1, %v3461
    %v3463 = vrot.slane %v3443, %v3462
    %v3464 = vlaneseq
    %v3465 = vshrl.u32 %v3464, 7
    %v3466 = vsub.s32 1, %v3465
    %v3467 = vrot.slane %v3447, %v3466
    %v3468 = vmul.f32 %v3455, %v3340
    %v3469 = vmul.f32 %v3459, %v3342
    %v3470 = vmul.f32 %v3463, %v3422
    %v3471 = vmul.f32 %v3467, %v3424
    %v3472 = vsel %vm3428, %v3340, %v3468
    %v3473 = vsel %vm3429, %v3342, %v3469
    %v3474 = vsel %vm3430, %v3422, %v3470
    %v3475 = vsel %vm3431, %v3424, %v3471
    %v3476 = vld [vmem:[#allocation10] sm:$0xff]
    %v3477 = vld [vmem:[#allocation10 + $0x8] sm:$0xff]
    %v3478 = vld [vmem:[#allocation10 + $0x10] sm:$0xff]
    %v3479 = vld [vmem:[#allocation10 + $0x18] sm:$0xff]
    %v3480 = vld [vmem:[#allocation10 + $0x20] sm:$0xff]
    %v3481 = vld [vmem:[#allocation10 + $0x28] sm:$0xff]
    %v3482 = vld [vmem:[#allocation10 + $0x30] sm:$0xff]
    %v3483 = vld [vmem:[#allocation10 + $0x38] sm:$0xff]
    %v3484 = vld [vmem:[#allocation10 + $0x40] sm:$0xff]
    %v3485 = vld [vmem:[#allocation10 + $0x48] sm:$0xff]
    %v3486 = vld [vmem:[#allocation10 + $0x50] sm:$0xff]
    %v3487 = vld [vmem:[#allocation10 + $0x58] sm:$0xff]
    %v3488 = vld [vmem:[#allocation10 + $0x60] sm:$0xff]
    %v3489 = vld [vmem:[#allocation10 + $0x68] sm:$0xff]
    %v3490 = vld [vmem:[#allocation10 + $0x70] sm:$0xff]
    %v3491 = vld [vmem:[#allocation10 + $0x78] sm:$0xff]
    %v3492 = vld [vmem:[#allocation10 + $0x80] sm:$0xff]
    %v3493 = vld [vmem:[#allocation10 + $0x88] sm:$0xff]
    %v3494 = vld [vmem:[#allocation10 + $0x90] sm:$0xff]
    %v3495 = vld [vmem:[#allocation10 + $0x98] sm:$0xff]
    %v3496 = vld [vmem:[#allocation10 + $0xa0] sm:$0xff]
    %v3497 = vld [vmem:[#allocation10 + $0xa8] sm:$0xff]
    %v3498 = vld [vmem:[#allocation10 + $0xb0] sm:$0xff]
    %v3499 = vld [vmem:[#allocation10 + $0xb8] sm:$0xff]
    %v3500 = vld [vmem:[#allocation10 + $0xc0] sm:$0xff]
    %v3501 = vld [vmem:[#allocation10 + $0xc8] sm:$0xff]
    %v3502 = vld [vmem:[#allocation10 + $0xd0] sm:$0xff]
    %v3503 = vld [vmem:[#allocation10 + $0xd8] sm:$0xff]
    %v3504 = vld [vmem:[#allocation10 + $0xe0] sm:$0xff]
    %v3505 = vld [vmem:[#allocation10 + $0xe8] sm:$0xff]
    %v3506 = vld [vmem:[#allocation10 + $0xf0] sm:$0xff]
    %v3507 = vld [vmem:[#allocation10 + $0xf8] sm:$0xff]
    %v3508 = vld [vmem:[#allocation10 + $0x100] sm:$0xff]
    %v3509 = vld [vmem:[#allocation10 + $0x108] sm:$0xff]
    %v3510 = vld [vmem:[#allocation10 + $0x110] sm:$0xff]
    %v3511 = vld [vmem:[#allocation10 + $0x118] sm:$0xff]
    %v3512 = vld [vmem:[#allocation10 + $0x120] sm:$0xff]
    %v3513 = vld [vmem:[#allocation10 + $0x128] sm:$0xff]
    %v3514 = vld [vmem:[#allocation10 + $0x130] sm:$0xff]
    %v3515 = vld [vmem:[#allocation10 + $0x138] sm:$0xff]
    %v3516 = vld [vmem:[#allocation10 + $0x140] sm:$0xff]
    %v3517 = vld [vmem:[#allocation10 + $0x148] sm:$0xff]
    %v3518 = vld [vmem:[#allocation10 + $0x150] sm:$0xff]
    %v3519 = vld [vmem:[#allocation10 + $0x158] sm:$0xff]
    %v3520 = vld [vmem:[#allocation10 + $0x160] sm:$0xff]
    %v3521 = vld [vmem:[#allocation10 + $0x168] sm:$0xff]
    %v3522 = vld [vmem:[#allocation10 + $0x170] sm:$0xff]
    %v3523 = vld [vmem:[#allocation10 + $0x178] sm:$0xff]
    %v3524 = vld [vmem:[#allocation10 + $0x180] sm:$0xff]
    %v3525 = vld [vmem:[#allocation10 + $0x188] sm:$0xff]
    %v3526 = vld [vmem:[#allocation10 + $0x190] sm:$0xff]
    %v3527 = vld [vmem:[#allocation10 + $0x198] sm:$0xff]
    %v3528 = vld [vmem:[#allocation10 + $0x1a0] sm:$0xff]
    %v3529 = vld [vmem:[#allocation10 + $0x1a8] sm:$0xff]
    %v3530 = vld [vmem:[#allocation10 + $0x1b0] sm:$0xff]
    %v3531 = vld [vmem:[#allocation10 + $0x1b8] sm:$0xff]
    %v3532 = vld [vmem:[#allocation10 + $0x1c0] sm:$0xff]
    %v3533 = vld [vmem:[#allocation10 + $0x1c8] sm:$0xff]
    %v3534 = vld [vmem:[#allocation10 + $0x1d0] sm:$0xff]
    %v3535 = vld [vmem:[#allocation10 + $0x1d8] sm:$0xff]
    %v3536 = vld [vmem:[#allocation10 + $0x1e0] sm:$0xff]
    %v3537 = vld [vmem:[#allocation10 + $0x1e8] sm:$0xff]
    %v3538 = vld [vmem:[#allocation10 + $0x1f0] sm:$0xff]
    %v3539 = vld [vmem:[#allocation10 + $0x1f8] sm:$0xff]
    %v3540 = vld [vmem:[#allocation11] sm:$0x1]
    %v3542 = vlaneseq
    %v3543 = vshrl.u32 %v3542, 7
    %v3544 = vsub.s32 0, %v3543
    %v3545 = vrot.slane %v3540, %v3544
    %3547 = vmatprep.subr.mxu0 0.0
    %3548 = vmatpush1.msra.mxu0 %v3491
    %3549 = vmatprep.subr.mxu0 0.0
    %3550 = vmatpush1.msra.mxu0 %v3490
    %3551 = vmatprep.subr.mxu0 0.0
    %3552 = vmatpush1.msra.mxu0 %v3489
    %3553 = vmatprep.subr.mxu0 0.0
    %3554 = vmatpush1.msra.mxu0 %v3488
    %3555 = vmatprep.subr.mxu0 0.0
    %3556 = vmatpush1.msra.mxu0 %v3487
    %3557 = vmatprep.subr.mxu0 0.0
    %3558 = vmatpush1.msra.mxu0 %v3486
    %3559 = vmatprep.subr.mxu0 0.0
    %3560 = vmatpush1.msra.mxu0 %v3485
    %3561 = vmatprep.subr.mxu0 0.0
    %3562 = vmatpush1.msra.mxu0 %v3484
    %3563 = vmatprep.subr.mxu0 0.0
    %3564 = vmatpush1.msra.mxu0 %v3483
    %3565 = vmatprep.subr.mxu0 0.0
    %3566 = vmatpush1.msra.mxu0 %v3482
    %3567 = vmatprep.subr.mxu0 0.0
    %3568 = vmatpush1.msra.mxu0 %v3481
    %3569 = vmatprep.subr.mxu0 0.0
    %3570 = vmatpush1.msra.mxu0 %v3480
    %3571 = vmatprep.subr.mxu0 0.0
    %3572 = vmatpush1.msra.mxu0 %v3479
    %3573 = vmatprep.subr.mxu0 0.0
    %3574 = vmatpush1.msra.mxu0 %v3478
    %3575 = vmatprep.subr.mxu0 0.0
    %3576 = vmatpush1.msra.mxu0 %v3477
    %3577 = vmatprep.subr.mxu0 0.0
    %3578 = vmatpush1.msra.mxu0 %v3476
    %3579 = vmatprep.subr.mxu0 0.0
    %3580 = vmatpush2.msra.mxu0 %v3507
    %3581 = vmatprep.subr.mxu0 0.0
    %3582 = vmatpush2.msra.mxu0 %v3506
    %3583 = vmatprep.subr.mxu0 0.0
    %3584 = vmatpush2.msra.mxu0 %v3505
    %3585 = vmatprep.subr.mxu0 0.0
    %3586 = vmatpush2.msra.mxu0 %v3504
    %3587 = vmatprep.subr.mxu0 0.0
    %3588 = vmatpush2.msra.mxu0 %v3503
    %3589 = vmatprep.subr.mxu0 0.0
    %3590 = vmatpush2.msra.mxu0 %v3502
    %3591 = vmatprep.subr.mxu0 0.0
    %3592 = vmatpush2.msra.mxu0 %v3501
    %3593 = vmatprep.subr.mxu0 0.0
    %3594 = vmatpush2.msra.mxu0 %v3500
    %3595 = vmatprep.subr.mxu0 0.0
    %3596 = vmatpush2.msra.mxu0 %v3499
    %3597 = vmatprep.subr.mxu0 0.0
    %3598 = vmatpush2.msra.mxu0 %v3498
    %3599 = vmatprep.subr.mxu0 0.0
    %3600 = vmatpush2.msra.mxu0 %v3497
    %3601 = vmatprep.subr.mxu0 0.0
    %3602 = vmatpush2.msra.mxu0 %v3496
    %3603 = vmatprep.subr.mxu0 0.0
    %3604 = vmatpush2.msra.mxu0 %v3495
    %3605 = vmatprep.subr.mxu0 0.0
    %3606 = vmatpush2.msra.mxu0 %v3494
    %3607 = vmatprep.subr.mxu0 0.0
    %3608 = vmatpush2.msra.mxu0 %v3493
    %3609 = vmatprep.subr.mxu0 0.0
    %3610 = vmatpush2.msra.mxu0 %v3492
    %3611 = vmatprep.mubr.f32.mxu0 %v3473
    %3612 = vmatmul.mubr.f32.gmra.mxu0 %v3472
    %v3613 = vpop.f32.mrf.mxu0
    %v3614 = vadd.f32 %v3545, %v3613
    %v3615 = vpop.f32.mrf.mxu0
    %3616 = vdwg.mxu0
    %3617 = vmatprep.subr.mxu0 0.0
    %3618 = vmatpush1.msra.mxu0 %v3523
    %3619 = vmatprep.subr.mxu0 0.0
    %3620 = vmatpush1.msra.mxu0 %v3522
    %3621 = vmatprep.subr.mxu0 0.0
    %3622 = vmatpush1.msra.mxu0 %v3521
    %3623 = vmatprep.subr.mxu0 0.0
    %3624 = vmatpush1.msra.mxu0 %v3520
    %3625 = vmatprep.subr.mxu0 0.0
    %3626 = vmatpush1.msra.mxu0 %v3519
    %3627 = vmatprep.subr.mxu0 0.0
    %3628 = vmatpush1.msra.mxu0 %v3518
    %3629 = vmatprep.subr.mxu0 0.0
    %3630 = vmatpush1.msra.mxu0 %v3517
    %3631 = vmatprep.subr.mxu0 0.0
    %3632 = vmatpush1.msra.mxu0 %v3516
    %3633 = vmatprep.subr.mxu0 0.0
    %3634 = vmatpush1.msra.mxu0 %v3515
    %3635 = vmatprep.subr.mxu0 0.0
    %3636 = vmatpush1.msra.mxu0 %v3514
    %3637 = vmatprep.subr.mxu0 0.0
    %3638 = vmatpush1.msra.mxu0 %v3513
    %3639 = vmatprep.subr.mxu0 0.0
    %3640 = vmatpush1.msra.mxu0 %v3512
    %3641 = vmatprep.subr.mxu0 0.0
    %3642 = vmatpush1.msra.mxu0 %v3511
    %3643 = vmatprep.subr.mxu0 0.0
    %3644 = vmatpush1.msra.mxu0 %v3510
    %3645 = vmatprep.subr.mxu0 0.0
    %3646 = vmatpush1.msra.mxu0 %v3509
    %3647 = vmatprep.subr.mxu0 0.0
    %3648 = vmatpush1.msra.mxu0 %v3508
    %3649 = vmatprep.subr.mxu0 0.0
    %3650 = vmatpush2.msra.mxu0 %v3539
    %3651 = vmatprep.subr.mxu0 0.0
    %3652 = vmatpush2.msra.mxu0 %v3538
    %3653 = vmatprep.subr.mxu0 0.0
    %3654 = vmatpush2.msra.mxu0 %v3537
    %3655 = vmatprep.subr.mxu0 0.0
    %3656 = vmatpush2.msra.mxu0 %v3536
    %3657 = vmatprep.subr.mxu0 0.0
    %3658 = vmatpush2.msra.mxu0 %v3535
    %3659 = vmatprep.subr.mxu0 0.0
    %3660 = vmatpush2.msra.mxu0 %v3534
    %3661 = vmatprep.subr.mxu0 0.0
    %3662 = vmatpush2.msra.mxu0 %v3533
    %3663 = vmatprep.subr.mxu0 0.0
    %3664 = vmatpush2.msra.mxu0 %v3532
    %3665 = vmatprep.subr.mxu0 0.0
    %3666 = vmatpush2.msra.mxu0 %v3531
    %3667 = vmatprep.subr.mxu0 0.0
    %3668 = vmatpush2.msra.mxu0 %v3530
    %3669 = vmatprep.subr.mxu0 0.0
    %3670 = vmatpush2.msra.mxu0 %v3529
    %3671 = vmatprep.subr.mxu0 0.0
    %3672 = vmatpush2.msra.mxu0 %v3528
    %3673 = vmatprep.subr.mxu0 0.0
    %3674 = vmatpush2.msra.mxu0 %v3527
    %3675 = vmatprep.subr.mxu0 0.0
    %3676 = vmatpush2.msra.mxu0 %v3526
    %3677 = vmatprep.subr.mxu0 0.0
    %3678 = vmatpush2.msra.mxu0 %v3525
    %3679 = vmatprep.subr.mxu0 0.0
    %3680 = vmatpush2.msra.mxu0 %v3524
    %3681 = vmatprep.mubr.f32.mxu0 %v3475
    %3682 = vmatmul.mubr.f32.gmra.mxu0 %v3474
    %v3683 = vpop.f32.mrf.mxu0
    %v3684 = vadd.f32 %v3614, %v3683
    %v3685 = vpop.f32.mrf.mxu0
    %3686 = vdwg.mxu0
    %3687 = vst [vmem:[#allocation13] sm:$0xff] %v3684
    // Predicated region
    $region54: #{_lambda_.1} parent=1 // pred_check
      _
    $region55: #{_lambda_.1} parent=1 // pred_check_branch
      %3689 = sbr.rel (0) target = $region57
    $region56: #{_lambda_.1} parent=1 // pred_region
      %s3691 = ssub.s32 128, 128
      %3692 = vsyncadd [#allocation4], %s3691
      %s3694 = sshll.u32 [#allocation13], 4
      %s3695 = int_to_ptr.vmem [resolvable:$true] %s3694
      %3697 = dma.vmem_to_hbm [thread:$0]  %s3695, 128, %s7, [#allocation4]
    $region57: #{_lambda_.1} parent=1 // pred_fallthru
      _
    // Predicated region
    $region58: #{_lambda_.1} parent=1 // pred_check
      _
    $region59: #{_lambda_.1} parent=1 // pred_check_branch
      %3699 = sbr.rel (0) target = $region61
    $region60: #{_lambda_.1} parent=1 // pred_region
      %3700 = dma.done [#allocation4], 128
    $region61: #{_lambda_.1} parent=1 // pred_fallthru
      _
    %3701 = vsyncpa [#allocation3], 1
    %3702 = vsyncpa [#allocation6], 1
    %3703 = vsyncpa [#allocation9], 1
    %3704 = vsyncpa [#allocation12], 1
    %3705 = vsyncpa [#allocation4], 1

</llo_original>
